<compile_context>
chip_gen: v5e
topology: v5e:2x2
jax: 0.10.0
libtpu: 0.0.40
codegen_flags: <defaults>
</compile_context>

<pallas_src>
import functools

import jax
import jax.numpy as jnp
import numpy as np
from jax import lax
from jax.experimental import pallas as pl
from jax.experimental.pallas import tpu as pltpu

LRELU_SLOPE = 0.2
BN_EPS = 1e-5


def _round_up(x, m):
    return (x + m - 1) // m * m


def _pick_hw_defaults():
    """Per-generation VMEM budget + default row tile.

    v4/v5e/v6e have 128 MiB physical VMEM -> 80 MiB scoped limit, 512-row tiles.
    v7x has 64 MiB per TensorCore (and unknown parts) -> 48 MiB, 256-row tiles.
    """
    try:
        kind = jax.devices()[0].device_kind.lower()
    except Exception:
        kind = ""
    if any(t in kind for t in ("v4", "v5", "v6")):
        return 80 * 1024 * 1024, 512
    return 48 * 1024 * 1024, 256


_VMEM_LIMIT, _DEFAULT_TILE_M = _pick_hw_defaults()


# ------------------------------ Pallas kernels --------------------------------

def _down_kernel(p_ref, w_ref, alpha_ref, o_ref):
    """Conv2d(k4,s2,p1) as im2col matmul (bf16 in, f32 acc) fused with PReLU."""
    y = jnp.dot(p_ref[...], w_ref[...], preferred_element_type=jnp.float32)
    a = alpha_ref[0]                                    # PReLU shared slope (SMEM scalar)
    o_ref[...] = jnp.where(y >= 0, y, a * y).astype(o_ref.dtype)


def _up_kernel(stripe_ref, w_ref, mask_ref, y_ref, stat_ref, *, wo):
    """ConvTranspose2d(k4,s2,p1): 4 parity phases x 4 taps from a flat padded h_mid stripe.

    stripe_ref: (1, T+HALO, Cp) bf16   flat (row-major, padded-width) h_mid rows + halo
    w_ref:      (16, Cp, NOP) bf16     tap weights, index p*4+t (p=py*2+px, t=dy*2+dx)
    mask_ref:   (1, T, 1) f32          1.0 for rows that are real output pixels (BN stats mask)
    y_ref:      (T, 4*NOP) bf16        lane-dense pre-BN output, phase-major column slabs
    stat_ref:   (1, 8, NOP) f32        row0 = per-channel sum, row1 = sum of squares
    """
    t_rows = y_ref.shape[0]
    nop = w_ref.shape[2]
    wp2 = wo + 2
    mask = mask_ref[0]                                  # (T, 1)
    s = jnp.zeros((1, nop), jnp.float32)
    ss = jnp.zeros((1, nop), jnp.float32)
    for p in range(4):                                  # output parity phase py*2+px
        py, px = p // 2, p % 2
        acc = jnp.zeros((t_rows, nop), jnp.float32)
        for t in range(4):                              # tap dy*2+dx
            dy, dx = t // 2, t % 2
            off = (py + dy) * wp2 + (px + dx)           # static constant row offset
            a = stripe_ref[0, off:off + t_rows, :]
            acc = acc + jnp.dot(a, w_ref[p * 4 + t], preferred_element_type=jnp.float32)
        y_ref[:, p * nop:(p + 1) * nop] = acc.astype(y_ref.dtype)   # 128-aligned lane slab
        am = acc * mask
        s = s + jnp.sum(am, axis=0, keepdims=True)
        ss = ss + jnp.sum(acc * am, axis=0, keepdims=True)
    stat_ref[0] = jnp.concatenate([s, ss, jnp.zeros((6, nop), jnp.float32)], axis=0)


# --------------------------- pallas_call wrappers ------------------------------

def _call_down(patches, w_mat, alpha, tile_m):
    m_pad, kp = patches.shape
    cp = w_mat.shape[1]
    grid = (m_pad // tile_m,)
    flops = 2 * m_pad * kp * cp
    bytes_accessed = (m_pad * kp + kp * cp + m_pad * cp) * 2
    return pl.pallas_call(
        _down_kernel,
        out_shape=jax.ShapeDtypeStruct((m_pad, cp), jnp.bfloat16),
        grid=grid,
        in_specs=[
            pl.BlockSpec((tile_m, kp), lambda i: (i, 0)),
            pl.BlockSpec((kp, cp), lambda i: (0, 0)),
            pl.BlockSpec(memory_space=pltpu.MemorySpace.SMEM),
        ],
        out_specs=pl.BlockSpec((tile_m, cp), lambda i: (i, 0)),
        compiler_params=pltpu.CompilerParams(
            dimension_semantics=("parallel",),
            vmem_limit_bytes=_VMEM_LIMIT,
        ),
        cost_estimate=pl.CostEstimate(flops=flops, transcendentals=0,
                                      bytes_accessed=bytes_accessed),
    )(patches, w_mat, alpha)


def _call_up(stripes, w_taps, mask, tile_m, wo):
    n_tiles, stripe_rows, cp = stripes.shape
    nop = w_taps.shape[2]
    flops = 2 * n_tiles * tile_m * 16 * cp * nop
    bytes_accessed = (n_tiles * stripe_rows * cp * 2 + 16 * cp * nop * 2
                      + n_tiles * tile_m * 4 * nop * 2 + n_tiles * 8 * nop * 4
                      + n_tiles * tile_m * 4)
    kern = functools.partial(_up_kernel, wo=wo)
    # TODO(synk): with production channel counts the constant-index weight block could be
    # single-buffered (pipeline_mode=pl.Buffered(1)) to free ~half its VMEM on v7x.
    return pl.pallas_call(
        kern,
        out_shape=(
            jax.ShapeDtypeStruct((n_tiles * tile_m, 4 * nop), jnp.bfloat16),
            jax.ShapeDtypeStruct((n_tiles, 8, nop), jnp.float32),
        ),
        grid=(n_tiles,),
        in_specs=[
            pl.BlockSpec((1, stripe_rows, cp), lambda i: (i, 0, 0)),
            pl.BlockSpec((16, cp, nop), lambda i: (0, 0, 0)),
            pl.BlockSpec((1, tile_m, 1), lambda i: (i, 0, 0)),
        ],
        out_specs=(
            pl.BlockSpec((tile_m, 4 * nop), lambda i: (i, 0)),
            pl.BlockSpec((1, 8, nop), lambda i: (i, 0, 0)),
        ),
        compiler_params=pltpu.CompilerParams(
            dimension_semantics=("parallel",),
            vmem_limit_bytes=_VMEM_LIMIT,
        ),
        cost_estimate=pl.CostEstimate(flops=flops, transcendentals=0,
                                      bytes_accessed=bytes_accessed),
    )(stripes, w_taps, mask)


# ----------------------------- JAX glue (layout) -------------------------------

def _im2col_nhwc(xp, k, stride, ho, wo):
    """xp: (N, Hp, Wp, C) zero-padded -> (N*ho*wo, k*k*C) with K in (kh, kw, c) order."""
    n, c = xp.shape[0], xp.shape[3]
    cols = []
    for kh in range(k):
        for kw in range(k):
            cols.append(xp[:, kh:kh + stride * ho:stride, kw:kw + stride * wo:stride, :])
    p = jnp.stack(cols, axis=3)                         # (N, ho, wo, k*k, C)
    return p.reshape(n * ho * wo, k * k * c)


def _up_tap_weights(w_up, cp, nop):
    """w_up: (inner_nc, outer_nc, 4, 4) ConvTranspose2d weight -> (16, cp, nop) bf16.

    Index p*4+t with p = py*2+px (output parity) and t = dy*2+dx (window offset); the matching
    kernel tap is (ky, kx) = (3 - 2*dy - py, 3 - 2*dx - px). Channel dims zero-padded to (cp, nop).
    """
    inner_nc, outer_nc = w_up.shape[0], w_up.shape[1]
    taps = []
    for py in range(2):
        for px in range(2):
            for dy in range(2):
                for dx in range(2):
                    taps.append(w_up[:, :, 3 - 2 * dy - py, 3 - 2 * dx - px])   # (inner, outer)
    w = jnp.stack(taps, axis=0)                                                  # (16, inner, outer)
    w = jnp.pad(w, ((0, 0), (0, cp - inner_nc), (0, nop - outer_nc)))
    return w.astype(jnp.bfloat16)


@functools.partial(jax.jit, static_argnames=("tile_m",))
def unet_innermost_forward(x, w_down, w_up, alpha, gamma, beta, *, tile_m=_DEFAULT_TILE_M):
    n, c_in, hgt, wid = x.shape
    inner_nc = w_down.shape[0]
    outer_nc = w_up.shape[1]
    ho, wo = hgt // 2, wid // 2

    cp = _round_up(inner_nc, 128)       # padded mid channels (lane-dense stores, filled MXU N)
    nop = _round_up(outer_nc, 128)      # padded up-conv out channels per phase
    kp = _round_up(16 * c_in, 128)      # padded im2col K for the down conv

    # ---- down path: LeakyReLU (fused by XLA into the im2col gather) + Conv2d(k4 s2 p1) + PReLU
    # TODO(synk): the im2col (4x expansion of x) could also be built in-kernel with the same
    # flat-offset scheme (stride-2 row slices); kept in the wrapper for now.
    m_down = n * ho * wo
    t_down = max(16, min(_round_up(tile_m, 16), _round_up(m_down, 16)))
    m_down_pad = _round_up(m_down, t_down)

    x_act = jnp.where(x >= 0, x, LRELU_SLOPE * x)
    x_nhwc = jnp.transpose(x_act, (0, 2, 3, 1))
    x_padded = jnp.pad(x_nhwc, ((0, 0), (1, 1), (1, 1), (0, 0)))
    patches_d = _im2col_nhwc(x_padded, 4, 2, ho, wo).astype(jnp.bfloat16)       # (M, 16*Cin)
    patches_d = jnp.pad(patches_d, ((0, m_down_pad - m_down), (0, kp - 16 * c_in)))
    w_down_mat = jnp.transpose(w_down, (2, 3, 1, 0)).reshape(16 * c_in, inner_nc)
    w_down_mat = jnp.pad(w_down_mat, ((0, kp - 16 * c_in), (0, cp - inner_nc))).astype(jnp.bfloat16)
    h_mid = _call_down(patches_d, w_down_mat, alpha, t_down)                    # (M_pad, cp) bf16
    h_mid = h_mid[:m_down].reshape(n, ho, wo, cp)

    # ---- up path: ConvTranspose2d(k4 s2 p1) from flat-padded h_mid (no replicated patch tensor).
    # Flatten the 1-padded h_mid per image row-major over (ho+2, wo+2); in that space every
    # (phase, tap) read is a constant row offset, so the kernel only needs an overlapping
    # row-stripe (halo = 2*wo+6 rows, ~1.1x of h_mid) instead of a 16x-replicated patch tensor.
    # The kernel computes wo+2 columns per row (2 garbage columns), discarded in the gather below.
    wp2 = wo + 2
    lf = (ho + 2) * wp2                                  # flat rows per padded image
    mi = ho * wp2                                        # output rows per image (padded-width space)
    t_up = max(16, min(_round_up(tile_m, 16), _round_up(mi, 16)))
    nj = -(-mi // t_up)                                  # row tiles per image
    mi_pad = nj * t_up
    halo = 2 * wo + 6                                    # max tap offset

    hp = jnp.pad(h_mid, ((0, 0), (1, 1), (1, 1), (0, 0)))                       # (n, ho+2, wo+2, cp)
    fpad = hp.reshape(n, lf, cp)
    fpad = jnp.pad(fpad, ((0, 0), (0, mi_pad + halo - lf), (0, 0)))
    stripes = jnp.stack(
        [fpad[:, j * t_up: j * t_up + t_up + halo, :] for j in range(nj)], axis=1,
    ).reshape(n * nj, t_up + halo, cp)

    m_rows = jnp.arange(mi_pad, dtype=jnp.int32)
    valid = (m_rows < mi) & ((m_rows % wp2) < wo)        # real output pixels (BN stats mask)
    mask = jnp.tile(valid.astype(jnp.float32).reshape(nj, t_up, 1), (n, 1, 1))

    w_taps = _up_tap_weights(w_up, cp, nop)                                     # (16, cp, nop) bf16
    y, stats = _call_up(stripes, w_taps, mask, t_up, wo)
    # y: (n*nj*t_up, 4*nop) bf16 lane-dense; stats: (n*nj, 8, nop) f32 (row0=sum, row1=sumsq)

    # ---- BatchNorm2d batch statistics from the f32 in-kernel partials (tiny reduction).
    # Note: E[x^2]-E[x]^2 in f32; adequate here (zero-ish mean conv output), a shifted sumsq
    # would be needed if |mean| >> std.
    count = jnp.asarray(4 * n * ho * wo, jnp.float32)
    sums_c = jnp.sum(stats[:, 0, :outer_nc], axis=0)
    sumsq_c = jnp.sum(stats[:, 1, :outer_nc], axis=0)
    mean = sums_c / count
    var = jnp.maximum(sumsq_c / count - mean * mean, 0.0)
    inv_std = lax.rsqrt(var + BN_EPS)
    scale = gamma * inv_std
    shift = beta - mean * scale

    # ---- BN affine (plain jnp, fused by XLA) + phase interleave + NCHW restore + skip concat
    yv = y.reshape(n, nj * t_up, 4, nop)[:, :mi, :, :outer_nc]
    yv = yv.reshape(n, ho, wp2, 4, outer_nc)[:, :, :wo]                         # drop garbage cols
    hb = yv.astype(jnp.float32) * scale + shift                                  # (n, v, u, 4, oc)
    hb = hb.reshape(n, ho, wo, 2, 2, outer_nc)                                   # (n, v, u, py, px, oc)
    hb = jnp.transpose(hb, (0, 1, 3, 2, 4, 5)).reshape(n, hgt, wid, outer_nc)
    h_nchw = jnp.transpose(hb, (0, 3, 1, 2))
    return jnp.concatenate([x, h_nchw], axis=1)                                  # (N, 2*outer_nc, H, W)


# ----------------------------- pure-JAX reference ------------------------------

def reference_forward(x, w_down, w_up, alpha, gamma, beta):
    a = alpha[0]
    h = jnp.where(x >= 0, x, LRELU_SLOPE * x)
    h = lax.conv_general_dilated(h, w_down, (2, 2), ((1, 1), (1, 1)),
                                 dimension_numbers=('NCHW', 'OIHW', 'NCHW'),
                                 precision=lax.Precision.HIGHEST)
    h = jnp.where(h >= 0, h, a * h)
    w_up_conv = jnp.transpose(w_up[:, :, ::-1, ::-1], (1, 0, 2, 3))
    h = lax.conv_general_dilated(h, w_up_conv, (1, 1), ((2, 2), (2, 2)),
                                 lhs_dilation=(2, 2),
                                 dimension_numbers=('NCHW', 'OIHW', 'NCHW'),
                                 precision=lax.Precision.HIGHEST)
    mean = jnp.mean(h, axis=(0, 2, 3), keepdims=True)
    var = jnp.mean((h - mean) ** 2, axis=(0, 2, 3), keepdims=True)
    h = (h - mean) / jnp.sqrt(var + BN_EPS)
    h = h * gamma.reshape(1, -1, 1, 1) + beta.reshape(1, -1, 1, 1)
    return jnp.concatenate([x, h], axis=1)


# ----------------------------- main --------------------------------------------

if __name__ == "__main__":
    N, outer_nc, inner_nc, H, W = 2, 4, 8, 16, 16
    input_nc = outer_nc   # input_nc=None in the module -> input_nc = outer_nc

    key = jax.random.PRNGKey(0)
    k_x, k_wd, k_wu = jax.random.split(key, 3)

    x = jax.random.normal(k_x, (N, input_nc, H, W), jnp.float32)

    fan_in_d = input_nc * 16
    bound_d = 1.0 / np.sqrt(fan_in_d)
    w_down = jax.random.uniform(k_wd, (inner_nc, input_nc, 4, 4), jnp.float32, -bound_d, bound_d)

    fan_in_u = inner_nc * 16
    bound_u = 1.0 / np.sqrt(fan_in_u)
    w_up = jax.random.uniform(k_wu, (inner_nc, outer_nc, 4, 4), jnp.float32, -bound_u, bound_u)

    alpha = jnp.full((1,), 0.25, jnp.float32)     # PReLU default init (single shared slope)
    gamma = jnp.ones((outer_nc,), jnp.float32)    # BatchNorm2d weight
    beta = jnp.zeros((outer_nc,), jnp.float32)    # BatchNorm2d bias

    # tile_m=64 -> down grid=(2,), up grid=(4,): exercises the tiled/pipelined multi-tile path
    out = unet_innermost_forward(x, w_down, w_up, alpha, gamma, beta, tile_m=64)
    out = jax.block_until_ready(out)

    assert out.shape == (N, 2 * outer_nc, H, W), out.shape

    ref = jax.block_until_ready(reference_forward(x, w_down, w_up, alpha, gamma, beta))
    err = float(jnp.max(jnp.abs(out - ref)))
    # bf16 matmul operands + bf16 y storage (f32 accumulation/statistics) vs an f32 HIGHEST
    # reference: expected max-abs error after BN ~1e-2; 5e-2 still catches structural bugs.
    if not np.isfinite(err) or err > 5e-2:
        raise AssertionError(f"mismatch vs reference, max abs err = {err}")

    print("KERNEL_OK")
</pallas_src>

<mosaic_0001>
module attributes {stable_mosaic.version = 11 : i64} {
  func.func @_down_kernel(%arg0: i32, %arg1: memref<64x128xbf16, #tpu.memory_space<vmem>>, %arg2: memref<128x128xbf16, #tpu.memory_space<vmem>>, %arg3: memref<1xf32, #tpu.memory_space<smem>>, %arg4: memref<64x128xbf16, #tpu.memory_space<vmem>>) attributes {dimension_semantics = [#tpu.dimension_semantics<parallel>], iteration_bounds = array<i64: 2>, scalar_prefetch = 0 : i64, scratch_operands = 0 : i64, tpu.core_type = #tpu.core_type<tc>, window_params = [{transform_indices = @transform_0, window_bounds = array<i64: 64, 128>}, {pipeline_mode = #tpu.pipeline_mode<synchronous>, transform_indices = @transform_1, window_bounds = array<i64: 128, 128>}, {transform_indices = @transform_2, window_bounds = array<i64: 1>}, {transform_indices = @transform_3, window_bounds = array<i64: 64, 128>}]} {
    %c0 = arith.constant 0 : index
    %c0_0 = arith.constant 0 : index
    %0 = vector.load %arg1[%c0, %c0_0] : memref<64x128xbf16, #tpu.memory_space<vmem>>, vector<64x128xbf16>
    %c0_1 = arith.constant 0 : index
    %c0_2 = arith.constant 0 : index
    %1 = vector.load %arg2[%c0_1, %c0_2] : memref<128x128xbf16, #tpu.memory_space<vmem>>, vector<128x128xbf16>
    %cst = arith.constant dense<0.000000e+00> : vector<64x128xf32>
    %2 = tpu.matmul %0, %1, %cst {dimension_numbers = #tpu.dot_dimension_numbers<[1], [0], [0], [1], [0, 0, 1, 1], [], []>} : vector<64x128xbf16>, vector<128x128xbf16>, vector<64x128xf32> -> vector<64x128xf32>
    %c0_3 = arith.constant 0 : index
    %3 = memref.load %arg3[%c0_3] : memref<1xf32, #tpu.memory_space<smem>>
    %cst_4 = arith.constant 0.000000e+00 : f32
    %4 = vector.broadcast %cst_4 : f32 to vector<64x128xf32>
    %5 = arith.cmpf oge, %2, %4 : vector<64x128xf32>
    %6 = vector.broadcast %3 : f32 to vector<64x128xf32>
    %7 = arith.mulf %6, %2 : vector<64x128xf32>
    %8 = arith.select %5, %2, %7 : vector<64x128xi1>, vector<64x128xf32>
    %9 = arith.truncf %8 : vector<64x128xf32> to vector<64x128xbf16>
    %c0_5 = arith.constant 0 : index
    %c0_6 = arith.constant 0 : index
    %10 = vector.load %arg4[%c0_5, %c0_6] : memref<64x128xbf16, #tpu.memory_space<vmem>>, vector<64x128xbf16>
    tpu.vector_store %arg4[%c0_5, %c0_6], %9 {strides = array<i32>} : memref<64x128xbf16, #tpu.memory_space<vmem>>, vector<64x128xbf16>,
    return
  }
  func.func @transform_0(%arg0: i32) -> (i32, i32) {
    %c0_i32 = arith.constant 0 : i32
    %c0_i32_0 = arith.constant 0 : i32
    return %arg0, %c0_i32 : i32, i32
  }
  func.func @transform_1(%arg0: i32) -> (i32, i32) {
    %c0_i32 = arith.constant 0 : i32
    %c0_i32_0 = arith.constant 0 : i32
    %c0_i32_1 = arith.constant 0 : i32
    return %c0_i32, %c0_i32_0 : i32, i32
  }
  func.func @transform_2(%arg0: i32) -> i32 {
    %c0_i32 = arith.constant 0 : i32
    %c0_i32_0 = arith.constant 0 : i32
    return %c0_i32 : i32
  }
  func.func @transform_3(%arg0: i32) -> (i32, i32) {
    %c0_i32 = arith.constant 0 : i32
    %c0_i32_0 = arith.constant 0 : i32
    return %arg0, %c0_i32 : i32, i32
  }
}

module attributes {stable_mosaic.version = 11 : i64} {
  func.func @_up_kernel(%arg0: i32, %arg1: memref<1x86x128xbf16, #tpu.memory_space<vmem>>, %arg2: memref<16x128x128xbf16, #tpu.memory_space<vmem>>, %arg3: memref<1x64x1xf32, #tpu.memory_space<vmem>>, %arg4: memref<64x512xbf16, #tpu.memory_space<vmem>>, %arg5: memref<1x8x128xf32, #tpu.memory_space<vmem>>) attributes {dimension_semantics = [#tpu.dimension_semantics<parallel>], iteration_bounds = array<i64: 4>, scalar_prefetch = 0 : i64, scratch_operands = 0 : i64, tpu.core_type = #tpu.core_type<tc>, window_params = [{transform_indices = @transform_0, window_bounds = array<i64: 1, 86, 128>}, {pipeline_mode = #tpu.pipeline_mode<synchronous>, transform_indices = @transform_1, window_bounds = array<i64: 16, 128, 128>}, {transform_indices = @transform_2, window_bounds = array<i64: 1, 64, 1>}, {transform_indices = @transform_3, window_bounds = array<i64: 64, 512>}, {transform_indices = @transform_4, window_bounds = array<i64: 1, 8, 128>}]} {
    %c0 = arith.constant 0 : index
    %c0_0 = arith.constant 0 : index
    %c0_1 = arith.constant 0 : index
    %0 = vector.load %arg3[%c0, %c0_0, %c0_1] : memref<1x64x1xf32, #tpu.memory_space<vmem>>, vector<1x64x1xf32>
    %1 = vector.shape_cast %0 : vector<1x64x1xf32> to vector<64x1xf32>
    %cst = arith.constant 0.000000e+00 : f32
    %2 = vector.broadcast %cst : f32 to vector<1x128xf32>
    %cst_2 = arith.constant 0.000000e+00 : f32
    %3 = vector.broadcast %cst_2 : f32 to vector<1x128xf32>
    %cst_3 = arith.constant 0.000000e+00 : f32
    %4 = vector.broadcast %cst_3 : f32 to vector<64x128xf32>
    %c0_4 = arith.constant 0 : index
    %c0_5 = arith.constant 0 : index
    %c0_6 = arith.constant 0 : index
    %5 = vector.load %arg1[%c0_4, %c0_5, %c0_6] : memref<1x86x128xbf16, #tpu.memory_space<vmem>>, vector<1x64x128xbf16>
    %6 = vector.shape_cast %5 : vector<1x64x128xbf16> to vector<64x128xbf16>
    %c0_7 = arith.constant 0 : index
    %c0_8 = arith.constant 0 : index
    %c0_9 = arith.constant 0 : index
    %7 = vector.load %arg2[%c0_7, %c0_8, %c0_9] : memref<16x128x128xbf16, #tpu.memory_space<vmem>>, vector<1x128x128xbf16>
    %8 = vector.shape_cast %7 : vector<1x128x128xbf16> to vector<128x128xbf16>
    %cst_10 = arith.constant dense<0.000000e+00> : vector<64x128xf32>
    %9 = tpu.matmul %6, %8, %cst_10 {dimension_numbers = #tpu.dot_dimension_numbers<[1], [0], [0], [1], [0, 0, 1, 1], [], []>} : vector<64x128xbf16>, vector<128x128xbf16>, vector<64x128xf32> -> vector<64x128xf32>
    %10 = arith.addf %4, %9 : vector<64x128xf32>
    %c0_11 = arith.constant 0 : index
    %c1 = arith.constant 1 : index
    %c0_12 = arith.constant 0 : index
    %11 = vector.load %arg1[%c0_11, %c1, %c0_12] : memref<1x86x128xbf16, #tpu.memory_space<vmem>>, vector<1x64x128xbf16>
    %12 = vector.shape_cast %11 : vector<1x64x128xbf16> to vector<64x128xbf16>
    %c1_13 = arith.constant 1 : index
    %c0_14 = arith.constant 0 : index
    %c0_15 = arith.constant 0 : index
    %13 = vector.load %arg2[%c1_13, %c0_14, %c0_15] : memref<16x128x128xbf16, #tpu.memory_space<vmem>>, vector<1x128x128xbf16>
    %14 = vector.shape_cast %13 : vector<1x128x128xbf16> to vector<128x128xbf16>
    %cst_16 = arith.constant dense<0.000000e+00> : vector<64x128xf32>
    %15 = tpu.matmul %12, %14, %cst_16 {dimension_numbers = #tpu.dot_dimension_numbers<[1], [0], [0], [1], [0, 0, 1, 1], [], []>} : vector<64x128xbf16>, vector<128x128xbf16>, vector<64x128xf32> -> vector<64x128xf32>
    %16 = arith.addf %10, %15 : vector<64x128xf32>
    %c0_17 = arith.constant 0 : index
    %c10 = arith.constant 10 : index
    %c0_18 = arith.constant 0 : index
    %17 = vector.load %arg1[%c0_17, %c10, %c0_18] : memref<1x86x128xbf16, #tpu.memory_space<vmem>>, vector<1x64x128xbf16>
    %18 = vector.shape_cast %17 : vector<1x64x128xbf16> to vector<64x128xbf16>
    %c2 = arith.constant 2 : index
    %c0_19 = arith.constant 0 : index
    %c0_20 = arith.constant 0 : index
    %19 = vector.load %arg2[%c2, %c0_19, %c0_20] : memref<16x128x128xbf16, #tpu.memory_space<vmem>>, vector<1x128x128xbf16>
    %20 = vector.shape_cast %19 : vector<1x128x128xbf16> to vector<128x128xbf16>
    %cst_21 = arith.constant dense<0.000000e+00> : vector<64x128xf32>
    %21 = tpu.matmul %18, %20, %cst_21 {dimension_numbers = #tpu.dot_dimension_numbers<[1], [0], [0], [1], [0, 0, 1, 1], [], []>} : vector<64x128xbf16>, vector<128x128xbf16>, vector<64x128xf32> -> vector<64x128xf32>
    %22 = arith.addf %16, %21 : vector<64x128xf32>
    %c0_22 = arith.constant 0 : index
    %c11 = arith.constant 11 : index
    %c0_23 = arith.constant 0 : index
    %23 = vector.load %arg1[%c0_22, %c11, %c0_23] : memref<1x86x128xbf16, #tpu.memory_space<vmem>>, vector<1x64x128xbf16>
    %24 = vector.shape_cast %23 : vector<1x64x128xbf16> to vector<64x128xbf16>
    %c3 = arith.constant 3 : index
    %c0_24 = arith.constant 0 : index
    %c0_25 = arith.constant 0 : index
    %25 = vector.load %arg2[%c3, %c0_24, %c0_25] : memref<16x128x128xbf16, #tpu.memory_space<vmem>>, vector<1x128x128xbf16>
    %26 = vector.shape_cast %25 : vector<1x128x128xbf16> to vector<128x128xbf16>
    %cst_26 = arith.constant dense<0.000000e+00> : vector<64x128xf32>
    %27 = tpu.matmul %24, %26, %cst_26 {dimension_numbers = #tpu.dot_dimension_numbers<[1], [0], [0], [1], [0, 0, 1, 1], [], []>} : vector<64x128xbf16>, vector<128x128xbf16>, vector<64x128xf32> -> vector<64x128xf32>
    %28 = arith.addf %22, %27 : vector<64x128xf32>
    %29 = arith.truncf %28 : vector<64x128xf32> to vector<64x128xbf16>
    %c0_27 = arith.constant 0 : index
    %c0_28 = arith.constant 0 : index
    %30 = vector.load %arg4[%c0_27, %c0_28] : memref<64x512xbf16, #tpu.memory_space<vmem>>, vector<64x128xbf16>
    tpu.vector_store %arg4[%c0_27, %c0_28], %29 {strides = array<i32>} : memref<64x512xbf16, #tpu.memory_space<vmem>>, vector<64x128xbf16>,
    %31 = vector.broadcast %1 : vector<64x1xf32> to vector<64x128xf32>
    %32 = arith.mulf %28, %31 : vector<64x128xf32>
    %cst_29 = arith.constant dense<0.000000e+00> : vector<128xf32>
    %33 = vector.multi_reduction <add>, %32, %cst_29 [0] : vector<64x128xf32> to vector<128xf32>
    %34 = vector.shape_cast %33 : vector<128xf32> to vector<1x128xf32>
    %35 = arith.addf %2, %34 : vector<1x128xf32>
    %36 = arith.mulf %28, %32 : vector<64x128xf32>
    %cst_30 = arith.constant dense<0.000000e+00> : vector<128xf32>
    %37 = vector.multi_reduction <add>, %36, %cst_30 [0] : vector<64x128xf32> to vector<128xf32>
    %38 = vector.shape_cast %37 : vector<128xf32> to vector<1x128xf32>
    %39 = arith.addf %3, %38 : vector<1x128xf32>
    %cst_31 = arith.constant 0.000000e+00 : f32
    %40 = vector.broadcast %cst_31 : f32 to vector<64x128xf32>
    %c0_32 = arith.constant 0 : index
    %c1_33 = arith.constant 1 : index
    %c0_34 = arith.constant 0 : index
    %41 = vector.load %arg1[%c0_32, %c1_33, %c0_34] : memref<1x86x128xbf16, #tpu.memory_space<vmem>>, vector<1x64x128xbf16>
    %42 = vector.shape_cast %41 : vector<1x64x128xbf16> to vector<64x128xbf16>
    %c4 = arith.constant 4 : index
    %c0_35 = arith.constant 0 : index
    %c0_36 = arith.constant 0 : index
    %43 = vector.load %arg2[%c4, %c0_35, %c0_36] : memref<16x128x128xbf16, #tpu.memory_space<vmem>>, vector<1x128x128xbf16>
    %44 = vector.shape_cast %43 : vector<1x128x128xbf16> to vector<128x128xbf16>
    %cst_37 = arith.constant dense<0.000000e+00> : vector<64x128xf32>
    %45 = tpu.matmul %42, %44, %cst_37 {dimension_numbers = #tpu.dot_dimension_numbers<[1], [0], [0], [1], [0, 0, 1, 1], [], []>} : vector<64x128xbf16>, vector<128x128xbf16>, vector<64x128xf32> -> vector<64x128xf32>
    %46 = arith.addf %40, %45 : vector<64x128xf32>
    %c0_38 = arith.constant 0 : index
    %c2_39 = arith.constant 2 : index
    %c0_40 = arith.constant 0 : index
    %47 = vector.load %arg1[%c0_38, %c2_39, %c0_40] : memref<1x86x128xbf16, #tpu.memory_space<vmem>>, vector<1x64x128xbf16>
    %48 = vector.shape_cast %47 : vector<1x64x128xbf16> to vector<64x128xbf16>
    %c5 = arith.constant 5 : index
    %c0_41 = arith.constant 0 : index
    %c0_42 = arith.constant 0 : index
    %49 = vector.load %arg2[%c5, %c0_41, %c0_42] : memref<16x128x128xbf16, #tpu.memory_space<vmem>>, vector<1x128x128xbf16>
    %50 = vector.shape_cast %49 : vector<1x128x128xbf16> to vector<128x128xbf16>
    %cst_43 = arith.constant dense<0.000000e+00> : vector<64x128xf32>
    %51 = tpu.matmul %48, %50, %cst_43 {dimension_numbers = #tpu.dot_dimension_numbers<[1], [0], [0], [1], [0, 0, 1, 1], [], []>} : vector<64x128xbf16>, vector<128x128xbf16>, vector<64x128xf32> -> vector<64x128xf32>
    %52 = arith.addf %46, %51 : vector<64x128xf32>
    %c0_44 = arith.constant 0 : index
    %c11_45 = arith.constant 11 : index
    %c0_46 = arith.constant 0 : index
    %53 = vector.load %arg1[%c0_44, %c11_45, %c0_46] : memref<1x86x128xbf16, #tpu.memory_space<vmem>>, vector<1x64x128xbf16>
    %54 = vector.shape_cast %53 : vector<1x64x128xbf16> to vector<64x128xbf16>
    %c6 = arith.constant 6 : index
    %c0_47 = arith.constant 0 : index
    %c0_48 = arith.constant 0 : index
    %55 = vector.load %arg2[%c6, %c0_47, %c0_48] : memref<16x128x128xbf16, #tpu.memory_space<vmem>>, vector<1x128x128xbf16>
    %56 = vector.shape_cast %55 : vector<1x128x128xbf16> to vector<128x128xbf16>
    %cst_49 = arith.constant dense<0.000000e+00> : vector<64x128xf32>
    %57 = tpu.matmul %54, %56, %cst_49 {dimension_numbers = #tpu.dot_dimension_numbers<[1], [0], [0], [1], [0, 0, 1, 1], [], []>} : vector<64x128xbf16>, vector<128x128xbf16>, vector<64x128xf32> -> vector<64x128xf32>
    %58 = arith.addf %52, %57 : vector<64x128xf32>
    %c0_50 = arith.constant 0 : index
    %c12 = arith.constant 12 : index
    %c0_51 = arith.constant 0 : index
    %59 = vector.load %arg1[%c0_50, %c12, %c0_51] : memref<1x86x128xbf16, #tpu.memory_space<vmem>>, vector<1x64x128xbf16>
    %60 = vector.shape_cast %59 : vector<1x64x128xbf16> to vector<64x128xbf16>
    %c7 = arith.constant 7 : index
    %c0_52 = arith.constant 0 : index
    %c0_53 = arith.constant 0 : index
    %61 = vector.load %arg2[%c7, %c0_52, %c0_53] : memref<16x128x128xbf16, #tpu.memory_space<vmem>>, vector<1x128x128xbf16>
    %62 = vector.shape_cast %61 : vector<1x128x128xbf16> to vector<128x128xbf16>
    %cst_54 = arith.constant dense<0.000000e+00> : vector<64x128xf32>
    %63 = tpu.matmul %60, %62, %cst_54 {dimension_numbers = #tpu.dot_dimension_numbers<[1], [0], [0], [1], [0, 0, 1, 1], [], []>} : vector<64x128xbf16>, vector<128x128xbf16>, vector<64x128xf32> -> vector<64x128xf32>
    %64 = arith.addf %58, %63 : vector<64x128xf32>
    %65 = arith.truncf %64 : vector<64x128xf32> to vector<64x128xbf16>
    %c0_55 = arith.constant 0 : index
    %c128 = arith.constant 128 : index
    %66 = vector.load %arg4[%c0_55, %c128] : memref<64x512xbf16, #tpu.memory_space<vmem>>, vector<64x128xbf16>
    tpu.vector_store %arg4[%c0_55, %c128], %65 {strides = array<i32>} : memref<64x512xbf16, #tpu.memory_space<vmem>>, vector<64x128xbf16>,
    %67 = vector.broadcast %1 : vector<64x1xf32> to vector<64x128xf32>
    %68 = arith.mulf %64, %67 : vector<64x128xf32>
    %cst_56 = arith.constant dense<0.000000e+00> : vector<128xf32>
    %69 = vector.multi_reduction <add>, %68, %cst_56 [0] : vector<64x128xf32> to vector<128xf32>
    %70 = vector.shape_cast %69 : vector<128xf32> to vector<1x128xf32>
    %71 = arith.addf %35, %70 : vector<1x128xf32>
    %72 = arith.mulf %64, %68 : vector<64x128xf32>
    %cst_57 = arith.constant dense<0.000000e+00> : vector<128xf32>
    %73 = vector.multi_reduction <add>, %72, %cst_57 [0] : vector<64x128xf32> to vector<128xf32>
    %74 = vector.shape_cast %73 : vector<128xf32> to vector<1x128xf32>
    %75 = arith.addf %39, %74 : vector<1x128xf32>
    %cst_58 = arith.constant 0.000000e+00 : f32
    %76 = vector.broadcast %cst_58 : f32 to vector<64x128xf32>
    %c0_59 = arith.constant 0 : index
    %c10_60 = arith.constant 10 : index
    %c0_61 = arith.constant 0 : index
    %77 = vector.load %arg1[%c0_59, %c10_60, %c0_61] : memref<1x86x128xbf16, #tpu.memory_space<vmem>>, vector<1x64x128xbf16>
    %78 = vector.shape_cast %77 : vector<1x64x128xbf16> to vector<64x128xbf16>
    %c8 = arith.constant 8 : index
    %c0_62 = arith.constant 0 : index
    %c0_63 = arith.constant 0 : index
    %79 = vector.load %arg2[%c8, %c0_62, %c0_63] : memref<16x128x128xbf16, #tpu.memory_space<vmem>>, vector<1x128x128xbf16>
    %80 = vector.shape_cast %79 : vector<1x128x128xbf16> to vector<128x128xbf16>
    %cst_64 = arith.constant dense<0.000000e+00> : vector<64x128xf32>
    %81 = tpu.matmul %78, %80, %cst_64 {dimension_numbers = #tpu.dot_dimension_numbers<[1], [0], [0], [1], [0, 0, 1, 1], [], []>} : vector<64x128xbf16>, vector<128x128xbf16>, vector<64x128xf32> -> vector<64x128xf32>
    %82 = arith.addf %76, %81 : vector<64x128xf32>
    %c0_65 = arith.constant 0 : index
    %c11_66 = arith.constant 11 : index
    %c0_67 = arith.constant 0 : index
    %83 = vector.load %arg1[%c0_65, %c11_66, %c0_67] : memref<1x86x128xbf16, #tpu.memory_space<vmem>>, vector<1x64x128xbf16>
    %84 = vector.shape_cast %83 : vector<1x64x128xbf16> to vector<64x128xbf16>
    %c9 = arith.constant 9 : index
    %c0_68 = arith.constant 0 : index
    %c0_69 = arith.constant 0 : index
    %85 = vector.load %arg2[%c9, %c0_68, %c0_69] : memref<16x128x128xbf16, #tpu.memory_space<vmem>>, vector<1x128x128xbf16>
    %86 = vector.shape_cast %85 : vector<1x128x128xbf16> to vector<128x128xbf16>
    %cst_70 = arith.constant dense<0.000000e+00> : vector<64x128xf32>
    %87 = tpu.matmul %84, %86, %cst_70 {dimension_numbers = #tpu.dot_dimension_numbers<[1], [0], [0], [1], [0, 0, 1, 1], [], []>} : vector<64x128xbf16>, vector<128x128xbf16>, vector<64x128xf32> -> vector<64x128xf32>
    %88 = arith.addf %82, %87 : vector<64x128xf32>
    %c0_71 = arith.constant 0 : index
    %c20 = arith.constant 20 : index
    %c0_72 = arith.constant 0 : index
    %89 = vector.load %arg1[%c0_71, %c20, %c0_72] : memref<1x86x128xbf16, #tpu.memory_space<vmem>>, vector<1x64x128xbf16>
    %90 = vector.shape_cast %89 : vector<1x64x128xbf16> to vector<64x128xbf16>
    %c10_73 = arith.constant 10 : index
    %c0_74 = arith.constant 0 : index
    %c0_75 = arith.constant 0 : index
    %91 = vector.load %arg2[%c10_73, %c0_74, %c0_75] : memref<16x128x128xbf16, #tpu.memory_space<vmem>>, vector<1x128x128xbf16>
    %92 = vector.shape_cast %91 : vector<1x128x128xbf16> to vector<128x128xbf16>
    %cst_76 = arith.constant dense<0.000000e+00> : vector<64x128xf32>
    %93 = tpu.matmul %90, %92, %cst_76 {dimension_numbers = #tpu.dot_dimension_numbers<[1], [0], [0], [1], [0, 0, 1, 1], [], []>} : vector<64x128xbf16>, vector<128x128xbf16>, vector<64x128xf32> -> vector<64x128xf32>
    %94 = arith.addf %88, %93 : vector<64x128xf32>
    %c0_77 = arith.constant 0 : index
    %c21 = arith.constant 21 : index
    %c0_78 = arith.constant 0 : index
    %95 = vector.load %arg1[%c0_77, %c21, %c0_78] : memref<1x86x128xbf16, #tpu.memory_space<vmem>>, vector<1x64x128xbf16>
    %96 = vector.shape_cast %95 : vector<1x64x128xbf16> to vector<64x128xbf16>
    %c11_79 = arith.constant 11 : index
    %c0_80 = arith.constant 0 : index
    %c0_81 = arith.constant 0 : index
    %97 = vector.load %arg2[%c11_79, %c0_80, %c0_81] : memref<16x128x128xbf16, #tpu.memory_space<vmem>>, vector<1x128x128xbf16>
    %98 = vector.shape_cast %97 : vector<1x128x128xbf16> to vector<128x128xbf16>
    %cst_82 = arith.constant dense<0.000000e+00> : vector<64x128xf32>
    %99 = tpu.matmul %96, %98, %cst_82 {dimension_numbers = #tpu.dot_dimension_numbers<[1], [0], [0], [1], [0, 0, 1, 1], [], []>} : vector<64x128xbf16>, vector<128x128xbf16>, vector<64x128xf32> -> vector<64x128xf32>
    %100 = arith.addf %94, %99 : vector<64x128xf32>
    %101 = arith.truncf %100 : vector<64x128xf32> to vector<64x128xbf16>
    %c0_83 = arith.constant 0 : index
    %c256 = arith.constant 256 : index
    %102 = vector.load %arg4[%c0_83, %c256] : memref<64x512xbf16, #tpu.memory_space<vmem>>, vector<64x128xbf16>
    tpu.vector_store %arg4[%c0_83, %c256], %101 {strides = array<i32>} : memref<64x512xbf16, #tpu.memory_space<vmem>>, vector<64x128xbf16>,
    %103 = vector.broadcast %1 : vector<64x1xf32> to vector<64x128xf32>
    %104 = arith.mulf %100, %103 : vector<64x128xf32>
    %cst_84 = arith.constant dense<0.000000e+00> : vector<128xf32>
    %105 = vector.multi_reduction <add>, %104, %cst_84 [0] : vector<64x128xf32> to vector<128xf32>
    %106 = vector.shape_cast %105 : vector<128xf32> to vector<1x128xf32>
    %107 = arith.addf %71, %106 : vector<1x128xf32>
    %108 = arith.mulf %100, %104 : vector<64x128xf32>
    %cst_85 = arith.constant dense<0.000000e+00> : vector<128xf32>
    %109 = vector.multi_reduction <add>, %108, %cst_85 [0] : vector<64x128xf32> to vector<128xf32>
    %110 = vector.shape_cast %109 : vector<128xf32> to vector<1x128xf32>
    %111 = arith.addf %75, %110 : vector<1x128xf32>
    %cst_86 = arith.constant 0.000000e+00 : f32
    %112 = vector.broadcast %cst_86 : f32 to vector<64x128xf32>
    %c0_87 = arith.constant 0 : index
    %c11_88 = arith.constant 11 : index
    %c0_89 = arith.constant 0 : index
    %113 = vector.load %arg1[%c0_87, %c11_88, %c0_89] : memref<1x86x128xbf16, #tpu.memory_space<vmem>>, vector<1x64x128xbf16>
    %114 = vector.shape_cast %113 : vector<1x64x128xbf16> to vector<64x128xbf16>
    %c12_90 = arith.constant 12 : index
    %c0_91 = arith.constant 0 : index
    %c0_92 = arith.constant 0 : index
    %115 = vector.load %arg2[%c12_90, %c0_91, %c0_92] : memref<16x128x128xbf16, #tpu.memory_space<vmem>>, vector<1x128x128xbf16>
    %116 = vector.shape_cast %115 : vector<1x128x128xbf16> to vector<128x128xbf16>
    %cst_93 = arith.constant dense<0.000000e+00> : vector<64x128xf32>
    %117 = tpu.matmul %114, %116, %cst_93 {dimension_numbers = #tpu.dot_dimension_numbers<[1], [0], [0], [1], [0, 0, 1, 1], [], []>} : vector<64x128xbf16>, vector<128x128xbf16>, vector<64x128xf32> -> vector<64x128xf32>
    %118 = arith.addf %112, %117 : vector<64x128xf32>
    %c0_94 = arith.constant 0 : index
    %c12_95 = arith.constant 12 : index
    %c0_96 = arith.constant 0 : index
    %119 = vector.load %arg1[%c0_94, %c12_95, %c0_96] : memref<1x86x128xbf16, #tpu.memory_space<vmem>>, vector<1x64x128xbf16>
    %120 = vector.shape_cast %119 : vector<1x64x128xbf16> to vector<64x128xbf16>
    %c13 = arith.constant 13 : index
    %c0_97 = arith.constant 0 : index
    %c0_98 = arith.constant 0 : index
    %121 = vector.load %arg2[%c13, %c0_97, %c0_98] : memref<16x128x128xbf16, #tpu.memory_space<vmem>>, vector<1x128x128xbf16>
    %122 = vector.shape_cast %121 : vector<1x128x128xbf16> to vector<128x128xbf16>
    %cst_99 = arith.constant dense<0.000000e+00> : vector<64x128xf32>
    %123 = tpu.matmul %120, %122, %cst_99 {dimension_numbers = #tpu.dot_dimension_numbers<[1], [0], [0], [1], [0, 0, 1, 1], [], []>} : vector<64x128xbf16>, vector<128x128xbf16>, vector<64x128xf32> -> vector<64x128xf32>
    %124 = arith.addf %118, %123 : vector<64x128xf32>
    %c0_100 = arith.constant 0 : index
    %c21_101 = arith.constant 21 : index
    %c0_102 = arith.constant 0 : index
    %125 = vector.load %arg1[%c0_100, %c21_101, %c0_102] : memref<1x86x128xbf16, #tpu.memory_space<vmem>>, vector<1x64x128xbf16>
    %126 = vector.shape_cast %125 : vector<1x64x128xbf16> to vector<64x128xbf16>
    %c14 = arith.constant 14 : index
    %c0_103 = arith.constant 0 : index
    %c0_104 = arith.constant 0 : index
    %127 = vector.load %arg2[%c14, %c0_103, %c0_104] : memref<16x128x128xbf16, #tpu.memory_space<vmem>>, vector<1x128x128xbf16>
    %128 = vector.shape_cast %127 : vector<1x128x128xbf16> to vector<128x128xbf16>
    %cst_105 = arith.constant dense<0.000000e+00> : vector<64x128xf32>
    %129 = tpu.matmul %126, %128, %cst_105 {dimension_numbers = #tpu.dot_dimension_numbers<[1], [0], [0], [1], [0, 0, 1, 1], [], []>} : vector<64x128xbf16>, vector<128x128xbf16>, vector<64x128xf32> -> vector<64x128xf32>
    %130 = arith.addf %124, %129 : vector<64x128xf32>
    %c0_106 = arith.constant 0 : index
    %c22 = arith.constant 22 : index
    %c0_107 = arith.constant 0 : index
    %131 = vector.load %arg1[%c0_106, %c22, %c0_107] : memref<1x86x128xbf16, #tpu.memory_space<vmem>>, vector<1x64x128xbf16>
    %132 = vector.shape_cast %131 : vector<1x64x128xbf16> to vector<64x128xbf16>
    %c15 = arith.constant 15 : index
    %c0_108 = arith.constant 0 : index
    %c0_109 = arith.constant 0 : index
    %133 = vector.load %arg2[%c15, %c0_108, %c0_109] : memref<16x128x128xbf16, #tpu.memory_space<vmem>>, vector<1x128x128xbf16>
    %134 = vector.shape_cast %133 : vector<1x128x128xbf16> to vector<128x128xbf16>
    %cst_110 = arith.constant dense<0.000000e+00> : vector<64x128xf32>
    %135 = tpu.matmul %132, %134, %cst_110 {dimension_numbers = #tpu.dot_dimension_numbers<[1], [0], [0], [1], [0, 0, 1, 1], [], []>} : vector<64x128xbf16>, vector<128x128xbf16>, vector<64x128xf32> -> vector<64x128xf32>
    %136 = arith.addf %130, %135 : vector<64x128xf32>
    %137 = arith.truncf %136 : vector<64x128xf32> to vector<64x128xbf16>
    %c0_111 = arith.constant 0 : index
    %c384 = arith.constant 384 : index
    %138 = vector.load %arg4[%c0_111, %c384] : memref<64x512xbf16, #tpu.memory_space<vmem>>, vector<64x128xbf16>
    tpu.vector_store %arg4[%c0_111, %c384], %137 {strides = array<i32>} : memref<64x512xbf16, #tpu.memory_space<vmem>>, vector<64x128xbf16>,
    %139 = vector.broadcast %1 : vector<64x1xf32> to vector<64x128xf32>
    %140 = arith.mulf %136, %139 : vector<64x128xf32>
    %cst_112 = arith.constant dense<0.000000e+00> : vector<128xf32>
    %141 = vector.multi_reduction <add>, %140, %cst_112 [0] : vector<64x128xf32> to vector<128xf32>
    %142 = vector.shape_cast %141 : vector<128xf32> to vector<1x128xf32>
    %143 = arith.addf %107, %142 : vector<1x128xf32>
    %144 = arith.mulf %136, %140 : vector<64x128xf32>
    %cst_113 = arith.constant dense<0.000000e+00> : vector<128xf32>
    %145 = vector.multi_reduction <add>, %144, %cst_113 [0] : vector<64x128xf32> to vector<128xf32>
    %146 = vector.shape_cast %145 : vector<128xf32> to vector<1x128xf32>
    %147 = arith.addf %111, %146 : vector<1x128xf32>
    %cst_114 = arith.constant 0.000000e+00 : f32
    %148 = vector.broadcast %cst_114 : f32 to vector<6x128xf32>
    %149 = tpu.concatenate %143, %147, %148 in 0 : vector<1x128xf32>, vector<1x128xf32>, vector<6x128xf32> -> vector<8x128xf32>
    %c0_115 = arith.constant 0 : index
    %c0_116 = arith.constant 0 : index
    %c0_117 = arith.constant 0 : index
    %150 = vector.load %arg5[%c0_115, %c0_116, %c0_117] : memref<1x8x128xf32, #tpu.memory_space<vmem>>, vector<1x8x128xf32>
    %151 = vector.shape_cast %150 : vector<1x8x128xf32> to vector<8x128xf32>
    %152 = vector.shape_cast %149 : vector<8x128xf32> to vector<1x8x128xf32>
    tpu.vector_store %arg5[%c0_115, %c0_116, %c0_117], %152 {strides = array<i32>} : memref<1x8x128xf32, #tpu.memory_space<vmem>>, vector<1x8x128xf32>,
    return
  }
  func.func @transform_0(%arg0: i32) -> (i32, i32, i32) {
    %c0_i32 = arith.constant 0 : i32
    %c0_i32_0 = arith.constant 0 : i32
    %c0_i32_1 = arith.constant 0 : i32
    return %arg0, %c0_i32, %c0_i32_0 : i32, i32, i32
  }
  func.func @transform_1(%arg0: i32) -> (i32, i32, i32) {
    %c0_i32 = arith.constant 0 : i32
    %c0_i32_0 = arith.constant 0 : i32
    %c0_i32_1 = arith.constant 0 : i32
    %c0_i32_2 = arith.constant 0 : i32
    return %c0_i32, %c0_i32_0, %c0_i32_1 : i32, i32, i32
  }
  func.func @transform_2(%arg0: i32) -> (i32, i32, i32) {
    %c0_i32 = arith.constant 0 : i32
    %c0_i32_0 = arith.constant 0 : i32
    %c0_i32_1 = arith.constant 0 : i32
    return %arg0, %c0_i32, %c0_i32_0 : i32, i32, i32
  }
  func.func @transform_3(%arg0: i32) -> (i32, i32) {
    %c0_i32 = arith.constant 0 : i32
    %c0_i32_0 = arith.constant 0 : i32
    return %arg0, %c0_i32 : i32, i32
  }
  func.func @transform_4(%arg0: i32) -> (i32, i32, i32) {
    %c0_i32 = arith.constant 0 : i32
    %c0_i32_0 = arith.constant 0 : i32
    %c0_i32_1 = arith.constant 0 : i32
    return %arg0, %c0_i32, %c0_i32_0 : i32, i32, i32
  }
}

</mosaic_0001>

<llo_original>
// kernel: unet_innermost_forward.2
$region0: #{unet_innermost_forward.2}
  #allocation0 [shape = 'u32[]', space=smem, size = 0x4, offset = 0x4, fixed_abs, tag = 'smem constant byte address 0x4 - core index']
  #allocation1 [shape = 'u32[72,128]{1,0:T(1,128)}', space=vmem, size = 0x9000, scoped, tag = 'internal scratch']
  #allocation2 [shape = 'f32[1]{0:T(128)S(6)}', space=smem, size = 0x200, scoped, tag = 'scoped memory for unet_innermost_forward.2']
  %s0 = inlined_call_operand.vmem [shape: bf16[128,128], index: 0, kind: input, shape index: {}]
  %s1 = inlined_call_operand.vmem [shape: bf16[128,128], index: 1, kind: input, shape index: {}]
  %s2 = inlined_call_operand.<no memory space> [shape: f32[1], index: 2, kind: input, shape index: {}]
  %s3 = inlined_call_operand.vmem [shape: bf16[128,128], index: 3, kind: output, shape index: {}]
  %s4 = sld [smem:[#allocation0]]
  $region45: #{unet_innermost_forward.2} parent=0
    _
  %s6 = ssub.s32 1, %s4
  %s7 = scalar_select 0, %s6, %s4
  %8 = sst [smem:[#allocation2]] %s2
  loop: start=0, step=1, limit=4
  $region2: #{unet_innermost_forward.2} parent=0 // loop_pre_header
    _
  $region3: #{unet_innermost_forward.2} parent=0 // loop_header
    %s10 = sphi 0, %s14
    %p11 = scmp.ge.s32.totalorder %s10, 4
    %s20 = sphi 0, %s22
    %s23 = sphi 0, %s20
    %s24 = sphi 0, %s23
    %s40 = sphi 0, %s24
    %s44 = sphi 0, %s44
    %s46 = sphi 0, %s44
    %s47 = sphi 0, %s46
    %s61 = sphi 0, %s47
    %s65 = sphi 0, %s65
    %s67 = sphi 0, %s65
    %s68 = sphi 0, %s67
    %s82 = sphi 0, %s68
    %s88 = sphi 0, %s90
    %s91 = sphi 0, %s88
    %s92 = sphi 0, %s91
    %s108 = sphi 0, %s92
  $region4: #{unet_innermost_forward.2} parent=0 // loop_header_branch
    %13 = sbr.rel (%p11) target = $region8
  $region5: #{unet_innermost_forward.2} parent=0 // loop_body
    %s15 = ssub.s32 %s10, 1
    %s16 = ssub.s32 %s10, 2
    %s17 = sadd.s32 %s10, 1
    %s18 = ssub.s32 %s10, %s17
    %p19 = scmp.eq.s32.totalorder %s18, 0
    %s21 = sadd.s32 %s20, 1
    %s22 = scalar_select %p19, %s20, %s21
    %p25 = pneg %p19
    %p26 = scmp.eq.s32.totalorder %s10, 1
    %p27 = por %p25, %p26
    %p28 = scmp.ne.s32.totalorder %s20, %s23
    %p29 = scmp.eq.s32.totalorder %s10, 0
    %p30 = por %p28, %p29
    %p31 = scmp.ne.s32.totalorder %s20, %s23
    %p32 = scmp.eq.s32.totalorder %s15, 1
    %p33 = por %p31, %p32
    %p34 = scmp.ne.s32.totalorder %s23, %s24
    %p35 = scmp.eq.s32.totalorder %s15, 0
    %p36 = por %p34, %p35
    %p37 = scmp.ne.s32.totalorder %s23, %s24
    %p38 = scmp.eq.s32.totalorder %s16, 1
    %p39 = por %p37, %p38
    %p41 = scmp.ne.s32.totalorder %s24, %s40
    %p42 = scmp.eq.s32.totalorder %s16, 0
    %p43 = por %p41, %p42
    %s45 = sadd.s32 %s44, 1
    %p48 = scmp.eq.s32.totalorder %s10, 1
    %p49 = scmp.ne.s32.totalorder %s44, %s46
    %p50 = scmp.eq.s32.totalorder %s10, 0
    %p51 = por %p49, %p50
    %p52 = scmp.ne.s32.totalorder %s44, %s46
    %p53 = scmp.eq.s32.totalorder %s15, 1
    %p54 = por %p52, %p53
    %p55 = scmp.ne.s32.totalorder %s46, %s47
    %p56 = scmp.eq.s32.totalorder %s15, 0
    %p57 = por %p55, %p56
    %p58 = scmp.ne.s32.totalorder %s46, %s47
    %p59 = scmp.eq.s32.totalorder %s16, 1
    %p60 = por %p58, %p59
    %p62 = scmp.ne.s32.totalorder %s47, %s61
    %p63 = scmp.eq.s32.totalorder %s16, 0
    %p64 = por %p62, %p63
    %s66 = sadd.s32 %s65, 1
    %p69 = scmp.eq.s32.totalorder %s10, 1
    %p70 = scmp.ne.s32.totalorder %s65, %s67
    %p71 = scmp.eq.s32.totalorder %s10, 0
    %p72 = por %p70, %p71
    %p73 = scmp.ne.s32.totalorder %s65, %s67
    %p74 = scmp.eq.s32.totalorder %s15, 1
    %p75 = por %p73, %p74
    %p76 = scmp.ne.s32.totalorder %s67, %s68
    %p77 = scmp.eq.s32.totalorder %s15, 0
    %p78 = por %p76, %p77
    %p79 = scmp.ne.s32.totalorder %s67, %s68
    %p80 = scmp.eq.s32.totalorder %s16, 1
    %p81 = por %p79, %p80
    %p83 = scmp.ne.s32.totalorder %s68, %s82
    %p84 = scmp.eq.s32.totalorder %s16, 0
    %p85 = por %p83, %p84
    %s86 = ssub.s32 %s10, %s17
    %p87 = scmp.eq.s32.totalorder %s86, 0
    %s89 = sadd.s32 %s88, 1
    %s90 = scalar_select %p87, %s88, %s89
    %p93 = pneg %p87
    %p94 = scmp.eq.s32.totalorder %s10, 1
    %p95 = por %p93, %p94
    %p96 = scmp.ne.s32.totalorder %s88, %s91
    %p97 = scmp.eq.s32.totalorder %s10, 0
    %p98 = por %p96, %p97
    %p99 = scmp.ne.s32.totalorder %s88, %s91
    %p100 = scmp.eq.s32.totalorder %s15, 1
    %p101 = por %p99, %p100
    %p102 = scmp.ne.s32.totalorder %s91, %s92
    %p103 = scmp.eq.s32.totalorder %s15, 0
    %p104 = por %p102, %p103
    %p105 = scmp.ne.s32.totalorder %s91, %s92
    %p106 = scmp.eq.s32.totalorder %s16, 1
    %p107 = por %p105, %p106
    %p109 = scmp.ne.s32.totalorder %s92, %s108
    %p110 = scmp.eq.s32.totalorder %s16, 0
    %p111 = por %p109, %p110
    %p112 = scmp.le.s32.totalorder 1, %s10
    %p113 = scmp.lt.s32.totalorder %s10, 3
    %p114 = pnand %p112, %p113
    %p115 = pneg %p114
    // Predicated region
    $region9: #{unet_innermost_forward.2} parent=5 // pred_check
      _
    $region10: #{unet_innermost_forward.2} parent=5 // pred_check_branch
      %117 = sbr.rel (%p114) target = $region12
    $region11: #{unet_innermost_forward.2} parent=5 // pred_region
      %s118 = ssub.s32 %s10, 1
      // Predicated region
      $region13: #{unet_innermost_forward.2} parent=11 // pred_check
        %p119 = pneg %p57
      $region14: #{unet_innermost_forward.2} parent=11 // pred_check_branch
        %121 = sbr.rel (%p119) target = $region16
      $region15: #{unet_innermost_forward.2} parent=11 // pred_region
        _
      $region16: #{unet_innermost_forward.2} parent=11 // pred_fallthru
        _
      // Predicated region
      $region17: #{unet_innermost_forward.2} parent=11 // pred_check
        %p122 = pneg %p78
      $region18: #{unet_innermost_forward.2} parent=11 // pred_check_branch
        %124 = sbr.rel (%p122) target = $region20
      $region19: #{unet_innermost_forward.2} parent=11 // pred_region
        _
      $region20: #{unet_innermost_forward.2} parent=11 // pred_fallthru
        _
    $region12: #{unet_innermost_forward.2} parent=5 // pred_fallthru
      _
    %p125 = scmp.lt.s32.totalorder %s10, 2
    // Predicated region
    $region21: #{unet_innermost_forward.2} parent=5 // pred_check
      %p126 = pneg %p125
    $region22: #{unet_innermost_forward.2} parent=5 // pred_check_branch
      %128 = sbr.rel (%p126) target = $region24
    $region23: #{unet_innermost_forward.2} parent=5 // pred_region
      // Predicated region
      $region25: #{unet_innermost_forward.2} parent=23 // pred_check
        %p129 = pneg %p30
      $region26: #{unet_innermost_forward.2} parent=23 // pred_check_branch
        %131 = sbr.rel (%p129) target = $region28
      $region27: #{unet_innermost_forward.2} parent=23 // pred_region
        %s132 = smul.u32 8, %s10
        %p133 = scmp.lt.s32.totalorder %s132, 15
        %s134 = scalar_select %p133, %s132, 15
        %s135 = smul.addr %s134, 4
        %s136 = scalar_lea.vmem %s0, %s135
        %s137 = smul.u32 8, %s10
      $region28: #{unet_innermost_forward.2} parent=23 // pred_fallthru
        _
    $region24: #{unet_innermost_forward.2} parent=5 // pred_fallthru
      _
    %p138 = scmp.le.s32.totalorder 1, %s10
    %p139 = scmp.lt.s32.totalorder %s10, 3
    %p140 = pnand %p138, %p139
    %p141 = pneg %p140
    // Predicated region
    $region29: #{unet_innermost_forward.2} parent=5 // pred_check
      _
    $region30: #{unet_innermost_forward.2} parent=5 // pred_check_branch
      %143 = sbr.rel (%p140) target = $region32
    $region31: #{unet_innermost_forward.2} parent=5 // pred_region
      %s144 = ssub.s32 %s10, 1
      %s145 = smul.u32 8, %s15
      %p146 = scmp.lt.s32.totalorder %s145, 15
      %s147 = scalar_select %p146, %s145, 15
      %s148 = smul.addr %s147, 4
      %s149 = scalar_lea.vmem %s0, %s148
      %p150 = pneg %p36
      %p151 = pneg %p33
      %p152 = pneg %p57
      %p153 = pneg %p54
      %p154 = pneg %p78
      %p155 = pneg %p75
      %p156 = pneg %p104
      %p157 = pneg %p101
      %s158 = smul.u32 8, %s15
      %p159 = scmp.lt.s32.totalorder %s158, 15
      %s160 = scalar_select %p159, %s158, 15
      %s161 = smul.addr %s160, 4
      %s162 = scalar_lea.vmem %s3, %s161
      %s163 = smul.u32 8, %s15
      %p164 = scmp.lt.s32.totalorder %s163, 15
      %s165 = scalar_select %p164, %s163, 15
      %s166 = smul.addr %s165, 4
      %s167 = scalar_lea.vmem %s0, %s166
      %s168 = smul.u32 8, %s15
      %s169 = smul.u32 8, %s15
      %p170 = scmp.lt.s32.totalorder %s169, 15
      %s171 = scalar_select %p170, %s169, 15
      %s172 = smul.addr %s171, 4
      %s173 = scalar_lea.vmem %s3, %s172
      %s174 = smul.u32 8, %s15
      %v175 = vld [vmem:[%s167] sm:$0xf]
      %v176 = vld [vmem:[%s167 + $0x4] sm:$0xf]
      %v177 = vld [vmem:[%s167 + $0x8] sm:$0xf]
      %v178 = vld [vmem:[%s167 + $0xc] sm:$0xf]
      %v179 = vld [vmem:[%s167 + $0x10] sm:$0xf]
      %v180 = vld [vmem:[%s167 + $0x14] sm:$0xf]
      %v181 = vld [vmem:[%s167 + $0x18] sm:$0xf]
      %v182 = vld [vmem:[%s167 + $0x1c] sm:$0xf]
      %v183 = vld [vmem:[%s1] sm:$0xf]
      %v184 = vld [vmem:[%s1 + $0x4] sm:$0xf]
      %v185 = vld [vmem:[%s1 + $0x8] sm:$0xf]
      %v186 = vld [vmem:[%s1 + $0xc] sm:$0xf]
      %v187 = vld [vmem:[%s1 + $0x10] sm:$0xf]
      %v188 = vld [vmem:[%s1 + $0x14] sm:$0xf]
      %v189 = vld [vmem:[%s1 + $0x18] sm:$0xf]
      %v190 = vld [vmem:[%s1 + $0x1c] sm:$0xf]
      %v191 = vld [vmem:[%s1 + $0x20] sm:$0xf]
      %v192 = vld [vmem:[%s1 + $0x24] sm:$0xf]
      %v193 = vld [vmem:[%s1 + $0x28] sm:$0xf]
      %v194 = vld [vmem:[%s1 + $0x2c] sm:$0xf]
      %v195 = vld [vmem:[%s1 + $0x30] sm:$0xf]
      %v196 = vld [vmem:[%s1 + $0x34] sm:$0xf]
      %v197 = vld [vmem:[%s1 + $0x38] sm:$0xf]
      %v198 = vld [vmem:[%s1 + $0x3c] sm:$0xf]
      %v207 = vunpack.c.l.b16 %v175
      %v208 = vunpack.c.l.b16 %v176
      %v209 = vunpack.c.l.b16 %v177
      %v210 = vunpack.c.l.b16 %v178
      %v211 = vunpack.c.l.b16 %v179
      %v212 = vunpack.c.l.b16 %v180
      %v213 = vunpack.c.l.b16 %v181
      %v214 = vunpack.c.l.b16 %v182
      %v215 = vpack.c.b16 %v208, %v207
      %v216 = vpack.c.b16 %v210, %v209
      %v217 = vpack.c.b16 %v212, %v211
      %v218 = vpack.c.b16 %v214, %v213
      %v239 = vunpack.c.l.b16 %v183
      %v240 = vunpack.c.l.b16 %v184
      %v241 = vunpack.c.l.b16 %v185
      %v242 = vunpack.c.l.b16 %v186
      %v243 = vunpack.c.l.b16 %v187
      %v244 = vunpack.c.l.b16 %v188
      %v245 = vunpack.c.l.b16 %v189
      %v246 = vunpack.c.l.b16 %v190
      %v247 = vunpack.c.l.b16 %v191
      %v248 = vunpack.c.l.b16 %v192
      %v249 = vunpack.c.l.b16 %v193
      %v250 = vunpack.c.l.b16 %v194
      %v251 = vunpack.c.l.b16 %v195
      %v252 = vunpack.c.l.b16 %v196
      %v253 = vunpack.c.l.b16 %v197
      %v254 = vunpack.c.l.b16 %v198
      %v255 = vpack.c.b16 %v240, %v239
      %v256 = vpack.c.b16 %v242, %v241
      %v257 = vpack.c.b16 %v244, %v243
      %v258 = vpack.c.b16 %v246, %v245
      %v259 = vpack.c.b16 %v248, %v247
      %v260 = vpack.c.b16 %v250, %v249
      %v261 = vpack.c.b16 %v252, %v251
      %v262 = vpack.c.b16 %v254, %v253
      %271 = vmatpush.bf16.msra.mxu0 %v262
      %272 = vmatpush.bf16.msra.mxu0 %v261
      %273 = vmatpush.bf16.msra.mxu0 %v260
      %274 = vmatpush.bf16.msra.mxu0 %v259
      %275 = vmatpush.bf16.msra.mxu0 %v258
      %276 = vmatpush.bf16.msra.mxu0 %v257
      %277 = vmatpush.bf16.msra.mxu0 %v256
      %278 = vmatpush.bf16.msra.mxu0 %v255
      %279 = vmatmul.bf16.gmra.mxu0 %v215
      %v280 = vpop.f32.mrf.mxu0
      %v281 = vadd.f32 0.0, %v280
      %v282 = vpop.f32.mrf.mxu0
      %v283 = vadd.f32 0.0, %v282
      %284 = vmatmul.bf16.gmra.mxu0 %v216
      %v285 = vpop.f32.mrf.mxu0
      %v286 = vadd.f32 0.0, %v285
      %v287 = vpop.f32.mrf.mxu0
      %v288 = vadd.f32 0.0, %v287
      %289 = vmatmul.bf16.gmra.mxu0 %v217
      %v290 = vpop.f32.mrf.mxu0
      %v291 = vadd.f32 0.0, %v290
      %v292 = vpop.f32.mrf.mxu0
      %v293 = vadd.f32 0.0, %v292
      %294 = vmatmul.bf16.gmra.mxu0 %v218
      %v295 = vpop.f32.mrf.mxu0
      %v296 = vadd.f32 0.0, %v295
      %v297 = vpop.f32.mrf.mxu0
      %v298 = vadd.f32 0.0, %v297
      %299 = vdwg.mxu0
      %s300 = sld [smem:[#allocation2]]
      %vm301 = vcmp.ge.f32.partialorder %v281, 0.0
      %vm302 = vcmp.ge.f32.partialorder %v283, 0.0
      %vm303 = vcmp.ge.f32.partialorder %v286, 0.0
      %vm304 = vcmp.ge.f32.partialorder %v288, 0.0
      %vm305 = vcmp.ge.f32.partialorder %v291, 0.0
      %vm306 = vcmp.ge.f32.partialorder %v293, 0.0
      %vm307 = vcmp.ge.f32.partialorder %v296, 0.0
      %vm308 = vcmp.ge.f32.partialorder %v298, 0.0
      %v309 = vstv %s300
      %v310 = vmul.f32 %v309, %v281
      %v311 = vmul.f32 %v309, %v283
      %v312 = vmul.f32 %v309, %v286
      %v313 = vmul.f32 %v309, %v288
      %v314 = vmul.f32 %v309, %v291
      %v315 = vmul.f32 %v309, %v293
      %v316 = vmul.f32 %v309, %v296
      %v317 = vmul.f32 %v309, %v298
      %v318 = vsel %vm301, %v281, %v310
      %v319 = vsel %vm302, %v283, %v311
      %v320 = vsel %vm303, %v286, %v312
      %v321 = vsel %vm304, %v288, %v313
      %v322 = vsel %vm305, %v291, %v314
      %v323 = vsel %vm306, %v293, %v315
      %v324 = vsel %vm307, %v296, %v316
      %v325 = vsel %vm308, %v298, %v317
      %v326 = vpack.c.bf16 %v318, %v318
      %v327 = vpack.c.bf16 %v319, %v319
      %v328 = vpack.c.bf16 %v320, %v320
      %v329 = vpack.c.bf16 %v321, %v321
      %v330 = vpack.c.bf16 %v322, %v322
      %v331 = vpack.c.bf16 %v323, %v323
      %v332 = vpack.c.bf16 %v324, %v324
      %v333 = vpack.c.bf16 %v325, %v325
      %334 = vst [vmem:[%s173] sm:$0xf] %v326
      %335 = vst [vmem:[%s173 + $0x4] sm:$0xf] %v327
      %336 = vst [vmem:[%s173 + $0x8] sm:$0xf] %v328
      %337 = vst [vmem:[%s173 + $0xc] sm:$0xf] %v329
      %338 = vst [vmem:[%s173 + $0x10] sm:$0xf] %v330
      %339 = vst [vmem:[%s173 + $0x14] sm:$0xf] %v331
      %340 = vst [vmem:[%s173 + $0x18] sm:$0xf] %v332
      %341 = vst [vmem:[%s173 + $0x1c] sm:$0xf] %v333
      %s342 = smul.u32 8, %s15
      %p343 = scmp.lt.s32.totalorder %s342, 15
      %s344 = scalar_select %p343, %s342, 15
      %s345 = smul.addr %s344, 4
      %s346 = scalar_lea.vmem %s3, %s345
      // Predicated region
      $region33: #{unet_innermost_forward.2} parent=31 // pred_check
        %p347 = pneg %p101
      $region34: #{unet_innermost_forward.2} parent=31 // pred_check_branch
        %349 = sbr.rel (%p347) target = $region36
      $region35: #{unet_innermost_forward.2} parent=31 // pred_region
        %s350 = smul.u32 8, %s15
      $region36: #{unet_innermost_forward.2} parent=31 // pred_fallthru
        _
    $region32: #{unet_innermost_forward.2} parent=5 // pred_fallthru
      _
    %p351 = scmp.le.s32.totalorder 2, %s10
    // Predicated region
    $region37: #{unet_innermost_forward.2} parent=5 // pred_check
      %p352 = pneg %p351
    $region38: #{unet_innermost_forward.2} parent=5 // pred_check_branch
      %354 = sbr.rel (%p352) target = $region40
    $region39: #{unet_innermost_forward.2} parent=5 // pred_region
      %s355 = ssub.s32 %s10, 2
      // Predicated region
      $region41: #{unet_innermost_forward.2} parent=39 // pred_check
        %p356 = pneg %p107
      $region42: #{unet_innermost_forward.2} parent=39 // pred_check_branch
        %358 = sbr.rel (%p356) target = $region44
      $region43: #{unet_innermost_forward.2} parent=39 // pred_region
        %s359 = smul.u32 8, %s16
        %p360 = scmp.lt.s32.totalorder %s359, 15
        %s361 = scalar_select %p360, %s359, 15
        %s362 = smul.addr %s361, 4
        %s363 = scalar_lea.vmem %s3, %s362
      $region44: #{unet_innermost_forward.2} parent=39 // pred_fallthru
        _
    $region40: #{unet_innermost_forward.2} parent=5 // pred_fallthru
      _
  $region6: #{unet_innermost_forward.2} parent=0 // loop_footer
    %s14 = sadd.s32 1, %s10
  $region7: #{unet_innermost_forward.2} parent=0 // loop_footer_branch
    %9 = sbr.rel target = $region3
  $region8: #{unet_innermost_forward.2} parent=0 // loop_exit
    _

// kernel: unet_innermost_forward.3
$region0: #{unet_innermost_forward.3}
  #allocation0 [shape = 'u32[]', space=smem, size = 0x4, offset = 0x4, fixed_abs, tag = 'smem constant byte address 0x4 - core index']
  #allocation1 [shape = 'u32[72,128]{1,0:T(1,128)}', space=vmem, size = 0x9000, scoped, tag = 'internal scratch']
  %s0 = inlined_call_operand.vmem [shape: bf16[4,86,128], index: 0, kind: input, shape index: {}]
  %s1 = inlined_call_operand.vmem [shape: bf16[16,128,128], index: 1, kind: input, shape index: {}]
  %s2 = inlined_call_operand.vmem [shape: f32[4,64,1], index: 2, kind: input, shape index: {}]
  %s3 = inlined_call_operand.vmem [shape: bf16[256,512], index: 3, kind: output, shape index: {0}]
  %s4 = inlined_call_operand.vmem [shape: f32[4,8,128], index: 4, kind: output, shape index: {1}]
  %5 = xla_tuple %s3, %s4
  %s6 = sld [smem:[#allocation0]]
  $region53: #{unet_innermost_forward.3} parent=0
    _
  %s8 = ssub.s32 1, %s6
  %s9 = scalar_select 0, %s8, %s6
  loop: start=0, step=1, limit=6
  $region2: #{unet_innermost_forward.3} parent=0 // loop_pre_header
    _
  $region3: #{unet_innermost_forward.3} parent=0 // loop_header
    %s11 = sphi 0, %s15
    %p12 = scmp.ge.s32.totalorder %s11, 6
    %s21 = sphi 0, %s23
    %s24 = sphi 0, %s21
    %s25 = sphi 0, %s24
    %s41 = sphi 0, %s25
    %s45 = sphi 0, %s45
    %s47 = sphi 0, %s45
    %s48 = sphi 0, %s47
    %s62 = sphi 0, %s48
    %s68 = sphi 0, %s70
    %s71 = sphi 0, %s68
    %s72 = sphi 0, %s71
    %s88 = sphi 0, %s72
    %s94 = sphi 0, %s96
    %s97 = sphi 0, %s94
    %s98 = sphi 0, %s97
    %s114 = sphi 0, %s98
    %s120 = sphi 0, %s122
    %s123 = sphi 0, %s120
    %s124 = sphi 0, %s123
    %s140 = sphi 0, %s124
  $region4: #{unet_innermost_forward.3} parent=0 // loop_header_branch
    %14 = sbr.rel (%p12) target = $region8
  $region5: #{unet_innermost_forward.3} parent=0 // loop_body
    %s16 = ssub.s32 %s11, 1
    %s17 = ssub.s32 %s11, 2
    %s18 = sadd.s32 %s11, 1
    %s19 = ssub.s32 %s11, %s18
    %p20 = scmp.eq.s32.totalorder %s19, 0
    %s22 = sadd.s32 %s21, 1
    %s23 = scalar_select %p20, %s21, %s22
    %p26 = pneg %p20
    %p27 = scmp.eq.s32.totalorder %s11, 3
    %p28 = por %p26, %p27
    %p29 = scmp.ne.s32.totalorder %s21, %s24
    %p30 = scmp.eq.s32.totalorder %s11, 0
    %p31 = por %p29, %p30
    %p32 = scmp.ne.s32.totalorder %s21, %s24
    %p33 = scmp.eq.s32.totalorder %s16, 3
    %p34 = por %p32, %p33
    %p35 = scmp.ne.s32.totalorder %s24, %s25
    %p36 = scmp.eq.s32.totalorder %s16, 0
    %p37 = por %p35, %p36
    %p38 = scmp.ne.s32.totalorder %s24, %s25
    %p39 = scmp.eq.s32.totalorder %s17, 3
    %p40 = por %p38, %p39
    %p42 = scmp.ne.s32.totalorder %s25, %s41
    %p43 = scmp.eq.s32.totalorder %s17, 0
    %p44 = por %p42, %p43
    %s46 = sadd.s32 %s45, 1
    %p49 = scmp.eq.s32.totalorder %s11, 3
    %p50 = scmp.ne.s32.totalorder %s45, %s47
    %p51 = scmp.eq.s32.totalorder %s11, 0
    %p52 = por %p50, %p51
    %p53 = scmp.ne.s32.totalorder %s45, %s47
    %p54 = scmp.eq.s32.totalorder %s16, 3
    %p55 = por %p53, %p54
    %p56 = scmp.ne.s32.totalorder %s47, %s48
    %p57 = scmp.eq.s32.totalorder %s16, 0
    %p58 = por %p56, %p57
    %p59 = scmp.ne.s32.totalorder %s47, %s48
    %p60 = scmp.eq.s32.totalorder %s17, 3
    %p61 = por %p59, %p60
    %p63 = scmp.ne.s32.totalorder %s48, %s62
    %p64 = scmp.eq.s32.totalorder %s17, 0
    %p65 = por %p63, %p64
    %s66 = ssub.s32 %s11, %s18
    %p67 = scmp.eq.s32.totalorder %s66, 0
    %s69 = sadd.s32 %s68, 1
    %s70 = scalar_select %p67, %s68, %s69
    %p73 = pneg %p67
    %p74 = scmp.eq.s32.totalorder %s11, 3
    %p75 = por %p73, %p74
    %p76 = scmp.ne.s32.totalorder %s68, %s71
    %p77 = scmp.eq.s32.totalorder %s11, 0
    %p78 = por %p76, %p77
    %p79 = scmp.ne.s32.totalorder %s68, %s71
    %p80 = scmp.eq.s32.totalorder %s16, 3
    %p81 = por %p79, %p80
    %p82 = scmp.ne.s32.totalorder %s71, %s72
    %p83 = scmp.eq.s32.totalorder %s16, 0
    %p84 = por %p82, %p83
    %p85 = scmp.ne.s32.totalorder %s71, %s72
    %p86 = scmp.eq.s32.totalorder %s17, 3
    %p87 = por %p85, %p86
    %p89 = scmp.ne.s32.totalorder %s72, %s88
    %p90 = scmp.eq.s32.totalorder %s17, 0
    %p91 = por %p89, %p90
    %s92 = ssub.s32 %s11, %s18
    %p93 = scmp.eq.s32.totalorder %s92, 0
    %s95 = sadd.s32 %s94, 1
    %s96 = scalar_select %p93, %s94, %s95
    %p99 = pneg %p93
    %p100 = scmp.eq.s32.totalorder %s11, 3
    %p101 = por %p99, %p100
    %p102 = scmp.ne.s32.totalorder %s94, %s97
    %p103 = scmp.eq.s32.totalorder %s11, 0
    %p104 = por %p102, %p103
    %p105 = scmp.ne.s32.totalorder %s94, %s97
    %p106 = scmp.eq.s32.totalorder %s16, 3
    %p107 = por %p105, %p106
    %p108 = scmp.ne.s32.totalorder %s97, %s98
    %p109 = scmp.eq.s32.totalorder %s16, 0
    %p110 = por %p108, %p109
    %p111 = scmp.ne.s32.totalorder %s97, %s98
    %p112 = scmp.eq.s32.totalorder %s17, 3
    %p113 = por %p111, %p112
    %p115 = scmp.ne.s32.totalorder %s98, %s114
    %p116 = scmp.eq.s32.totalorder %s17, 0
    %p117 = por %p115, %p116
    %s118 = ssub.s32 %s11, %s18
    %p119 = scmp.eq.s32.totalorder %s118, 0
    %s121 = sadd.s32 %s120, 1
    %s122 = scalar_select %p119, %s120, %s121
    %p125 = pneg %p119
    %p126 = scmp.eq.s32.totalorder %s11, 3
    %p127 = por %p125, %p126
    %p128 = scmp.ne.s32.totalorder %s120, %s123
    %p129 = scmp.eq.s32.totalorder %s11, 0
    %p130 = por %p128, %p129
    %p131 = scmp.ne.s32.totalorder %s120, %s123
    %p132 = scmp.eq.s32.totalorder %s16, 3
    %p133 = por %p131, %p132
    %p134 = scmp.ne.s32.totalorder %s123, %s124
    %p135 = scmp.eq.s32.totalorder %s16, 0
    %p136 = por %p134, %p135
    %p137 = scmp.ne.s32.totalorder %s123, %s124
    %p138 = scmp.eq.s32.totalorder %s17, 3
    %p139 = por %p137, %p138
    %p141 = scmp.ne.s32.totalorder %s124, %s140
    %p142 = scmp.eq.s32.totalorder %s17, 0
    %p143 = por %p141, %p142
    %p144 = scmp.le.s32.totalorder 1, %s11
    %p145 = scmp.lt.s32.totalorder %s11, 5
    %p146 = pnand %p144, %p145
    %p147 = pneg %p146
    // Predicated region
    $region9: #{unet_innermost_forward.3} parent=5 // pred_check
      _
    $region10: #{unet_innermost_forward.3} parent=5 // pred_check_branch
      %149 = sbr.rel (%p146) target = $region12
    $region11: #{unet_innermost_forward.3} parent=5 // pred_region
      %s150 = ssub.s32 %s11, 1
      // Predicated region
      $region13: #{unet_innermost_forward.3} parent=11 // pred_check
        %p151 = pneg %p58
      $region14: #{unet_innermost_forward.3} parent=11 // pred_check_branch
        %153 = sbr.rel (%p151) target = $region16
      $region15: #{unet_innermost_forward.3} parent=11 // pred_region
        _
      $region16: #{unet_innermost_forward.3} parent=11 // pred_fallthru
        _
    $region12: #{unet_innermost_forward.3} parent=5 // pred_fallthru
      _
    %p154 = scmp.lt.s32.totalorder %s11, 4
    // Predicated region
    $region17: #{unet_innermost_forward.3} parent=5 // pred_check
      %p155 = pneg %p154
    $region18: #{unet_innermost_forward.3} parent=5 // pred_check_branch
      %157 = sbr.rel (%p155) target = $region20
    $region19: #{unet_innermost_forward.3} parent=5 // pred_region
      // Predicated region
      $region21: #{unet_innermost_forward.3} parent=19 // pred_check
        %p158 = pneg %p31
      $region22: #{unet_innermost_forward.3} parent=19 // pred_check_branch
        %160 = sbr.rel (%p158) target = $region24
      $region23: #{unet_innermost_forward.3} parent=19 // pred_region
        %p161 = scmp.lt.s32.totalorder %s11, 3
        %s162 = scalar_select %p161, %s11, 3
        %s163 = smul.addr %s162, 11
        %s164 = smul.addr %s163, 4
        %s165 = scalar_lea.vmem %s0, %s164
      $region24: #{unet_innermost_forward.3} parent=19 // pred_fallthru
        _
      // Predicated region
      $region25: #{unet_innermost_forward.3} parent=19 // pred_check
        %p166 = pneg %p78
      $region26: #{unet_innermost_forward.3} parent=19 // pred_check_branch
        %168 = sbr.rel (%p166) target = $region28
      $region27: #{unet_innermost_forward.3} parent=19 // pred_region
        %p169 = scmp.lt.s32.totalorder %s11, 3
        %s170 = scalar_select %p169, %s11, 3
        %s171 = smul.addr %s170, 8
        %s172 = smul.addr %s171, 8
        %s173 = scalar_lea.vmem %s2, %s172
      $region28: #{unet_innermost_forward.3} parent=19 // pred_fallthru
        _
    $region20: #{unet_innermost_forward.3} parent=5 // pred_fallthru
      _
    %p174 = scmp.le.s32.totalorder 1, %s11
    %p175 = scmp.lt.s32.totalorder %s11, 5
    %p176 = pnand %p174, %p175
    %p177 = pneg %p176
    // Predicated region
    $region29: #{unet_innermost_forward.3} parent=5 // pred_check
      _
    $region30: #{unet_innermost_forward.3} parent=5 // pred_check_branch
      %179 = sbr.rel (%p176) target = $region32
    $region31: #{unet_innermost_forward.3} parent=5 // pred_region
      %s180 = ssub.s32 %s11, 1
      %p181 = scmp.lt.s32.totalorder %s16, 3
      %s182 = scalar_select %p181, %s16, 3
      %s183 = smul.addr %s182, 11
      %s184 = smul.addr %s183, 4
      %s185 = scalar_lea.vmem %s0, %s184
      %p186 = pneg %p37
      %p187 = pneg %p34
      %p188 = pneg %p58
      %p189 = pneg %p55
      %p190 = scmp.lt.s32.totalorder %s16, 3
      %s191 = scalar_select %p190, %s16, 3
      %s192 = smul.addr %s191, 8
      %s193 = smul.addr %s192, 8
      %s194 = scalar_lea.vmem %s2, %s193
      %p195 = pneg %p84
      %p196 = pneg %p81
      %p197 = pneg %p110
      %p198 = pneg %p107
      %s199 = smul.u32 8, %s16
      %p200 = scmp.lt.s32.totalorder %s199, 31
      %s201 = scalar_select %p200, %s199, 31
      %s202 = smul.addr %s201, 4
      %s203 = smul.addr %s202, 4
      %s204 = scalar_lea.vmem %s3, %s203
      %p205 = pneg %p136
      %p206 = pneg %p133
      %p207 = scmp.lt.s32.totalorder %s16, 3
      %s208 = scalar_select %p207, %s16, 3
      %s209 = smul.addr %s208, 8
      %s210 = scalar_lea.vmem %s4, %s209
      %p211 = scmp.lt.s32.totalorder %s16, 3
      %s212 = scalar_select %p211, %s16, 3
      %s213 = smul.addr %s212, 11
      %s214 = smul.addr %s213, 4
      %s215 = scalar_lea.vmem %s0, %s214
      %p216 = scmp.lt.s32.totalorder %s16, 3
      %s217 = scalar_select %p216, %s16, 3
      %s218 = smul.addr %s217, 8
      %s219 = smul.addr %s218, 8
      %s220 = scalar_lea.vmem %s2, %s219
      %s221 = smul.u32 8, %s16
      %p222 = scmp.lt.s32.totalorder %s221, 31
      %s223 = scalar_select %p222, %s221, 31
      %s224 = smul.addr %s223, 4
      %s225 = smul.addr %s224, 4
      %s226 = scalar_lea.vmem %s3, %s225
      %s227 = smul.u32 8, %s16
      %p228 = scmp.lt.s32.totalorder %s16, 3
      %s229 = scalar_select %p228, %s16, 3
      %s230 = smul.addr %s229, 8
      %s231 = scalar_lea.vmem %s4, %s230
      %v232 = vld [vmem:[%s220] sm:$0xff]
      %v233 = vld [vmem:[%s220 + $0x8] sm:$0xff]
      %v234 = vld [vmem:[%s220 + $0x10] sm:$0xff]
      %v235 = vld [vmem:[%s220 + $0x18] sm:$0xff]
      %v236 = vld [vmem:[%s220 + $0x20] sm:$0xff]
      %v237 = vld [vmem:[%s220 + $0x28] sm:$0xff]
      %v238 = vld [vmem:[%s220 + $0x30] sm:$0xff]
      %v239 = vld [vmem:[%s220 + $0x38] sm:$0xff]
      %v240 = vld [vmem:[%s215] sm:$0xf]
      %v241 = vld [vmem:[%s215 + $0x4] sm:$0xf]
      %v242 = vld [vmem:[%s215 + $0x8] sm:$0xf]
      %v243 = vld [vmem:[%s215 + $0xc] sm:$0xf]
      %v244 = vld [vmem:[%s215 + $0x10] sm:$0xf]
      %v245 = vld [vmem:[%s215 + $0x14] sm:$0xf]
      %v246 = vld [vmem:[%s215 + $0x18] sm:$0xf]
      %v247 = vld [vmem:[%s215 + $0x1c] sm:$0xf]
      %v248 = vld [vmem:[%s1] sm:$0xf]
      %v249 = vld [vmem:[%s1 + $0x4] sm:$0xf]
      %v250 = vld [vmem:[%s1 + $0x8] sm:$0xf]
      %v251 = vld [vmem:[%s1 + $0xc] sm:$0xf]
      %v252 = vld [vmem:[%s1 + $0x10] sm:$0xf]
      %v253 = vld [vmem:[%s1 + $0x14] sm:$0xf]
      %v254 = vld [vmem:[%s1 + $0x18] sm:$0xf]
      %v255 = vld [vmem:[%s1 + $0x1c] sm:$0xf]
      %v256 = vld [vmem:[%s1 + $0x20] sm:$0xf]
      %v257 = vld [vmem:[%s1 + $0x24] sm:$0xf]
      %v258 = vld [vmem:[%s1 + $0x28] sm:$0xf]
      %v259 = vld [vmem:[%s1 + $0x2c] sm:$0xf]
      %v260 = vld [vmem:[%s1 + $0x30] sm:$0xf]
      %v261 = vld [vmem:[%s1 + $0x34] sm:$0xf]
      %v262 = vld [vmem:[%s1 + $0x38] sm:$0xf]
      %v263 = vld [vmem:[%s1 + $0x3c] sm:$0xf]
      %v264 = vld [vmem:[%s215 + $0x20] sm:$0x1]
      %s265 = scalar_lea.vmem %s1, 64
      %v266 = vld [vmem:[%s265] sm:$0xf]
      %v267 = vld [vmem:[%s265 + $0x4] sm:$0xf]
      %v268 = vld [vmem:[%s265 + $0x8] sm:$0xf]
      %v269 = vld [vmem:[%s265 + $0xc] sm:$0xf]
      %v270 = vld [vmem:[%s265 + $0x10] sm:$0xf]
      %v271 = vld [vmem:[%s265 + $0x14] sm:$0xf]
      %v272 = vld [vmem:[%s265 + $0x18] sm:$0xf]
      %v273 = vld [vmem:[%s265 + $0x1c] sm:$0xf]
      %v274 = vld [vmem:[%s265 + $0x20] sm:$0xf]
      %v275 = vld [vmem:[%s265 + $0x24] sm:$0xf]
      %v276 = vld [vmem:[%s265 + $0x28] sm:$0xf]
      %v277 = vld [vmem:[%s265 + $0x2c] sm:$0xf]
      %v278 = vld [vmem:[%s265 + $0x30] sm:$0xf]
      %v279 = vld [vmem:[%s265 + $0x34] sm:$0xf]
      %v280 = vld [vmem:[%s265 + $0x38] sm:$0xf]
      %v281 = vld [vmem:[%s265 + $0x3c] sm:$0xf]
      %v291 = vunpack.c.l.b16 %v240
      %v292 = vunpack.c.l.b16 %v241
      %v293 = vunpack.c.l.b16 %v242
      %v294 = vunpack.c.l.b16 %v243
      %v295 = vunpack.c.l.b16 %v244
      %v296 = vunpack.c.l.b16 %v245
      %v297 = vunpack.c.l.b16 %v246
      %v298 = vunpack.c.l.b16 %v247
      %v299 = vunpack.c.l.b16 %v264
      %v300 = vpack.c.b16 %v292, %v291
      %v301 = vpack.c.b16 %v294, %v293
      %v302 = vpack.c.b16 %v296, %v295
      %v303 = vpack.c.b16 %v298, %v297
      %v304 = vpack.c.b16 %v299, %v299
      %vm305 = vsmask.f32 7424
      %v307 = vshrl.u32 %v300, 16
      %v309 = vshll.u32 %v300, 16
      %v311 = vrot.slane %v309, 1
      %v312 = vor.u32 %v307, %v311
      %v314 = vshll.u32 %v301, 16
      %v316 = vrot.slane %v314, 1
      %v317 = vsel %vm305, %v312, %v316
      %v318 = vshrl.u32 %v301, 16
      %v320 = vor.u32 %v318, %v316
      %v322 = vshll.u32 %v302, 16
      %v324 = vrot.slane %v322, 1
      %v325 = vsel %vm305, %v320, %v324
      %v326 = vshrl.u32 %v302, 16
      %v328 = vor.u32 %v326, %v324
      %v330 = vshll.u32 %v303, 16
      %v332 = vrot.slane %v330, 1
      %v333 = vsel %vm305, %v328, %v332
      %v334 = vshrl.u32 %v303, 16
      %v336 = vor.u32 %v334, %v332
      %v338 = vshll.u32 %v304, 16
      %v340 = vrot.slane %v338, 1
      %v341 = vsel %vm305, %v336, %v340
      %v362 = vunpack.c.l.b16 %v266
      %v363 = vunpack.c.l.b16 %v267
      %v364 = vunpack.c.l.b16 %v268
      %v365 = vunpack.c.l.b16 %v269
      %v366 = vunpack.c.l.b16 %v270
      %v367 = vunpack.c.l.b16 %v271
      %v368 = vunpack.c.l.b16 %v272
      %v369 = vunpack.c.l.b16 %v273
      %v370 = vunpack.c.l.b16 %v274
      %v371 = vunpack.c.l.b16 %v275
      %v372 = vunpack.c.l.b16 %v276
      %v373 = vunpack.c.l.b16 %v277
      %v374 = vunpack.c.l.b16 %v278
      %v375 = vunpack.c.l.b16 %v279
      %v376 = vunpack.c.l.b16 %v280
      %v377 = vunpack.c.l.b16 %v281
      %v378 = vpack.c.b16 %v363, %v362
      %v379 = vpack.c.b16 %v365, %v364
      %v380 = vpack.c.b16 %v367, %v366
      %v381 = vpack.c.b16 %v369, %v368
      %v382 = vpack.c.b16 %v371, %v370
      %v383 = vpack.c.b16 %v373, %v372
      %v384 = vpack.c.b16 %v375, %v374
      %v385 = vpack.c.b16 %v377, %v376
      %394 = vmatpush.bf16.msra.mxu0 %v385
      %395 = vmatpush.bf16.msra.mxu0 %v384
      %396 = vmatpush.bf16.msra.mxu0 %v383
      %397 = vmatpush.bf16.msra.mxu0 %v382
      %398 = vmatpush.bf16.msra.mxu0 %v381
      %399 = vmatpush.bf16.msra.mxu0 %v380
      %400 = vmatpush.bf16.msra.mxu0 %v379
      %401 = vmatpush.bf16.msra.mxu0 %v378
      %402 = vmatmul.bf16.gmra.mxu0 %v317
      %v403 = vpop.f32.mrf.mxu0
      %v404 = vadd.f32 0.0, %v403
      %v405 = vpop.f32.mrf.mxu0
      %v406 = vadd.f32 0.0, %v405
      %407 = vmatmul.bf16.gmra.mxu0 %v325
      %v408 = vpop.f32.mrf.mxu0
      %v409 = vadd.f32 0.0, %v408
      %v410 = vpop.f32.mrf.mxu0
      %v411 = vadd.f32 0.0, %v410
      %412 = vmatmul.bf16.gmra.mxu0 %v333
      %v413 = vpop.f32.mrf.mxu0
      %v414 = vadd.f32 0.0, %v413
      %v415 = vpop.f32.mrf.mxu0
      %v416 = vadd.f32 0.0, %v415
      %417 = vmatmul.bf16.gmra.mxu0 %v341
      %v418 = vpop.f32.mrf.mxu0
      %v419 = vadd.f32 0.0, %v418
      %v420 = vpop.f32.mrf.mxu0
      %v421 = vadd.f32 0.0, %v420
      %422 = vdwg.mxu0
      %v443 = vunpack.c.l.b16 %v248
      %v444 = vunpack.c.l.b16 %v249
      %v445 = vunpack.c.l.b16 %v250
      %v446 = vunpack.c.l.b16 %v251
      %v447 = vunpack.c.l.b16 %v252
      %v448 = vunpack.c.l.b16 %v253
      %v449 = vunpack.c.l.b16 %v254
      %v450 = vunpack.c.l.b16 %v255
      %v451 = vunpack.c.l.b16 %v256
      %v452 = vunpack.c.l.b16 %v257
      %v453 = vunpack.c.l.b16 %v258
      %v454 = vunpack.c.l.b16 %v259
      %v455 = vunpack.c.l.b16 %v260
      %v456 = vunpack.c.l.b16 %v261
      %v457 = vunpack.c.l.b16 %v262
      %v458 = vunpack.c.l.b16 %v263
      %v459 = vpack.c.b16 %v444, %v443
      %v460 = vpack.c.b16 %v446, %v445
      %v461 = vpack.c.b16 %v448, %v447
      %v462 = vpack.c.b16 %v450, %v449
      %v463 = vpack.c.b16 %v452, %v451
      %v464 = vpack.c.b16 %v454, %v453
      %v465 = vpack.c.b16 %v456, %v455
      %v466 = vpack.c.b16 %v458, %v457
      %475 = vmatpush.bf16.msra.mxu0 %v466
      %476 = vmatpush.bf16.msra.mxu0 %v465
      %477 = vmatpush.bf16.msra.mxu0 %v464
      %478 = vmatpush.bf16.msra.mxu0 %v463
      %479 = vmatpush.bf16.msra.mxu0 %v462
      %480 = vmatpush.bf16.msra.mxu0 %v461
      %481 = vmatpush.bf16.msra.mxu0 %v460
      %482 = vmatpush.bf16.msra.mxu0 %v459
      %483 = vmatmul.bf16.gmra.mxu0 %v300
      %v484 = vpop.f32.mrf.mxu0
      %v485 = vadd.f32 %v404, %v484
      %v486 = vpop.f32.mrf.mxu0
      %v487 = vadd.f32 %v406, %v486
      %488 = vmatmul.bf16.gmra.mxu0 %v301
      %v489 = vpop.f32.mrf.mxu0
      %v490 = vadd.f32 %v409, %v489
      %v491 = vpop.f32.mrf.mxu0
      %v492 = vadd.f32 %v411, %v491
      %493 = vmatmul.bf16.gmra.mxu0 %v302
      %v494 = vpop.f32.mrf.mxu0
      %v495 = vadd.f32 %v414, %v494
      %v496 = vpop.f32.mrf.mxu0
      %v497 = vadd.f32 %v416, %v496
      %498 = vmatmul.bf16.gmra.mxu0 %v303
      %v499 = vpop.f32.mrf.mxu0
      %v500 = vadd.f32 %v419, %v499
      %v501 = vpop.f32.mrf.mxu0
      %v502 = vadd.f32 %v421, %v501
      %503 = vdwg.mxu0
      %v504 = vld [vmem:[%s215 + $0x4] sm:$0xe]
      %v505 = vld [vmem:[%s215 + $0x8] sm:$0xf]
      %v506 = vld [vmem:[%s215 + $0xc] sm:$0xf]
      %v507 = vld [vmem:[%s215 + $0x10] sm:$0xf]
      %v508 = vld [vmem:[%s215 + $0x14] sm:$0xf]
      %v509 = vld [vmem:[%s215 + $0x18] sm:$0xf]
      %v510 = vld [vmem:[%s215 + $0x1c] sm:$0xf]
      %v511 = vld [vmem:[%s215 + $0x20] sm:$0xf]
      %v512 = vld [vmem:[%s215 + $0x24] sm:$0x1]
      %s513 = scalar_lea.vmem %s1, 128
      %v514 = vld [vmem:[%s513] sm:$0xf]
      %v515 = vld [vmem:[%s513 + $0x4] sm:$0xf]
      %v516 = vld [vmem:[%s513 + $0x8] sm:$0xf]
      %v517 = vld [vmem:[%s513 + $0xc] sm:$0xf]
      %v518 = vld [vmem:[%s513 + $0x10] sm:$0xf]
      %v519 = vld [vmem:[%s513 + $0x14] sm:$0xf]
      %v520 = vld [vmem:[%s513 + $0x18] sm:$0xf]
      %v521 = vld [vmem:[%s513 + $0x1c] sm:$0xf]
      %v522 = vld [vmem:[%s513 + $0x20] sm:$0xf]
      %v523 = vld [vmem:[%s513 + $0x24] sm:$0xf]
      %v524 = vld [vmem:[%s513 + $0x28] sm:$0xf]
      %v525 = vld [vmem:[%s513 + $0x2c] sm:$0xf]
      %v526 = vld [vmem:[%s513 + $0x30] sm:$0xf]
      %v527 = vld [vmem:[%s513 + $0x34] sm:$0xf]
      %v528 = vld [vmem:[%s513 + $0x38] sm:$0xf]
      %v529 = vld [vmem:[%s513 + $0x3c] sm:$0xf]
      %v539 = vunpack.c.l.b16 %v504
      %v540 = vunpack.c.l.b16 %v505
      %v541 = vunpack.c.l.b16 %v506
      %v542 = vunpack.c.l.b16 %v507
      %v543 = vunpack.c.l.b16 %v508
      %v544 = vunpack.c.l.b16 %v509
      %v545 = vunpack.c.l.b16 %v510
      %v546 = vunpack.c.l.b16 %v511
      %v547 = vunpack.c.l.b16 %v512
      %v548 = vpack.c.b16 %v540, %v539
      %v549 = vpack.c.b16 %v542, %v541
      %v550 = vpack.c.b16 %v544, %v543
      %v551 = vpack.c.b16 %v546, %v545
      %v552 = vpack.c.b16 %v547, %v547
      %vm553 = vcmask 1046528
      %v554 = vrot.slane %v548, 1
      %v555 = vrot.slane %v549, 1
      %v556 = vsel %vm553, %v554, %v555
      %v557 = vrot.slane %v550, 1
      %v558 = vsel %vm553, %v555, %v557
      %v559 = vrot.slane %v551, 1
      %v560 = vsel %vm553, %v557, %v559
      %v561 = vrot.slane %v552, 1
      %v562 = vsel %vm553, %v559, %v561
      %v583 = vunpack.c.l.b16 %v514
      %v584 = vunpack.c.l.b16 %v515
      %v585 = vunpack.c.l.b16 %v516
      %v586 = vunpack.c.l.b16 %v517
      %v587 = vunpack.c.l.b16 %v518
      %v588 = vunpack.c.l.b16 %v519
      %v589 = vunpack.c.l.b16 %v520
      %v590 = vunpack.c.l.b16 %v521
      %v591 = vunpack.c.l.b16 %v522
      %v592 = vunpack.c.l.b16 %v523
      %v593 = vunpack.c.l.b16 %v524
      %v594 = vunpack.c.l.b16 %v525
      %v595 = vunpack.c.l.b16 %v526
      %v596 = vunpack.c.l.b16 %v527
      %v597 = vunpack.c.l.b16 %v528
      %v598 = vunpack.c.l.b16 %v529
      %v599 = vpack.c.b16 %v584, %v583
      %v600 = vpack.c.b16 %v586, %v585
      %v601 = vpack.c.b16 %v588, %v587
      %v602 = vpack.c.b16 %v590, %v589
      %v603 = vpack.c.b16 %v592, %v591
      %v604 = vpack.c.b16 %v594, %v593
      %v605 = vpack.c.b16 %v596, %v595
      %v606 = vpack.c.b16 %v598, %v597
      %615 = vmatpush.bf16.msra.mxu0 %v606
      %616 = vmatpush.bf16.msra.mxu0 %v605
      %617 = vmatpush.bf16.msra.mxu0 %v604
      %618 = vmatpush.bf16.msra.mxu0 %v603
      %619 = vmatpush.bf16.msra.mxu0 %v602
      %620 = vmatpush.bf16.msra.mxu0 %v601
      %621 = vmatpush.bf16.msra.mxu0 %v600
      %622 = vmatpush.bf16.msra.mxu0 %v599
      %623 = vmatmul.bf16.gmra.mxu0 %v556
      %v624 = vpop.f32.mrf.mxu0
      %v625 = vadd.f32 0.0, %v624
      %v626 = vpop.f32.mrf.mxu0
      %v627 = vadd.f32 0.0, %v626
      %628 = vmatmul.bf16.gmra.mxu0 %v558
      %v629 = vpop.f32.mrf.mxu0
      %v630 = vadd.f32 0.0, %v629
      %v631 = vpop.f32.mrf.mxu0
      %v632 = vadd.f32 0.0, %v631
      %633 = vmatmul.bf16.gmra.mxu0 %v560
      %v634 = vpop.f32.mrf.mxu0
      %v635 = vadd.f32 0.0, %v634
      %v636 = vpop.f32.mrf.mxu0
      %v637 = vadd.f32 0.0, %v636
      %638 = vmatmul.bf16.gmra.mxu0 %v562
      %v639 = vpop.f32.mrf.mxu0
      %v640 = vadd.f32 0.0, %v639
      %v641 = vpop.f32.mrf.mxu0
      %v642 = vadd.f32 0.0, %v641
      %643 = vdwg.mxu0
      %v644 = vadd.f32 %v485, %v625
      %v645 = vadd.f32 %v487, %v627
      %v646 = vadd.f32 %v490, %v630
      %v647 = vadd.f32 %v492, %v632
      %v648 = vadd.f32 %v495, %v635
      %v649 = vadd.f32 %v497, %v637
      %v650 = vadd.f32 %v500, %v640
      %v651 = vadd.f32 %v502, %v642
      %v652 = vld [vmem:[%s215 + $0x24] sm:$0x3]
      %s653 = scalar_lea.vmem %s1, 192
      %v654 = vld [vmem:[%s653] sm:$0xf]
      %v655 = vld [vmem:[%s653 + $0x4] sm:$0xf]
      %v656 = vld [vmem:[%s653 + $0x8] sm:$0xf]
      %v657 = vld [vmem:[%s653 + $0xc] sm:$0xf]
      %v658 = vld [vmem:[%s653 + $0x10] sm:$0xf]
      %v659 = vld [vmem:[%s653 + $0x14] sm:$0xf]
      %v660 = vld [vmem:[%s653 + $0x18] sm:$0xf]
      %v661 = vld [vmem:[%s653 + $0x1c] sm:$0xf]
      %v662 = vld [vmem:[%s653 + $0x20] sm:$0xf]
      %v663 = vld [vmem:[%s653 + $0x24] sm:$0xf]
      %v664 = vld [vmem:[%s653 + $0x28] sm:$0xf]
      %v665 = vld [vmem:[%s653 + $0x2c] sm:$0xf]
      %v666 = vld [vmem:[%s653 + $0x30] sm:$0xf]
      %v667 = vld [vmem:[%s653 + $0x34] sm:$0xf]
      %v668 = vld [vmem:[%s653 + $0x38] sm:$0xf]
      %v669 = vld [vmem:[%s653 + $0x3c] sm:$0xf]
      %v671 = vunpack.c.l.b16 %v652
      %v672 = vpack.c.b16 %v671, %v671
      %vm673 = vsmask.f32 6400
      %v675 = vshrl.u32 %v548, 16
      %v677 = vrot.slane %v675, 1
      %v678 = vshll.u32 %v548, 16
      %v680 = vrot.slane %v678, 2
      %v681 = vor.u32 %v677, %v680
      %v683 = vshrl.u32 %v549, 16
      %v685 = vrot.slane %v683, 1
      %v686 = vshll.u32 %v549, 16
      %v688 = vrot.slane %v686, 2
      %v689 = vor.u32 %v685, %v688
      %v690 = vsel %vm673, %v681, %v689
      %v692 = vshrl.u32 %v550, 16
      %v694 = vrot.slane %v692, 1
      %v695 = vshll.u32 %v550, 16
      %v697 = vrot.slane %v695, 2
      %v698 = vor.u32 %v694, %v697
      %v699 = vsel %vm673, %v689, %v698
      %v701 = vshrl.u32 %v551, 16
      %v703 = vrot.slane %v701, 1
      %v704 = vshll.u32 %v551, 16
      %v706 = vrot.slane %v704, 2
      %v707 = vor.u32 %v703, %v706
      %v708 = vsel %vm673, %v698, %v707
      %v710 = vshrl.u32 %v672, 16
      %v712 = vrot.slane %v710, 1
      %v713 = vshll.u32 %v672, 16
      %v715 = vrot.slane %v713, 2
      %v716 = vor.u32 %v712, %v715
      %v717 = vsel %vm673, %v707, %v716
      %v738 = vunpack.c.l.b16 %v654
      %v739 = vunpack.c.l.b16 %v655
      %v740 = vunpack.c.l.b16 %v656
      %v741 = vunpack.c.l.b16 %v657
      %v742 = vunpack.c.l.b16 %v658
      %v743 = vunpack.c.l.b16 %v659
      %v744 = vunpack.c.l.b16 %v660
      %v745 = vunpack.c.l.b16 %v661
      %v746 = vunpack.c.l.b16 %v662
      %v747 = vunpack.c.l.b16 %v663
      %v748 = vunpack.c.l.b16 %v664
      %v749 = vunpack.c.l.b16 %v665
      %v750 = vunpack.c.l.b16 %v666
      %v751 = vunpack.c.l.b16 %v667
      %v752 = vunpack.c.l.b16 %v668
      %v753 = vunpack.c.l.b16 %v669
      %v754 = vpack.c.b16 %v739, %v738
      %v755 = vpack.c.b16 %v741, %v740
      %v756 = vpack.c.b16 %v743, %v742
      %v757 = vpack.c.b16 %v745, %v744
      %v758 = vpack.c.b16 %v747, %v746
      %v759 = vpack.c.b16 %v749, %v748
      %v760 = vpack.c.b16 %v751, %v750
      %v761 = vpack.c.b16 %v753, %v752
      %770 = vmatpush.bf16.msra.mxu0 %v761
      %771 = vmatpush.bf16.msra.mxu0 %v760
      %772 = vmatpush.bf16.msra.mxu0 %v759
      %773 = vmatpush.bf16.msra.mxu0 %v758
      %774 = vmatpush.bf16.msra.mxu0 %v757
      %775 = vmatpush.bf16.msra.mxu0 %v756
      %776 = vmatpush.bf16.msra.mxu0 %v755
      %777 = vmatpush.bf16.msra.mxu0 %v754
      %778 = vmatmul.bf16.gmra.mxu0 %v690
      %v779 = vpop.f32.mrf.mxu0
      %v780 = vadd.f32 0.0, %v779
      %v781 = vpop.f32.mrf.mxu0
      %v782 = vadd.f32 0.0, %v781
      %783 = vmatmul.bf16.gmra.mxu0 %v699
      %v784 = vpop.f32.mrf.mxu0
      %v785 = vadd.f32 0.0, %v784
      %v786 = vpop.f32.mrf.mxu0
      %v787 = vadd.f32 0.0, %v786
      %788 = vmatmul.bf16.gmra.mxu0 %v708
      %v789 = vpop.f32.mrf.mxu0
      %v790 = vadd.f32 0.0, %v789
      %v791 = vpop.f32.mrf.mxu0
      %v792 = vadd.f32 0.0, %v791
      %793 = vmatmul.bf16.gmra.mxu0 %v717
      %v794 = vpop.f32.mrf.mxu0
      %v795 = vadd.f32 0.0, %v794
      %v796 = vpop.f32.mrf.mxu0
      %v797 = vadd.f32 0.0, %v796
      %798 = vdwg.mxu0
      %v799 = vadd.f32 %v644, %v780
      %v800 = vadd.f32 %v645, %v782
      %v801 = vadd.f32 %v646, %v785
      %v802 = vadd.f32 %v647, %v787
      %v803 = vadd.f32 %v648, %v790
      %v804 = vadd.f32 %v649, %v792
      %v805 = vadd.f32 %v650, %v795
      %v806 = vadd.f32 %v651, %v797
      %v807 = vpack.c.bf16 %v799, %v799
      %v808 = vpack.c.bf16 %v800, %v800
      %v809 = vpack.c.bf16 %v801, %v801
      %v810 = vpack.c.bf16 %v802, %v802
      %v811 = vpack.c.bf16 %v803, %v803
      %v812 = vpack.c.bf16 %v804, %v804
      %v813 = vpack.c.bf16 %v805, %v805
      %v814 = vpack.c.bf16 %v806, %v806
      %815 = vst [vmem:[%s226] sm:$0xf] %v807
      %816 = vst [vmem:[%s226 + $0x10] sm:$0xf] %v808
      %817 = vst [vmem:[%s226 + $0x20] sm:$0xf] %v809
      %818 = vst [vmem:[%s226 + $0x30] sm:$0xf] %v810
      %819 = vst [vmem:[%s226 + $0x40] sm:$0xf] %v811
      %820 = vst [vmem:[%s226 + $0x50] sm:$0xf] %v812
      %821 = vst [vmem:[%s226 + $0x60] sm:$0xf] %v813
      %822 = vst [vmem:[%s226 + $0x70] sm:$0xf] %v814
      %824 = vset.pattern.permute.xlu0 0
      %825 = vperm.xlu0 %824, %v232
      %v826 = vpop.permute.xlu0 %825
      %829 = vset.pattern.permute.xlu0 0
      %830 = vperm.xlu0 %829, %v233
      %v831 = vpop.permute.xlu0 %830
      %834 = vset.pattern.permute.xlu0 0
      %835 = vperm.xlu0 %834, %v234
      %v836 = vpop.permute.xlu0 %835
      %839 = vset.pattern.permute.xlu0 0
      %840 = vperm.xlu0 %839, %v235
      %v841 = vpop.permute.xlu0 %840
      %844 = vset.pattern.permute.xlu0 0
      %845 = vperm.xlu0 %844, %v236
      %v846 = vpop.permute.xlu0 %845
      %849 = vset.pattern.permute.xlu0 0
      %850 = vperm.xlu0 %849, %v237
      %v851 = vpop.permute.xlu0 %850
      %854 = vset.pattern.permute.xlu0 0
      %855 = vperm.xlu0 %854, %v238
      %v856 = vpop.permute.xlu0 %855
      %859 = vset.pattern.permute.xlu0 0
      %860 = vperm.xlu0 %859, %v239
      %v861 = vpop.permute.xlu0 %860
      %v863 = vmul.f32 %v799, %v826
      %v864 = vmul.f32 %v800, %v831
      %v865 = vmul.f32 %v801, %v836
      %v866 = vmul.f32 %v802, %v841
      %v867 = vmul.f32 %v803, %v846
      %v868 = vmul.f32 %v804, %v851
      %v869 = vmul.f32 %v805, %v856
      %v870 = vmul.f32 %v806, %v861
      %v871 = vadd.f32 %v863, %v864
      %v872 = vadd.f32 %v871, %v865
      %v873 = vadd.f32 %v872, %v866
      %v874 = vadd.f32 %v873, %v867
      %v875 = vadd.f32 %v874, %v868
      %v876 = vadd.f32 %v875, %v869
      %v877 = vadd.f32 %v876, %v870
      %v878 = vrot.slane %v877, 4
      %v879 = vadd.f32 %v877, %v878
      %v880 = vrot.slane %v879, 2
      %v881 = vadd.f32 %v879, %v880
      %v882 = vrot.slane %v881, 1
      %v883 = vadd.f32 %v881, %v882
      %v884 = vadd.f32 %v883, 0.0
      %v885 = vmul.f32 %v799, %v863
      %v886 = vmul.f32 %v800, %v864
      %v887 = vmul.f32 %v801, %v865
      %v888 = vmul.f32 %v802, %v866
      %v889 = vmul.f32 %v803, %v867
      %v890 = vmul.f32 %v804, %v868
      %v891 = vmul.f32 %v805, %v869
      %v892 = vmul.f32 %v806, %v870
      %v893 = vadd.f32 %v885, %v886
      %v894 = vadd.f32 %v893, %v887
      %v895 = vadd.f32 %v894, %v888
      %v896 = vadd.f32 %v895, %v889
      %v897 = vadd.f32 %v896, %v890
      %v898 = vadd.f32 %v897, %v891
      %v899 = vadd.f32 %v898, %v892
      %v900 = vrot.slane %v899, 4
      %v901 = vadd.f32 %v899, %v900
      %v902 = vrot.slane %v901, 2
      %v903 = vadd.f32 %v901, %v902
      %v904 = vrot.slane %v903, 1
      %v905 = vadd.f32 %v903, %v904
      %v906 = vadd.f32 %v905, 0.0
      %v907 = vld [vmem:[%s215] sm:$0xf]
      %v908 = vld [vmem:[%s215 + $0x4] sm:$0xf]
      %v909 = vld [vmem:[%s215 + $0x8] sm:$0xf]
      %v910 = vld [vmem:[%s215 + $0xc] sm:$0xf]
      %v911 = vld [vmem:[%s215 + $0x10] sm:$0xf]
      %v912 = vld [vmem:[%s215 + $0x14] sm:$0xf]
      %v913 = vld [vmem:[%s215 + $0x18] sm:$0xf]
      %v914 = vld [vmem:[%s215 + $0x1c] sm:$0xf]
      %v915 = vld [vmem:[%s215 + $0x20] sm:$0x1]
      %s916 = scalar_lea.vmem %s1, 256
      %v917 = vld [vmem:[%s916] sm:$0xf]
      %v918 = vld [vmem:[%s916 + $0x4] sm:$0xf]
      %v919 = vld [vmem:[%s916 + $0x8] sm:$0xf]
      %v920 = vld [vmem:[%s916 + $0xc] sm:$0xf]
      %v921 = vld [vmem:[%s916 + $0x10] sm:$0xf]
      %v922 = vld [vmem:[%s916 + $0x14] sm:$0xf]
      %v923 = vld [vmem:[%s916 + $0x18] sm:$0xf]
      %v924 = vld [vmem:[%s916 + $0x1c] sm:$0xf]
      %v925 = vld [vmem:[%s916 + $0x20] sm:$0xf]
      %v926 = vld [vmem:[%s916 + $0x24] sm:$0xf]
      %v927 = vld [vmem:[%s916 + $0x28] sm:$0xf]
      %v928 = vld [vmem:[%s916 + $0x2c] sm:$0xf]
      %v929 = vld [vmem:[%s916 + $0x30] sm:$0xf]
      %v930 = vld [vmem:[%s916 + $0x34] sm:$0xf]
      %v931 = vld [vmem:[%s916 + $0x38] sm:$0xf]
      %v932 = vld [vmem:[%s916 + $0x3c] sm:$0xf]
      %v933 = vld [vmem:[%s215] sm:$0xe]
      %s934 = scalar_lea.vmem %s1, 320
      %v935 = vld [vmem:[%s934] sm:$0xf]
      %v936 = vld [vmem:[%s934 + $0x4] sm:$0xf]
      %v937 = vld [vmem:[%s934 + $0x8] sm:$0xf]
      %v938 = vld [vmem:[%s934 + $0xc] sm:$0xf]
      %v939 = vld [vmem:[%s934 + $0x10] sm:$0xf]
      %v940 = vld [vmem:[%s934 + $0x14] sm:$0xf]
      %v941 = vld [vmem:[%s934 + $0x18] sm:$0xf]
      %v942 = vld [vmem:[%s934 + $0x1c] sm:$0xf]
      %v943 = vld [vmem:[%s934 + $0x20] sm:$0xf]
      %v944 = vld [vmem:[%s934 + $0x24] sm:$0xf]
      %v945 = vld [vmem:[%s934 + $0x28] sm:$0xf]
      %v946 = vld [vmem:[%s934 + $0x2c] sm:$0xf]
      %v947 = vld [vmem:[%s934 + $0x30] sm:$0xf]
      %v948 = vld [vmem:[%s934 + $0x34] sm:$0xf]
      %v949 = vld [vmem:[%s934 + $0x38] sm:$0xf]
      %v950 = vld [vmem:[%s934 + $0x3c] sm:$0xf]
      %v960 = vunpack.c.l.b16 %v933
      %v961 = vunpack.c.l.b16 %v908
      %v962 = vunpack.c.l.b16 %v909
      %v963 = vunpack.c.l.b16 %v910
      %v964 = vunpack.c.l.b16 %v911
      %v965 = vunpack.c.l.b16 %v912
      %v966 = vunpack.c.l.b16 %v913
      %v967 = vunpack.c.l.b16 %v914
      %v968 = vunpack.c.l.b16 %v915
      %v969 = vpack.c.b16 %v961, %v960
      %v970 = vpack.c.b16 %v963, %v962
      %v971 = vpack.c.b16 %v965, %v964
      %v972 = vpack.c.b16 %v967, %v966
      %v973 = vpack.c.b16 %v968, %v968
      %v974 = vrot.slane %v969, 1
      %v975 = vrot.slane %v970, 1
      %v976 = vsel %vm553, %v974, %v975
      %v977 = vrot.slane %v971, 1
      %v978 = vsel %vm553, %v975, %v977
      %v979 = vrot.slane %v972, 1
      %v980 = vsel %vm553, %v977, %v979
      %v981 = vrot.slane %v973, 1
      %v982 = vsel %vm553, %v979, %v981
      %v1003 = vunpack.c.l.b16 %v935
      %v1004 = vunpack.c.l.b16 %v936
      %v1005 = vunpack.c.l.b16 %v937
      %v1006 = vunpack.c.l.b16 %v938
      %v1007 = vunpack.c.l.b16 %v939
      %v1008 = vunpack.c.l.b16 %v940
      %v1009 = vunpack.c.l.b16 %v941
      %v1010 = vunpack.c.l.b16 %v942
      %v1011 = vunpack.c.l.b16 %v943
      %v1012 = vunpack.c.l.b16 %v944
      %v1013 = vunpack.c.l.b16 %v945
      %v1014 = vunpack.c.l.b16 %v946
      %v1015 = vunpack.c.l.b16 %v947
      %v1016 = vunpack.c.l.b16 %v948
      %v1017 = vunpack.c.l.b16 %v949
      %v1018 = vunpack.c.l.b16 %v950
      %v1019 = vpack.c.b16 %v1004, %v1003
      %v1020 = vpack.c.b16 %v1006, %v1005
      %v1021 = vpack.c.b16 %v1008, %v1007
      %v1022 = vpack.c.b16 %v1010, %v1009
      %v1023 = vpack.c.b16 %v1012, %v1011
      %v1024 = vpack.c.b16 %v1014, %v1013
      %v1025 = vpack.c.b16 %v1016, %v1015
      %v1026 = vpack.c.b16 %v1018, %v1017
      %1035 = vmatpush.bf16.msra.mxu0 %v1026
      %1036 = vmatpush.bf16.msra.mxu0 %v1025
      %1037 = vmatpush.bf16.msra.mxu0 %v1024
      %1038 = vmatpush.bf16.msra.mxu0 %v1023
      %1039 = vmatpush.bf16.msra.mxu0 %v1022
      %1040 = vmatpush.bf16.msra.mxu0 %v1021
      %1041 = vmatpush.bf16.msra.mxu0 %v1020
      %1042 = vmatpush.bf16.msra.mxu0 %v1019
      %1043 = vmatmul.bf16.gmra.mxu0 %v976
      %v1044 = vpop.f32.mrf.mxu0
      %v1045 = vadd.f32 0.0, %v1044
      %v1046 = vpop.f32.mrf.mxu0
      %v1047 = vadd.f32 0.0, %v1046
      %1048 = vmatmul.bf16.gmra.mxu0 %v978
      %v1049 = vpop.f32.mrf.mxu0
      %v1050 = vadd.f32 0.0, %v1049
      %v1051 = vpop.f32.mrf.mxu0
      %v1052 = vadd.f32 0.0, %v1051
      %1053 = vmatmul.bf16.gmra.mxu0 %v980
      %v1054 = vpop.f32.mrf.mxu0
      %v1055 = vadd.f32 0.0, %v1054
      %v1056 = vpop.f32.mrf.mxu0
      %v1057 = vadd.f32 0.0, %v1056
      %1058 = vmatmul.bf16.gmra.mxu0 %v982
      %v1059 = vpop.f32.mrf.mxu0
      %v1060 = vadd.f32 0.0, %v1059
      %v1061 = vpop.f32.mrf.mxu0
      %v1062 = vadd.f32 0.0, %v1061
      %1063 = vdwg.mxu0
      %v1065 = vunpack.c.l.b16 %v907
      %v1066 = vpack.c.b16 %v961, %v1065
      %v1068 = vshrl.u32 %v1066, 16
      %v1070 = vshll.u32 %v1066, 16
      %v1072 = vrot.slane %v1070, 1
      %v1073 = vor.u32 %v1068, %v1072
      %v1075 = vshll.u32 %v970, 16
      %v1077 = vrot.slane %v1075, 1
      %v1078 = vsel %vm305, %v1073, %v1077
      %v1079 = vshrl.u32 %v970, 16
      %v1081 = vor.u32 %v1079, %v1077
      %v1083 = vshll.u32 %v971, 16
      %v1085 = vrot.slane %v1083, 1
      %v1086 = vsel %vm305, %v1081, %v1085
      %v1087 = vshrl.u32 %v971, 16
      %v1089 = vor.u32 %v1087, %v1085
      %v1091 = vshll.u32 %v972, 16
      %v1093 = vrot.slane %v1091, 1
      %v1094 = vsel %vm305, %v1089, %v1093
      %v1095 = vshrl.u32 %v972, 16
      %v1097 = vor.u32 %v1095, %v1093
      %v1099 = vshll.u32 %v973, 16
      %v1101 = vrot.slane %v1099, 1
      %v1102 = vsel %vm305, %v1097, %v1101
      %v1123 = vunpack.c.l.b16 %v917
      %v1124 = vunpack.c.l.b16 %v918
      %v1125 = vunpack.c.l.b16 %v919
      %v1126 = vunpack.c.l.b16 %v920
      %v1127 = vunpack.c.l.b16 %v921
      %v1128 = vunpack.c.l.b16 %v922
      %v1129 = vunpack.c.l.b16 %v923
      %v1130 = vunpack.c.l.b16 %v924
      %v1131 = vunpack.c.l.b16 %v925
      %v1132 = vunpack.c.l.b16 %v926
      %v1133 = vunpack.c.l.b16 %v927
      %v1134 = vunpack.c.l.b16 %v928
      %v1135 = vunpack.c.l.b16 %v929
      %v1136 = vunpack.c.l.b16 %v930
      %v1137 = vunpack.c.l.b16 %v931
      %v1138 = vunpack.c.l.b16 %v932
      %v1139 = vpack.c.b16 %v1124, %v1123
      %v1140 = vpack.c.b16 %v1126, %v1125
      %v1141 = vpack.c.b16 %v1128, %v1127
      %v1142 = vpack.c.b16 %v1130, %v1129
      %v1143 = vpack.c.b16 %v1132, %v1131
      %v1144 = vpack.c.b16 %v1134, %v1133
      %v1145 = vpack.c.b16 %v1136, %v1135
      %v1146 = vpack.c.b16 %v1138, %v1137
      %1155 = vmatpush.bf16.msra.mxu0 %v1146
      %1156 = vmatpush.bf16.msra.mxu0 %v1145
      %1157 = vmatpush.bf16.msra.mxu0 %v1144
      %1158 = vmatpush.bf16.msra.mxu0 %v1143
      %1159 = vmatpush.bf16.msra.mxu0 %v1142
      %1160 = vmatpush.bf16.msra.mxu0 %v1141
      %1161 = vmatpush.bf16.msra.mxu0 %v1140
      %1162 = vmatpush.bf16.msra.mxu0 %v1139
      %1163 = vmatmul.bf16.gmra.mxu0 %v1078
      %v1164 = vpop.f32.mrf.mxu0
      %v1165 = vadd.f32 %v1045, %v1164
      %v1166 = vpop.f32.mrf.mxu0
      %v1167 = vadd.f32 %v1047, %v1166
      %1168 = vmatmul.bf16.gmra.mxu0 %v1086
      %v1169 = vpop.f32.mrf.mxu0
      %v1170 = vadd.f32 %v1050, %v1169
      %v1171 = vpop.f32.mrf.mxu0
      %v1172 = vadd.f32 %v1052, %v1171
      %1173 = vmatmul.bf16.gmra.mxu0 %v1094
      %v1174 = vpop.f32.mrf.mxu0
      %v1175 = vadd.f32 %v1055, %v1174
      %v1176 = vpop.f32.mrf.mxu0
      %v1177 = vadd.f32 %v1057, %v1176
      %1178 = vmatmul.bf16.gmra.mxu0 %v1102
      %v1179 = vpop.f32.mrf.mxu0
      %v1180 = vadd.f32 %v1060, %v1179
      %v1181 = vpop.f32.mrf.mxu0
      %v1182 = vadd.f32 %v1062, %v1181
      %1183 = vdwg.mxu0
      %v1184 = vld [vmem:[%s215 + $0x4] sm:$0xe]
      %v1185 = vld [vmem:[%s215 + $0x8] sm:$0xf]
      %v1186 = vld [vmem:[%s215 + $0xc] sm:$0xf]
      %v1187 = vld [vmem:[%s215 + $0x10] sm:$0xf]
      %v1188 = vld [vmem:[%s215 + $0x14] sm:$0xf]
      %v1189 = vld [vmem:[%s215 + $0x18] sm:$0xf]
      %v1190 = vld [vmem:[%s215 + $0x1c] sm:$0xf]
      %v1191 = vld [vmem:[%s215 + $0x20] sm:$0xf]
      %v1192 = vld [vmem:[%s215 + $0x24] sm:$0x3]
      %s1193 = scalar_lea.vmem %s1, 384
      %v1194 = vld [vmem:[%s1193] sm:$0xf]
      %v1195 = vld [vmem:[%s1193 + $0x4] sm:$0xf]
      %v1196 = vld [vmem:[%s1193 + $0x8] sm:$0xf]
      %v1197 = vld [vmem:[%s1193 + $0xc] sm:$0xf]
      %v1198 = vld [vmem:[%s1193 + $0x10] sm:$0xf]
      %v1199 = vld [vmem:[%s1193 + $0x14] sm:$0xf]
      %v1200 = vld [vmem:[%s1193 + $0x18] sm:$0xf]
      %v1201 = vld [vmem:[%s1193 + $0x1c] sm:$0xf]
      %v1202 = vld [vmem:[%s1193 + $0x20] sm:$0xf]
      %v1203 = vld [vmem:[%s1193 + $0x24] sm:$0xf]
      %v1204 = vld [vmem:[%s1193 + $0x28] sm:$0xf]
      %v1205 = vld [vmem:[%s1193 + $0x2c] sm:$0xf]
      %v1206 = vld [vmem:[%s1193 + $0x30] sm:$0xf]
      %v1207 = vld [vmem:[%s1193 + $0x34] sm:$0xf]
      %v1208 = vld [vmem:[%s1193 + $0x38] sm:$0xf]
      %v1209 = vld [vmem:[%s1193 + $0x3c] sm:$0xf]
      %v1219 = vunpack.c.l.b16 %v1184
      %v1220 = vunpack.c.l.b16 %v1185
      %v1221 = vunpack.c.l.b16 %v1186
      %v1222 = vunpack.c.l.b16 %v1187
      %v1223 = vunpack.c.l.b16 %v1188
      %v1224 = vunpack.c.l.b16 %v1189
      %v1225 = vunpack.c.l.b16 %v1190
      %v1226 = vunpack.c.l.b16 %v1191
      %v1227 = vunpack.c.l.b16 %v1192
      %v1228 = vpack.c.b16 %v1220, %v1219
      %v1229 = vpack.c.b16 %v1222, %v1221
      %v1230 = vpack.c.b16 %v1224, %v1223
      %v1231 = vpack.c.b16 %v1226, %v1225
      %v1232 = vpack.c.b16 %v1227, %v1227
      %v1234 = vshrl.u32 %v1228, 16
      %v1236 = vrot.slane %v1234, 1
      %v1237 = vshll.u32 %v1228, 16
      %v1239 = vrot.slane %v1237, 2
      %v1240 = vor.u32 %v1236, %v1239
      %v1242 = vshrl.u32 %v1229, 16
      %v1244 = vrot.slane %v1242, 1
      %v1245 = vshll.u32 %v1229, 16
      %v1247 = vrot.slane %v1245, 2
      %v1248 = vor.u32 %v1244, %v1247
      %v1249 = vsel %vm673, %v1240, %v1248
      %v1251 = vshrl.u32 %v1230, 16
      %v1253 = vrot.slane %v1251, 1
      %v1254 = vshll.u32 %v1230, 16
      %v1256 = vrot.slane %v1254, 2
      %v1257 = vor.u32 %v1253, %v1256
      %v1258 = vsel %vm673, %v1248, %v1257
      %v1260 = vshrl.u32 %v1231, 16
      %v1262 = vrot.slane %v1260, 1
      %v1263 = vshll.u32 %v1231, 16
      %v1265 = vrot.slane %v1263, 2
      %v1266 = vor.u32 %v1262, %v1265
      %v1267 = vsel %vm673, %v1257, %v1266
      %v1269 = vshrl.u32 %v1232, 16
      %v1271 = vrot.slane %v1269, 1
      %v1272 = vshll.u32 %v1232, 16
      %v1274 = vrot.slane %v1272, 2
      %v1275 = vor.u32 %v1271, %v1274
      %v1276 = vsel %vm673, %v1266, %v1275
      %v1297 = vunpack.c.l.b16 %v1194
      %v1298 = vunpack.c.l.b16 %v1195
      %v1299 = vunpack.c.l.b16 %v1196
      %v1300 = vunpack.c.l.b16 %v1197
      %v1301 = vunpack.c.l.b16 %v1198
      %v1302 = vunpack.c.l.b16 %v1199
      %v1303 = vunpack.c.l.b16 %v1200
      %v1304 = vunpack.c.l.b16 %v1201
      %v1305 = vunpack.c.l.b16 %v1202
      %v1306 = vunpack.c.l.b16 %v1203
      %v1307 = vunpack.c.l.b16 %v1204
      %v1308 = vunpack.c.l.b16 %v1205
      %v1309 = vunpack.c.l.b16 %v1206
      %v1310 = vunpack.c.l.b16 %v1207
      %v1311 = vunpack.c.l.b16 %v1208
      %v1312 = vunpack.c.l.b16 %v1209
      %v1313 = vpack.c.b16 %v1298, %v1297
      %v1314 = vpack.c.b16 %v1300, %v1299
      %v1315 = vpack.c.b16 %v1302, %v1301
      %v1316 = vpack.c.b16 %v1304, %v1303
      %v1317 = vpack.c.b16 %v1306, %v1305
      %v1318 = vpack.c.b16 %v1308, %v1307
      %v1319 = vpack.c.b16 %v1310, %v1309
      %v1320 = vpack.c.b16 %v1312, %v1311
      %1329 = vmatpush.bf16.msra.mxu0 %v1320
      %1330 = vmatpush.bf16.msra.mxu0 %v1319
      %1331 = vmatpush.bf16.msra.mxu0 %v1318
      %1332 = vmatpush.bf16.msra.mxu0 %v1317
      %1333 = vmatpush.bf16.msra.mxu0 %v1316
      %1334 = vmatpush.bf16.msra.mxu0 %v1315
      %1335 = vmatpush.bf16.msra.mxu0 %v1314
      %1336 = vmatpush.bf16.msra.mxu0 %v1313
      %1337 = vmatmul.bf16.gmra.mxu0 %v1249
      %v1338 = vpop.f32.mrf.mxu0
      %v1339 = vadd.f32 0.0, %v1338
      %v1340 = vpop.f32.mrf.mxu0
      %v1341 = vadd.f32 0.0, %v1340
      %1342 = vmatmul.bf16.gmra.mxu0 %v1258
      %v1343 = vpop.f32.mrf.mxu0
      %v1344 = vadd.f32 0.0, %v1343
      %v1345 = vpop.f32.mrf.mxu0
      %v1346 = vadd.f32 0.0, %v1345
      %1347 = vmatmul.bf16.gmra.mxu0 %v1267
      %v1348 = vpop.f32.mrf.mxu0
      %v1349 = vadd.f32 0.0, %v1348
      %v1350 = vpop.f32.mrf.mxu0
      %v1351 = vadd.f32 0.0, %v1350
      %1352 = vmatmul.bf16.gmra.mxu0 %v1276
      %v1353 = vpop.f32.mrf.mxu0
      %v1354 = vadd.f32 0.0, %v1353
      %v1355 = vpop.f32.mrf.mxu0
      %v1356 = vadd.f32 0.0, %v1355
      %1357 = vdwg.mxu0
      %v1358 = vadd.f32 %v1165, %v1339
      %v1359 = vadd.f32 %v1167, %v1341
      %v1360 = vadd.f32 %v1170, %v1344
      %v1361 = vadd.f32 %v1172, %v1346
      %v1362 = vadd.f32 %v1175, %v1349
      %v1363 = vadd.f32 %v1177, %v1351
      %v1364 = vadd.f32 %v1180, %v1354
      %v1365 = vadd.f32 %v1182, %v1356
      %v1366 = vld [vmem:[%s215 + $0x4] sm:$0xc]
      %s1367 = scalar_lea.vmem %s1, 448
      %v1368 = vld [vmem:[%s1367] sm:$0xf]
      %v1369 = vld [vmem:[%s1367 + $0x4] sm:$0xf]
      %v1370 = vld [vmem:[%s1367 + $0x8] sm:$0xf]
      %v1371 = vld [vmem:[%s1367 + $0xc] sm:$0xf]
      %v1372 = vld [vmem:[%s1367 + $0x10] sm:$0xf]
      %v1373 = vld [vmem:[%s1367 + $0x14] sm:$0xf]
      %v1374 = vld [vmem:[%s1367 + $0x18] sm:$0xf]
      %v1375 = vld [vmem:[%s1367 + $0x1c] sm:$0xf]
      %v1376 = vld [vmem:[%s1367 + $0x20] sm:$0xf]
      %v1377 = vld [vmem:[%s1367 + $0x24] sm:$0xf]
      %v1378 = vld [vmem:[%s1367 + $0x28] sm:$0xf]
      %v1379 = vld [vmem:[%s1367 + $0x2c] sm:$0xf]
      %v1380 = vld [vmem:[%s1367 + $0x30] sm:$0xf]
      %v1381 = vld [vmem:[%s1367 + $0x34] sm:$0xf]
      %v1382 = vld [vmem:[%s1367 + $0x38] sm:$0xf]
      %v1383 = vld [vmem:[%s1367 + $0x3c] sm:$0xf]
      %v1385 = vunpack.c.l.b16 %v1366
      %v1386 = vpack.c.b16 %v1220, %v1385
      %vm1387 = vcmask 1045504
      %v1388 = vrot.slane %v1386, 2
      %v1389 = vrot.slane %v1229, 2
      %v1390 = vsel %vm1387, %v1388, %v1389
      %v1391 = vrot.slane %v1230, 2
      %v1392 = vsel %vm1387, %v1389, %v1391
      %v1393 = vrot.slane %v1231, 2
      %v1394 = vsel %vm1387, %v1391, %v1393
      %v1395 = vrot.slane %v1232, 2
      %v1396 = vsel %vm1387, %v1393, %v1395
      %v1417 = vunpack.c.l.b16 %v1368
      %v1418 = vunpack.c.l.b16 %v1369
      %v1419 = vunpack.c.l.b16 %v1370
      %v1420 = vunpack.c.l.b16 %v1371
      %v1421 = vunpack.c.l.b16 %v1372
      %v1422 = vunpack.c.l.b16 %v1373
      %v1423 = vunpack.c.l.b16 %v1374
      %v1424 = vunpack.c.l.b16 %v1375
      %v1425 = vunpack.c.l.b16 %v1376
      %v1426 = vunpack.c.l.b16 %v1377
      %v1427 = vunpack.c.l.b16 %v1378
      %v1428 = vunpack.c.l.b16 %v1379
      %v1429 = vunpack.c.l.b16 %v1380
      %v1430 = vunpack.c.l.b16 %v1381
      %v1431 = vunpack.c.l.b16 %v1382
      %v1432 = vunpack.c.l.b16 %v1383
      %v1433 = vpack.c.b16 %v1418, %v1417
      %v1434 = vpack.c.b16 %v1420, %v1419
      %v1435 = vpack.c.b16 %v1422, %v1421
      %v1436 = vpack.c.b16 %v1424, %v1423
      %v1437 = vpack.c.b16 %v1426, %v1425
      %v1438 = vpack.c.b16 %v1428, %v1427
      %v1439 = vpack.c.b16 %v1430, %v1429
      %v1440 = vpack.c.b16 %v1432, %v1431
      %1449 = vmatpush.bf16.msra.mxu0 %v1440
      %1450 = vmatpush.bf16.msra.mxu0 %v1439
      %1451 = vmatpush.bf16.msra.mxu0 %v1438
      %1452 = vmatpush.bf16.msra.mxu0 %v1437
      %1453 = vmatpush.bf16.msra.mxu0 %v1436
      %1454 = vmatpush.bf16.msra.mxu0 %v1435
      %1455 = vmatpush.bf16.msra.mxu0 %v1434
      %1456 = vmatpush.bf16.msra.mxu0 %v1433
      %1457 = vmatmul.bf16.gmra.mxu0 %v1390
      %v1458 = vpop.f32.mrf.mxu0
      %v1459 = vadd.f32 0.0, %v1458
      %v1460 = vpop.f32.mrf.mxu0
      %v1461 = vadd.f32 0.0, %v1460
      %1462 = vmatmul.bf16.gmra.mxu0 %v1392
      %v1463 = vpop.f32.mrf.mxu0
      %v1464 = vadd.f32 0.0, %v1463
      %v1465 = vpop.f32.mrf.mxu0
      %v1466 = vadd.f32 0.0, %v1465
      %1467 = vmatmul.bf16.gmra.mxu0 %v1394
      %v1468 = vpop.f32.mrf.mxu0
      %v1469 = vadd.f32 0.0, %v1468
      %v1470 = vpop.f32.mrf.mxu0
      %v1471 = vadd.f32 0.0, %v1470
      %1472 = vmatmul.bf16.gmra.mxu0 %v1396
      %v1473 = vpop.f32.mrf.mxu0
      %v1474 = vadd.f32 0.0, %v1473
      %v1475 = vpop.f32.mrf.mxu0
      %v1476 = vadd.f32 0.0, %v1475
      %1477 = vdwg.mxu0
      %v1478 = vadd.f32 %v1358, %v1459
      %v1479 = vadd.f32 %v1359, %v1461
      %v1480 = vadd.f32 %v1360, %v1464
      %v1481 = vadd.f32 %v1361, %v1466
      %v1482 = vadd.f32 %v1362, %v1469
      %v1483 = vadd.f32 %v1363, %v1471
      %v1484 = vadd.f32 %v1364, %v1474
      %v1485 = vadd.f32 %v1365, %v1476
      %v1486 = vpack.c.bf16 %v1478, %v1478
      %v1487 = vpack.c.bf16 %v1479, %v1479
      %v1488 = vpack.c.bf16 %v1480, %v1480
      %v1489 = vpack.c.bf16 %v1481, %v1481
      %v1490 = vpack.c.bf16 %v1482, %v1482
      %v1491 = vpack.c.bf16 %v1483, %v1483
      %v1492 = vpack.c.bf16 %v1484, %v1484
      %v1493 = vpack.c.bf16 %v1485, %v1485
      %1494 = vst [vmem:[%s226 + $0x4] sm:$0xf] %v1486
      %1495 = vst [vmem:[%s226 + $0x14] sm:$0xf] %v1487
      %1496 = vst [vmem:[%s226 + $0x24] sm:$0xf] %v1488
      %1497 = vst [vmem:[%s226 + $0x34] sm:$0xf] %v1489
      %1498 = vst [vmem:[%s226 + $0x44] sm:$0xf] %v1490
      %1499 = vst [vmem:[%s226 + $0x54] sm:$0xf] %v1491
      %1500 = vst [vmem:[%s226 + $0x64] sm:$0xf] %v1492
      %1501 = vst [vmem:[%s226 + $0x74] sm:$0xf] %v1493
      %v1502 = vmul.f32 %v1478, %v826
      %v1503 = vmul.f32 %v1479, %v831
      %v1504 = vmul.f32 %v1480, %v836
      %v1505 = vmul.f32 %v1481, %v841
      %v1506 = vmul.f32 %v1482, %v846
      %v1507 = vmul.f32 %v1483, %v851
      %v1508 = vmul.f32 %v1484, %v856
      %v1509 = vmul.f32 %v1485, %v861
      %v1510 = vadd.f32 %v1502, %v1503
      %v1511 = vadd.f32 %v1510, %v1504
      %v1512 = vadd.f32 %v1511, %v1505
      %v1513 = vadd.f32 %v1512, %v1506
      %v1514 = vadd.f32 %v1513, %v1507
      %v1515 = vadd.f32 %v1514, %v1508
      %v1516 = vadd.f32 %v1515, %v1509
      %v1517 = vrot.slane %v1516, 4
      %v1518 = vadd.f32 %v1516, %v1517
      %v1519 = vrot.slane %v1518, 2
      %v1520 = vadd.f32 %v1518, %v1519
      %v1521 = vrot.slane %v1520, 1
      %v1522 = vadd.f32 %v1520, %v1521
      %v1523 = vadd.f32 %v884, %v1522
      %v1524 = vmul.f32 %v1478, %v1502
      %v1525 = vmul.f32 %v1479, %v1503
      %v1526 = vmul.f32 %v1480, %v1504
      %v1527 = vmul.f32 %v1481, %v1505
      %v1528 = vmul.f32 %v1482, %v1506
      %v1529 = vmul.f32 %v1483, %v1507
      %v1530 = vmul.f32 %v1484, %v1508
      %v1531 = vmul.f32 %v1485, %v1509
      %v1532 = vadd.f32 %v1524, %v1525
      %v1533 = vadd.f32 %v1532, %v1526
      %v1534 = vadd.f32 %v1533, %v1527
      %v1535 = vadd.f32 %v1534, %v1528
      %v1536 = vadd.f32 %v1535, %v1529
      %v1537 = vadd.f32 %v1536, %v1530
      %v1538 = vadd.f32 %v1537, %v1531
      %v1539 = vrot.slane %v1538, 4
      %v1540 = vadd.f32 %v1538, %v1539
      %v1541 = vrot.slane %v1540, 2
      %v1542 = vadd.f32 %v1540, %v1541
      %v1543 = vrot.slane %v1542, 1
      %v1544 = vadd.f32 %v1542, %v1543
      %v1545 = vadd.f32 %v906, %v1544
      %v1546 = vld [vmem:[%s215 + $0x4] sm:$0xe]
      %v1547 = vld [vmem:[%s215 + $0x8] sm:$0xf]
      %v1548 = vld [vmem:[%s215 + $0xc] sm:$0xf]
      %v1549 = vld [vmem:[%s215 + $0x10] sm:$0xf]
      %v1550 = vld [vmem:[%s215 + $0x14] sm:$0xf]
      %v1551 = vld [vmem:[%s215 + $0x18] sm:$0xf]
      %v1552 = vld [vmem:[%s215 + $0x1c] sm:$0xf]
      %v1553 = vld [vmem:[%s215 + $0x20] sm:$0xf]
      %v1554 = vld [vmem:[%s215 + $0x24] sm:$0x1]
      %s1555 = scalar_lea.vmem %s1, 512
      %v1556 = vld [vmem:[%s1555] sm:$0xf]
      %v1557 = vld [vmem:[%s1555 + $0x4] sm:$0xf]
      %v1558 = vld [vmem:[%s1555 + $0x8] sm:$0xf]
      %v1559 = vld [vmem:[%s1555 + $0xc] sm:$0xf]
      %v1560 = vld [vmem:[%s1555 + $0x10] sm:$0xf]
      %v1561 = vld [vmem:[%s1555 + $0x14] sm:$0xf]
      %v1562 = vld [vmem:[%s1555 + $0x18] sm:$0xf]
      %v1563 = vld [vmem:[%s1555 + $0x1c] sm:$0xf]
      %v1564 = vld [vmem:[%s1555 + $0x20] sm:$0xf]
      %v1565 = vld [vmem:[%s1555 + $0x24] sm:$0xf]
      %v1566 = vld [vmem:[%s1555 + $0x28] sm:$0xf]
      %v1567 = vld [vmem:[%s1555 + $0x2c] sm:$0xf]
      %v1568 = vld [vmem:[%s1555 + $0x30] sm:$0xf]
      %v1569 = vld [vmem:[%s1555 + $0x34] sm:$0xf]
      %v1570 = vld [vmem:[%s1555 + $0x38] sm:$0xf]
      %v1571 = vld [vmem:[%s1555 + $0x3c] sm:$0xf]
      %v1572 = vld [vmem:[%s215 + $0x24] sm:$0x3]
      %s1573 = scalar_lea.vmem %s1, 576
      %v1574 = vld [vmem:[%s1573] sm:$0xf]
      %v1575 = vld [vmem:[%s1573 + $0x4] sm:$0xf]
      %v1576 = vld [vmem:[%s1573 + $0x8] sm:$0xf]
      %v1577 = vld [vmem:[%s1573 + $0xc] sm:$0xf]
      %v1578 = vld [vmem:[%s1573 + $0x10] sm:$0xf]
      %v1579 = vld [vmem:[%s1573 + $0x14] sm:$0xf]
      %v1580 = vld [vmem:[%s1573 + $0x18] sm:$0xf]
      %v1581 = vld [vmem:[%s1573 + $0x1c] sm:$0xf]
      %v1582 = vld [vmem:[%s1573 + $0x20] sm:$0xf]
      %v1583 = vld [vmem:[%s1573 + $0x24] sm:$0xf]
      %v1584 = vld [vmem:[%s1573 + $0x28] sm:$0xf]
      %v1585 = vld [vmem:[%s1573 + $0x2c] sm:$0xf]
      %v1586 = vld [vmem:[%s1573 + $0x30] sm:$0xf]
      %v1587 = vld [vmem:[%s1573 + $0x34] sm:$0xf]
      %v1588 = vld [vmem:[%s1573 + $0x38] sm:$0xf]
      %v1589 = vld [vmem:[%s1573 + $0x3c] sm:$0xf]
      %v1599 = vunpack.c.l.b16 %v1546
      %v1600 = vunpack.c.l.b16 %v1547
      %v1601 = vunpack.c.l.b16 %v1548
      %v1602 = vunpack.c.l.b16 %v1549
      %v1603 = vunpack.c.l.b16 %v1550
      %v1604 = vunpack.c.l.b16 %v1551
      %v1605 = vunpack.c.l.b16 %v1552
      %v1606 = vunpack.c.l.b16 %v1553
      %v1607 = vunpack.c.l.b16 %v1572
      %v1608 = vpack.c.b16 %v1600, %v1599
      %v1609 = vpack.c.b16 %v1602, %v1601
      %v1610 = vpack.c.b16 %v1604, %v1603
      %v1611 = vpack.c.b16 %v1606, %v1605
      %v1612 = vpack.c.b16 %v1607, %v1607
      %v1614 = vshrl.u32 %v1608, 16
      %v1616 = vrot.slane %v1614, 1
      %v1617 = vshll.u32 %v1608, 16
      %v1619 = vrot.slane %v1617, 2
      %v1620 = vor.u32 %v1616, %v1619
      %v1622 = vshrl.u32 %v1609, 16
      %v1624 = vrot.slane %v1622, 1
      %v1625 = vshll.u32 %v1609, 16
      %v1627 = vrot.slane %v1625, 2
      %v1628 = vor.u32 %v1624, %v1627
      %v1629 = vsel %vm673, %v1620, %v1628
      %v1631 = vshrl.u32 %v1610, 16
      %v1633 = vrot.slane %v1631, 1
      %v1634 = vshll.u32 %v1610, 16
      %v1636 = vrot.slane %v1634, 2
      %v1637 = vor.u32 %v1633, %v1636
      %v1638 = vsel %vm673, %v1628, %v1637
      %v1640 = vshrl.u32 %v1611, 16
      %v1642 = vrot.slane %v1640, 1
      %v1643 = vshll.u32 %v1611, 16
      %v1645 = vrot.slane %v1643, 2
      %v1646 = vor.u32 %v1642, %v1645
      %v1647 = vsel %vm673, %v1637, %v1646
      %v1649 = vshrl.u32 %v1612, 16
      %v1651 = vrot.slane %v1649, 1
      %v1652 = vshll.u32 %v1612, 16
      %v1654 = vrot.slane %v1652, 2
      %v1655 = vor.u32 %v1651, %v1654
      %v1656 = vsel %vm673, %v1646, %v1655
      %v1677 = vunpack.c.l.b16 %v1574
      %v1678 = vunpack.c.l.b16 %v1575
      %v1679 = vunpack.c.l.b16 %v1576
      %v1680 = vunpack.c.l.b16 %v1577
      %v1681 = vunpack.c.l.b16 %v1578
      %v1682 = vunpack.c.l.b16 %v1579
      %v1683 = vunpack.c.l.b16 %v1580
      %v1684 = vunpack.c.l.b16 %v1581
      %v1685 = vunpack.c.l.b16 %v1582
      %v1686 = vunpack.c.l.b16 %v1583
      %v1687 = vunpack.c.l.b16 %v1584
      %v1688 = vunpack.c.l.b16 %v1585
      %v1689 = vunpack.c.l.b16 %v1586
      %v1690 = vunpack.c.l.b16 %v1587
      %v1691 = vunpack.c.l.b16 %v1588
      %v1692 = vunpack.c.l.b16 %v1589
      %v1693 = vpack.c.b16 %v1678, %v1677
      %v1694 = vpack.c.b16 %v1680, %v1679
      %v1695 = vpack.c.b16 %v1682, %v1681
      %v1696 = vpack.c.b16 %v1684, %v1683
      %v1697 = vpack.c.b16 %v1686, %v1685
      %v1698 = vpack.c.b16 %v1688, %v1687
      %v1699 = vpack.c.b16 %v1690, %v1689
      %v1700 = vpack.c.b16 %v1692, %v1691
      %1709 = vmatpush.bf16.msra.mxu0 %v1700
      %1710 = vmatpush.bf16.msra.mxu0 %v1699
      %1711 = vmatpush.bf16.msra.mxu0 %v1698
      %1712 = vmatpush.bf16.msra.mxu0 %v1697
      %1713 = vmatpush.bf16.msra.mxu0 %v1696
      %1714 = vmatpush.bf16.msra.mxu0 %v1695
      %1715 = vmatpush.bf16.msra.mxu0 %v1694
      %1716 = vmatpush.bf16.msra.mxu0 %v1693
      %1717 = vmatmul.bf16.gmra.mxu0 %v1629
      %v1718 = vpop.f32.mrf.mxu0
      %v1719 = vadd.f32 0.0, %v1718
      %v1720 = vpop.f32.mrf.mxu0
      %v1721 = vadd.f32 0.0, %v1720
      %1722 = vmatmul.bf16.gmra.mxu0 %v1638
      %v1723 = vpop.f32.mrf.mxu0
      %v1724 = vadd.f32 0.0, %v1723
      %v1725 = vpop.f32.mrf.mxu0
      %v1726 = vadd.f32 0.0, %v1725
      %1727 = vmatmul.bf16.gmra.mxu0 %v1647
      %v1728 = vpop.f32.mrf.mxu0
      %v1729 = vadd.f32 0.0, %v1728
      %v1730 = vpop.f32.mrf.mxu0
      %v1731 = vadd.f32 0.0, %v1730
      %1732 = vmatmul.bf16.gmra.mxu0 %v1656
      %v1733 = vpop.f32.mrf.mxu0
      %v1734 = vadd.f32 0.0, %v1733
      %v1735 = vpop.f32.mrf.mxu0
      %v1736 = vadd.f32 0.0, %v1735
      %1737 = vdwg.mxu0
      %v1739 = vunpack.c.l.b16 %v1554
      %v1740 = vpack.c.b16 %v1739, %v1739
      %v1741 = vrot.slane %v1608, 1
      %v1742 = vrot.slane %v1609, 1
      %v1743 = vsel %vm553, %v1741, %v1742
      %v1744 = vrot.slane %v1610, 1
      %v1745 = vsel %vm553, %v1742, %v1744
      %v1746 = vrot.slane %v1611, 1
      %v1747 = vsel %vm553, %v1744, %v1746
      %v1748 = vrot.slane %v1740, 1
      %v1749 = vsel %vm553, %v1746, %v1748
      %v1770 = vunpack.c.l.b16 %v1556
      %v1771 = vunpack.c.l.b16 %v1557
      %v1772 = vunpack.c.l.b16 %v1558
      %v1773 = vunpack.c.l.b16 %v1559
      %v1774 = vunpack.c.l.b16 %v1560
      %v1775 = vunpack.c.l.b16 %v1561
      %v1776 = vunpack.c.l.b16 %v1562
      %v1777 = vunpack.c.l.b16 %v1563
      %v1778 = vunpack.c.l.b16 %v1564
      %v1779 = vunpack.c.l.b16 %v1565
      %v1780 = vunpack.c.l.b16 %v1566
      %v1781 = vunpack.c.l.b16 %v1567
      %v1782 = vunpack.c.l.b16 %v1568
      %v1783 = vunpack.c.l.b16 %v1569
      %v1784 = vunpack.c.l.b16 %v1570
      %v1785 = vunpack.c.l.b16 %v1571
      %v1786 = vpack.c.b16 %v1771, %v1770
      %v1787 = vpack.c.b16 %v1773, %v1772
      %v1788 = vpack.c.b16 %v1775, %v1774
      %v1789 = vpack.c.b16 %v1777, %v1776
      %v1790 = vpack.c.b16 %v1779, %v1778
      %v1791 = vpack.c.b16 %v1781, %v1780
      %v1792 = vpack.c.b16 %v1783, %v1782
      %v1793 = vpack.c.b16 %v1785, %v1784
      %1802 = vmatpush.bf16.msra.mxu0 %v1793
      %1803 = vmatpush.bf16.msra.mxu0 %v1792
      %1804 = vmatpush.bf16.msra.mxu0 %v1791
      %1805 = vmatpush.bf16.msra.mxu0 %v1790
      %1806 = vmatpush.bf16.msra.mxu0 %v1789
      %1807 = vmatpush.bf16.msra.mxu0 %v1788
      %1808 = vmatpush.bf16.msra.mxu0 %v1787
      %1809 = vmatpush.bf16.msra.mxu0 %v1786
      %1810 = vmatmul.bf16.gmra.mxu0 %v1743
      %v1811 = vpop.f32.mrf.mxu0
      %v1812 = vadd.f32 %v1719, %v1811
      %v1813 = vpop.f32.mrf.mxu0
      %v1814 = vadd.f32 %v1721, %v1813
      %1815 = vmatmul.bf16.gmra.mxu0 %v1745
      %v1816 = vpop.f32.mrf.mxu0
      %v1817 = vadd.f32 %v1724, %v1816
      %v1818 = vpop.f32.mrf.mxu0
      %v1819 = vadd.f32 %v1726, %v1818
      %1820 = vmatmul.bf16.gmra.mxu0 %v1747
      %v1821 = vpop.f32.mrf.mxu0
      %v1822 = vadd.f32 %v1729, %v1821
      %v1823 = vpop.f32.mrf.mxu0
      %v1824 = vadd.f32 %v1731, %v1823
      %1825 = vmatmul.bf16.gmra.mxu0 %v1749
      %v1826 = vpop.f32.mrf.mxu0
      %v1827 = vadd.f32 %v1734, %v1826
      %v1828 = vpop.f32.mrf.mxu0
      %v1829 = vadd.f32 %v1736, %v1828
      %1830 = vdwg.mxu0
      %v1831 = vld [vmem:[%s215 + $0x8] sm:$0xc]
      %v1832 = vld [vmem:[%s215 + $0xc] sm:$0xf]
      %v1833 = vld [vmem:[%s215 + $0x10] sm:$0xf]
      %v1834 = vld [vmem:[%s215 + $0x14] sm:$0xf]
      %v1835 = vld [vmem:[%s215 + $0x18] sm:$0xf]
      %v1836 = vld [vmem:[%s215 + $0x1c] sm:$0xf]
      %v1837 = vld [vmem:[%s215 + $0x20] sm:$0xf]
      %v1838 = vld [vmem:[%s215 + $0x24] sm:$0xf]
      %v1839 = vld [vmem:[%s215 + $0x28] sm:$0x3]
      %s1840 = scalar_lea.vmem %s1, 640
      %v1841 = vld [vmem:[%s1840] sm:$0xf]
      %v1842 = vld [vmem:[%s1840 + $0x4] sm:$0xf]
      %v1843 = vld [vmem:[%s1840 + $0x8] sm:$0xf]
      %v1844 = vld [vmem:[%s1840 + $0xc] sm:$0xf]
      %v1845 = vld [vmem:[%s1840 + $0x10] sm:$0xf]
      %v1846 = vld [vmem:[%s1840 + $0x14] sm:$0xf]
      %v1847 = vld [vmem:[%s1840 + $0x18] sm:$0xf]
      %v1848 = vld [vmem:[%s1840 + $0x1c] sm:$0xf]
      %v1849 = vld [vmem:[%s1840 + $0x20] sm:$0xf]
      %v1850 = vld [vmem:[%s1840 + $0x24] sm:$0xf]
      %v1851 = vld [vmem:[%s1840 + $0x28] sm:$0xf]
      %v1852 = vld [vmem:[%s1840 + $0x2c] sm:$0xf]
      %v1853 = vld [vmem:[%s1840 + $0x30] sm:$0xf]
      %v1854 = vld [vmem:[%s1840 + $0x34] sm:$0xf]
      %v1855 = vld [vmem:[%s1840 + $0x38] sm:$0xf]
      %v1856 = vld [vmem:[%s1840 + $0x3c] sm:$0xf]
      %v1866 = vunpack.c.l.b16 %v1831
      %v1867 = vunpack.c.l.b16 %v1832
      %v1868 = vunpack.c.l.b16 %v1833
      %v1869 = vunpack.c.l.b16 %v1834
      %v1870 = vunpack.c.l.b16 %v1835
      %v1871 = vunpack.c.l.b16 %v1836
      %v1872 = vunpack.c.l.b16 %v1837
      %v1873 = vunpack.c.l.b16 %v1838
      %v1874 = vunpack.c.l.b16 %v1839
      %v1875 = vpack.c.b16 %v1867, %v1866
      %v1876 = vpack.c.b16 %v1869, %v1868
      %v1877 = vpack.c.b16 %v1871, %v1870
      %v1878 = vpack.c.b16 %v1873, %v1872
      %v1879 = vpack.c.b16 %v1874, %v1874
      %v1880 = vrot.slane %v1875, 2
      %v1881 = vrot.slane %v1876, 2
      %v1882 = vsel %vm1387, %v1880, %v1881
      %v1883 = vrot.slane %v1877, 2
      %v1884 = vsel %vm1387, %v1881, %v1883
      %v1885 = vrot.slane %v1878, 2
      %v1886 = vsel %vm1387, %v1883, %v1885
      %v1887 = vrot.slane %v1879, 2
      %v1888 = vsel %vm1387, %v1885, %v1887
      %v1909 = vunpack.c.l.b16 %v1841
      %v1910 = vunpack.c.l.b16 %v1842
      %v1911 = vunpack.c.l.b16 %v1843
      %v1912 = vunpack.c.l.b16 %v1844
      %v1913 = vunpack.c.l.b16 %v1845
      %v1914 = vunpack.c.l.b16 %v1846
      %v1915 = vunpack.c.l.b16 %v1847
      %v1916 = vunpack.c.l.b16 %v1848
      %v1917 = vunpack.c.l.b16 %v1849
      %v1918 = vunpack.c.l.b16 %v1850
      %v1919 = vunpack.c.l.b16 %v1851
      %v1920 = vunpack.c.l.b16 %v1852
      %v1921 = vunpack.c.l.b16 %v1853
      %v1922 = vunpack.c.l.b16 %v1854
      %v1923 = vunpack.c.l.b16 %v1855
      %v1924 = vunpack.c.l.b16 %v1856
      %v1925 = vpack.c.b16 %v1910, %v1909
      %v1926 = vpack.c.b16 %v1912, %v1911
      %v1927 = vpack.c.b16 %v1914, %v1913
      %v1928 = vpack.c.b16 %v1916, %v1915
      %v1929 = vpack.c.b16 %v1918, %v1917
      %v1930 = vpack.c.b16 %v1920, %v1919
      %v1931 = vpack.c.b16 %v1922, %v1921
      %v1932 = vpack.c.b16 %v1924, %v1923
      %1941 = vmatpush.bf16.msra.mxu0 %v1932
      %1942 = vmatpush.bf16.msra.mxu0 %v1931
      %1943 = vmatpush.bf16.msra.mxu0 %v1930
      %1944 = vmatpush.bf16.msra.mxu0 %v1929
      %1945 = vmatpush.bf16.msra.mxu0 %v1928
      %1946 = vmatpush.bf16.msra.mxu0 %v1927
      %1947 = vmatpush.bf16.msra.mxu0 %v1926
      %1948 = vmatpush.bf16.msra.mxu0 %v1925
      %1949 = vmatmul.bf16.gmra.mxu0 %v1882
      %v1950 = vpop.f32.mrf.mxu0
      %v1951 = vadd.f32 0.0, %v1950
      %v1952 = vpop.f32.mrf.mxu0
      %v1953 = vadd.f32 0.0, %v1952
      %1954 = vmatmul.bf16.gmra.mxu0 %v1884
      %v1955 = vpop.f32.mrf.mxu0
      %v1956 = vadd.f32 0.0, %v1955
      %v1957 = vpop.f32.mrf.mxu0
      %v1958 = vadd.f32 0.0, %v1957
      %1959 = vmatmul.bf16.gmra.mxu0 %v1886
      %v1960 = vpop.f32.mrf.mxu0
      %v1961 = vadd.f32 0.0, %v1960
      %v1962 = vpop.f32.mrf.mxu0
      %v1963 = vadd.f32 0.0, %v1962
      %1964 = vmatmul.bf16.gmra.mxu0 %v1888
      %v1965 = vpop.f32.mrf.mxu0
      %v1966 = vadd.f32 0.0, %v1965
      %v1967 = vpop.f32.mrf.mxu0
      %v1968 = vadd.f32 0.0, %v1967
      %1969 = vdwg.mxu0
      %v1970 = vadd.f32 %v1812, %v1951
      %v1971 = vadd.f32 %v1814, %v1953
      %v1972 = vadd.f32 %v1817, %v1956
      %v1973 = vadd.f32 %v1819, %v1958
      %v1974 = vadd.f32 %v1822, %v1961
      %v1975 = vadd.f32 %v1824, %v1963
      %v1976 = vadd.f32 %v1827, %v1966
      %v1977 = vadd.f32 %v1829, %v1968
      %v1978 = vld [vmem:[%s215 + $0x28] sm:$0x7]
      %s1979 = scalar_lea.vmem %s1, 704
      %v1980 = vld [vmem:[%s1979] sm:$0xf]
      %v1981 = vld [vmem:[%s1979 + $0x4] sm:$0xf]
      %v1982 = vld [vmem:[%s1979 + $0x8] sm:$0xf]
      %v1983 = vld [vmem:[%s1979 + $0xc] sm:$0xf]
      %v1984 = vld [vmem:[%s1979 + $0x10] sm:$0xf]
      %v1985 = vld [vmem:[%s1979 + $0x14] sm:$0xf]
      %v1986 = vld [vmem:[%s1979 + $0x18] sm:$0xf]
      %v1987 = vld [vmem:[%s1979 + $0x1c] sm:$0xf]
      %v1988 = vld [vmem:[%s1979 + $0x20] sm:$0xf]
      %v1989 = vld [vmem:[%s1979 + $0x24] sm:$0xf]
      %v1990 = vld [vmem:[%s1979 + $0x28] sm:$0xf]
      %v1991 = vld [vmem:[%s1979 + $0x2c] sm:$0xf]
      %v1992 = vld [vmem:[%s1979 + $0x30] sm:$0xf]
      %v1993 = vld [vmem:[%s1979 + $0x34] sm:$0xf]
      %v1994 = vld [vmem:[%s1979 + $0x38] sm:$0xf]
      %v1995 = vld [vmem:[%s1979 + $0x3c] sm:$0xf]
      %v1997 = vunpack.c.l.b16 %v1978
      %v1998 = vpack.c.b16 %v1997, %v1997
      %vm1999 = vsmask.f32 5376
      %v2001 = vshrl.u32 %v1875, 16
      %v2003 = vrot.slane %v2001, 2
      %v2004 = vshll.u32 %v1875, 16
      %v2006 = vrot.slane %v2004, 3
      %v2007 = vor.u32 %v2003, %v2006
      %v2009 = vshrl.u32 %v1876, 16
      %v2011 = vrot.slane %v2009, 2
      %v2012 = vshll.u32 %v1876, 16
      %v2014 = vrot.slane %v2012, 3
      %v2015 = vor.u32 %v2011, %v2014
      %v2016 = vsel %vm1999, %v2007, %v2015
      %v2018 = vshrl.u32 %v1877, 16
      %v2020 = vrot.slane %v2018, 2
      %v2021 = vshll.u32 %v1877, 16
      %v2023 = vrot.slane %v2021, 3
      %v2024 = vor.u32 %v2020, %v2023
      %v2025 = vsel %vm1999, %v2015, %v2024
      %v2027 = vshrl.u32 %v1878, 16
      %v2029 = vrot.slane %v2027, 2
      %v2030 = vshll.u32 %v1878, 16
      %v2032 = vrot.slane %v2030, 3
      %v2033 = vor.u32 %v2029, %v2032
      %v2034 = vsel %vm1999, %v2024, %v2033
      %v2036 = vshrl.u32 %v1998, 16
      %v2038 = vrot.slane %v2036, 2
      %v2039 = vshll.u32 %v1998, 16
      %v2041 = vrot.slane %v2039, 3
      %v2042 = vor.u32 %v2038, %v2041
      %v2043 = vsel %vm1999, %v2033, %v2042
      %v2064 = vunpack.c.l.b16 %v1980
      %v2065 = vunpack.c.l.b16 %v1981
      %v2066 = vunpack.c.l.b16 %v1982
      %v2067 = vunpack.c.l.b16 %v1983
      %v2068 = vunpack.c.l.b16 %v1984
      %v2069 = vunpack.c.l.b16 %v1985
      %v2070 = vunpack.c.l.b16 %v1986
      %v2071 = vunpack.c.l.b16 %v1987
      %v2072 = vunpack.c.l.b16 %v1988
      %v2073 = vunpack.c.l.b16 %v1989
      %v2074 = vunpack.c.l.b16 %v1990
      %v2075 = vunpack.c.l.b16 %v1991
      %v2076 = vunpack.c.l.b16 %v1992
      %v2077 = vunpack.c.l.b16 %v1993
      %v2078 = vunpack.c.l.b16 %v1994
      %v2079 = vunpack.c.l.b16 %v1995
      %v2080 = vpack.c.b16 %v2065, %v2064
      %v2081 = vpack.c.b16 %v2067, %v2066
      %v2082 = vpack.c.b16 %v2069, %v2068
      %v2083 = vpack.c.b16 %v2071, %v2070
      %v2084 = vpack.c.b16 %v2073, %v2072
      %v2085 = vpack.c.b16 %v2075, %v2074
      %v2086 = vpack.c.b16 %v2077, %v2076
      %v2087 = vpack.c.b16 %v2079, %v2078
      %2096 = vmatpush.bf16.msra.mxu0 %v2087
      %2097 = vmatpush.bf16.msra.mxu0 %v2086
      %2098 = vmatpush.bf16.msra.mxu0 %v2085
      %2099 = vmatpush.bf16.msra.mxu0 %v2084
      %2100 = vmatpush.bf16.msra.mxu0 %v2083
      %2101 = vmatpush.bf16.msra.mxu0 %v2082
      %2102 = vmatpush.bf16.msra.mxu0 %v2081
      %2103 = vmatpush.bf16.msra.mxu0 %v2080
      %2104 = vmatmul.bf16.gmra.mxu0 %v2016
      %v2105 = vpop.f32.mrf.mxu0
      %v2106 = vadd.f32 0.0, %v2105
      %v2107 = vpop.f32.mrf.mxu0
      %v2108 = vadd.f32 0.0, %v2107
      %2109 = vmatmul.bf16.gmra.mxu0 %v2025
      %v2110 = vpop.f32.mrf.mxu0
      %v2111 = vadd.f32 0.0, %v2110
      %v2112 = vpop.f32.mrf.mxu0
      %v2113 = vadd.f32 0.0, %v2112
      %2114 = vmatmul.bf16.gmra.mxu0 %v2034
      %v2115 = vpop.f32.mrf.mxu0
      %v2116 = vadd.f32 0.0, %v2115
      %v2117 = vpop.f32.mrf.mxu0
      %v2118 = vadd.f32 0.0, %v2117
      %2119 = vmatmul.bf16.gmra.mxu0 %v2043
      %v2120 = vpop.f32.mrf.mxu0
      %v2121 = vadd.f32 0.0, %v2120
      %v2122 = vpop.f32.mrf.mxu0
      %v2123 = vadd.f32 0.0, %v2122
      %2124 = vdwg.mxu0
      %v2125 = vadd.f32 %v1970, %v2106
      %v2126 = vadd.f32 %v1971, %v2108
      %v2127 = vadd.f32 %v1972, %v2111
      %v2128 = vadd.f32 %v1973, %v2113
      %v2129 = vadd.f32 %v1974, %v2116
      %v2130 = vadd.f32 %v1975, %v2118
      %v2131 = vadd.f32 %v1976, %v2121
      %v2132 = vadd.f32 %v1977, %v2123
      %v2133 = vpack.c.bf16 %v2125, %v2125
      %v2134 = vpack.c.bf16 %v2126, %v2126
      %v2135 = vpack.c.bf16 %v2127, %v2127
      %v2136 = vpack.c.bf16 %v2128, %v2128
      %v2137 = vpack.c.bf16 %v2129, %v2129
      %v2138 = vpack.c.bf16 %v2130, %v2130
      %v2139 = vpack.c.bf16 %v2131, %v2131
      %v2140 = vpack.c.bf16 %v2132, %v2132
      %2141 = vst [vmem:[%s226 + $0x8] sm:$0xf] %v2133
      %2142 = vst [vmem:[%s226 + $0x18] sm:$0xf] %v2134
      %2143 = vst [vmem:[%s226 + $0x28] sm:$0xf] %v2135
      %2144 = vst [vmem:[%s226 + $0x38] sm:$0xf] %v2136
      %2145 = vst [vmem:[%s226 + $0x48] sm:$0xf] %v2137
      %2146 = vst [vmem:[%s226 + $0x58] sm:$0xf] %v2138
      %2147 = vst [vmem:[%s226 + $0x68] sm:$0xf] %v2139
      %2148 = vst [vmem:[%s226 + $0x78] sm:$0xf] %v2140
      %v2149 = vmul.f32 %v2125, %v826
      %v2150 = vmul.f32 %v2126, %v831
      %v2151 = vmul.f32 %v2127, %v836
      %v2152 = vmul.f32 %v2128, %v841
      %v2153 = vmul.f32 %v2129, %v846
      %v2154 = vmul.f32 %v2130, %v851
      %v2155 = vmul.f32 %v2131, %v856
      %v2156 = vmul.f32 %v2132, %v861
      %v2157 = vadd.f32 %v2149, %v2150
      %v2158 = vadd.f32 %v2157, %v2151
      %v2159 = vadd.f32 %v2158, %v2152
      %v2160 = vadd.f32 %v2159, %v2153
      %v2161 = vadd.f32 %v2160, %v2154
      %v2162 = vadd.f32 %v2161, %v2155
      %v2163 = vadd.f32 %v2162, %v2156
      %v2164 = vrot.slane %v2163, 4
      %v2165 = vadd.f32 %v2163, %v2164
      %v2166 = vrot.slane %v2165, 2
      %v2167 = vadd.f32 %v2165, %v2166
      %v2168 = vrot.slane %v2167, 1
      %v2169 = vadd.f32 %v2167, %v2168
      %v2170 = vadd.f32 %v1523, %v2169
      %v2171 = vmul.f32 %v2125, %v2149
      %v2172 = vmul.f32 %v2126, %v2150
      %v2173 = vmul.f32 %v2127, %v2151
      %v2174 = vmul.f32 %v2128, %v2152
      %v2175 = vmul.f32 %v2129, %v2153
      %v2176 = vmul.f32 %v2130, %v2154
      %v2177 = vmul.f32 %v2131, %v2155
      %v2178 = vmul.f32 %v2132, %v2156
      %v2179 = vadd.f32 %v2171, %v2172
      %v2180 = vadd.f32 %v2179, %v2173
      %v2181 = vadd.f32 %v2180, %v2174
      %v2182 = vadd.f32 %v2181, %v2175
      %v2183 = vadd.f32 %v2182, %v2176
      %v2184 = vadd.f32 %v2183, %v2177
      %v2185 = vadd.f32 %v2184, %v2178
      %v2186 = vrot.slane %v2185, 4
      %v2187 = vadd.f32 %v2185, %v2186
      %v2188 = vrot.slane %v2187, 2
      %v2189 = vadd.f32 %v2187, %v2188
      %v2190 = vrot.slane %v2189, 1
      %v2191 = vadd.f32 %v2189, %v2190
      %v2192 = vadd.f32 %v1545, %v2191
      %v2193 = vld [vmem:[%s215 + $0x4] sm:$0xe]
      %v2194 = vld [vmem:[%s215 + $0x8] sm:$0xf]
      %v2195 = vld [vmem:[%s215 + $0xc] sm:$0xf]
      %v2196 = vld [vmem:[%s215 + $0x10] sm:$0xf]
      %v2197 = vld [vmem:[%s215 + $0x14] sm:$0xf]
      %v2198 = vld [vmem:[%s215 + $0x18] sm:$0xf]
      %v2199 = vld [vmem:[%s215 + $0x1c] sm:$0xf]
      %v2200 = vld [vmem:[%s215 + $0x20] sm:$0xf]
      %v2201 = vld [vmem:[%s215 + $0x24] sm:$0x3]
      %s2202 = scalar_lea.vmem %s1, 768
      %v2203 = vld [vmem:[%s2202] sm:$0xf]
      %v2204 = vld [vmem:[%s2202 + $0x4] sm:$0xf]
      %v2205 = vld [vmem:[%s2202 + $0x8] sm:$0xf]
      %v2206 = vld [vmem:[%s2202 + $0xc] sm:$0xf]
      %v2207 = vld [vmem:[%s2202 + $0x10] sm:$0xf]
      %v2208 = vld [vmem:[%s2202 + $0x14] sm:$0xf]
      %v2209 = vld [vmem:[%s2202 + $0x18] sm:$0xf]
      %v2210 = vld [vmem:[%s2202 + $0x1c] sm:$0xf]
      %v2211 = vld [vmem:[%s2202 + $0x20] sm:$0xf]
      %v2212 = vld [vmem:[%s2202 + $0x24] sm:$0xf]
      %v2213 = vld [vmem:[%s2202 + $0x28] sm:$0xf]
      %v2214 = vld [vmem:[%s2202 + $0x2c] sm:$0xf]
      %v2215 = vld [vmem:[%s2202 + $0x30] sm:$0xf]
      %v2216 = vld [vmem:[%s2202 + $0x34] sm:$0xf]
      %v2217 = vld [vmem:[%s2202 + $0x38] sm:$0xf]
      %v2218 = vld [vmem:[%s2202 + $0x3c] sm:$0xf]
      %v2219 = vld [vmem:[%s215 + $0x4] sm:$0xc]
      %s2220 = scalar_lea.vmem %s1, 832
      %v2221 = vld [vmem:[%s2220] sm:$0xf]
      %v2222 = vld [vmem:[%s2220 + $0x4] sm:$0xf]
      %v2223 = vld [vmem:[%s2220 + $0x8] sm:$0xf]
      %v2224 = vld [vmem:[%s2220 + $0xc] sm:$0xf]
      %v2225 = vld [vmem:[%s2220 + $0x10] sm:$0xf]
      %v2226 = vld [vmem:[%s2220 + $0x14] sm:$0xf]
      %v2227 = vld [vmem:[%s2220 + $0x18] sm:$0xf]
      %v2228 = vld [vmem:[%s2220 + $0x1c] sm:$0xf]
      %v2229 = vld [vmem:[%s2220 + $0x20] sm:$0xf]
      %v2230 = vld [vmem:[%s2220 + $0x24] sm:$0xf]
      %v2231 = vld [vmem:[%s2220 + $0x28] sm:$0xf]
      %v2232 = vld [vmem:[%s2220 + $0x2c] sm:$0xf]
      %v2233 = vld [vmem:[%s2220 + $0x30] sm:$0xf]
      %v2234 = vld [vmem:[%s2220 + $0x34] sm:$0xf]
      %v2235 = vld [vmem:[%s2220 + $0x38] sm:$0xf]
      %v2236 = vld [vmem:[%s2220 + $0x3c] sm:$0xf]
      %v2246 = vunpack.c.l.b16 %v2219
      %v2247 = vunpack.c.l.b16 %v2194
      %v2248 = vunpack.c.l.b16 %v2195
      %v2249 = vunpack.c.l.b16 %v2196
      %v2250 = vunpack.c.l.b16 %v2197
      %v2251 = vunpack.c.l.b16 %v2198
      %v2252 = vunpack.c.l.b16 %v2199
      %v2253 = vunpack.c.l.b16 %v2200
      %v2254 = vunpack.c.l.b16 %v2201
      %v2255 = vpack.c.b16 %v2247, %v2246
      %v2256 = vpack.c.b16 %v2249, %v2248
      %v2257 = vpack.c.b16 %v2251, %v2250
      %v2258 = vpack.c.b16 %v2253, %v2252
      %v2259 = vpack.c.b16 %v2254, %v2254
      %v2260 = vrot.slane %v2255, 2
      %v2261 = vrot.slane %v2256, 2
      %v2262 = vsel %vm1387, %v2260, %v2261
      %v2263 = vrot.slane %v2257, 2
      %v2264 = vsel %vm1387, %v2261, %v2263
      %v2265 = vrot.slane %v2258, 2
      %v2266 = vsel %vm1387, %v2263, %v2265
      %v2267 = vrot.slane %v2259, 2
      %v2268 = vsel %vm1387, %v2265, %v2267
      %v2289 = vunpack.c.l.b16 %v2221
      %v2290 = vunpack.c.l.b16 %v2222
      %v2291 = vunpack.c.l.b16 %v2223
      %v2292 = vunpack.c.l.b16 %v2224
      %v2293 = vunpack.c.l.b16 %v2225
      %v2294 = vunpack.c.l.b16 %v2226
      %v2295 = vunpack.c.l.b16 %v2227
      %v2296 = vunpack.c.l.b16 %v2228
      %v2297 = vunpack.c.l.b16 %v2229
      %v2298 = vunpack.c.l.b16 %v2230
      %v2299 = vunpack.c.l.b16 %v2231
      %v2300 = vunpack.c.l.b16 %v2232
      %v2301 = vunpack.c.l.b16 %v2233
      %v2302 = vunpack.c.l.b16 %v2234
      %v2303 = vunpack.c.l.b16 %v2235
      %v2304 = vunpack.c.l.b16 %v2236
      %v2305 = vpack.c.b16 %v2290, %v2289
      %v2306 = vpack.c.b16 %v2292, %v2291
      %v2307 = vpack.c.b16 %v2294, %v2293
      %v2308 = vpack.c.b16 %v2296, %v2295
      %v2309 = vpack.c.b16 %v2298, %v2297
      %v2310 = vpack.c.b16 %v2300, %v2299
      %v2311 = vpack.c.b16 %v2302, %v2301
      %v2312 = vpack.c.b16 %v2304, %v2303
      %2321 = vmatpush.bf16.msra.mxu0 %v2312
      %2322 = vmatpush.bf16.msra.mxu0 %v2311
      %2323 = vmatpush.bf16.msra.mxu0 %v2310
      %2324 = vmatpush.bf16.msra.mxu0 %v2309
      %2325 = vmatpush.bf16.msra.mxu0 %v2308
      %2326 = vmatpush.bf16.msra.mxu0 %v2307
      %2327 = vmatpush.bf16.msra.mxu0 %v2306
      %2328 = vmatpush.bf16.msra.mxu0 %v2305
      %2329 = vmatmul.bf16.gmra.mxu0 %v2262
      %v2330 = vpop.f32.mrf.mxu0
      %v2331 = vadd.f32 0.0, %v2330
      %v2332 = vpop.f32.mrf.mxu0
      %v2333 = vadd.f32 0.0, %v2332
      %2334 = vmatmul.bf16.gmra.mxu0 %v2264
      %v2335 = vpop.f32.mrf.mxu0
      %v2336 = vadd.f32 0.0, %v2335
      %v2337 = vpop.f32.mrf.mxu0
      %v2338 = vadd.f32 0.0, %v2337
      %2339 = vmatmul.bf16.gmra.mxu0 %v2266
      %v2340 = vpop.f32.mrf.mxu0
      %v2341 = vadd.f32 0.0, %v2340
      %v2342 = vpop.f32.mrf.mxu0
      %v2343 = vadd.f32 0.0, %v2342
      %2344 = vmatmul.bf16.gmra.mxu0 %v2268
      %v2345 = vpop.f32.mrf.mxu0
      %v2346 = vadd.f32 0.0, %v2345
      %v2347 = vpop.f32.mrf.mxu0
      %v2348 = vadd.f32 0.0, %v2347
      %2349 = vdwg.mxu0
      %v2351 = vunpack.c.l.b16 %v2193
      %v2352 = vpack.c.b16 %v2247, %v2351
      %v2354 = vshrl.u32 %v2352, 16
      %v2356 = vrot.slane %v2354, 1
      %v2357 = vshll.u32 %v2352, 16
      %v2359 = vrot.slane %v2357, 2
      %v2360 = vor.u32 %v2356, %v2359
      %v2362 = vshrl.u32 %v2256, 16
      %v2364 = vrot.slane %v2362, 1
      %v2365 = vshll.u32 %v2256, 16
      %v2367 = vrot.slane %v2365, 2
      %v2368 = vor.u32 %v2364, %v2367
      %v2369 = vsel %vm673, %v2360, %v2368
      %v2371 = vshrl.u32 %v2257, 16
      %v2373 = vrot.slane %v2371, 1
      %v2374 = vshll.u32 %v2257, 16
      %v2376 = vrot.slane %v2374, 2
      %v2377 = vor.u32 %v2373, %v2376
      %v2378 = vsel %vm673, %v2368, %v2377
      %v2380 = vshrl.u32 %v2258, 16
      %v2382 = vrot.slane %v2380, 1
      %v2383 = vshll.u32 %v2258, 16
      %v2385 = vrot.slane %v2383, 2
      %v2386 = vor.u32 %v2382, %v2385
      %v2387 = vsel %vm673, %v2377, %v2386
      %v2389 = vshrl.u32 %v2259, 16
      %v2391 = vrot.slane %v2389, 1
      %v2392 = vshll.u32 %v2259, 16
      %v2394 = vrot.slane %v2392, 2
      %v2395 = vor.u32 %v2391, %v2394
      %v2396 = vsel %vm673, %v2386, %v2395
      %v2417 = vunpack.c.l.b16 %v2203
      %v2418 = vunpack.c.l.b16 %v2204
      %v2419 = vunpack.c.l.b16 %v2205
      %v2420 = vunpack.c.l.b16 %v2206
      %v2421 = vunpack.c.l.b16 %v2207
      %v2422 = vunpack.c.l.b16 %v2208
      %v2423 = vunpack.c.l.b16 %v2209
      %v2424 = vunpack.c.l.b16 %v2210
      %v2425 = vunpack.c.l.b16 %v2211
      %v2426 = vunpack.c.l.b16 %v2212
      %v2427 = vunpack.c.l.b16 %v2213
      %v2428 = vunpack.c.l.b16 %v2214
      %v2429 = vunpack.c.l.b16 %v2215
      %v2430 = vunpack.c.l.b16 %v2216
      %v2431 = vunpack.c.l.b16 %v2217
      %v2432 = vunpack.c.l.b16 %v2218
      %v2433 = vpack.c.b16 %v2418, %v2417
      %v2434 = vpack.c.b16 %v2420, %v2419
      %v2435 = vpack.c.b16 %v2422, %v2421
      %v2436 = vpack.c.b16 %v2424, %v2423
      %v2437 = vpack.c.b16 %v2426, %v2425
      %v2438 = vpack.c.b16 %v2428, %v2427
      %v2439 = vpack.c.b16 %v2430, %v2429
      %v2440 = vpack.c.b16 %v2432, %v2431
      %2449 = vmatpush.bf16.msra.mxu0 %v2440
      %2450 = vmatpush.bf16.msra.mxu0 %v2439
      %2451 = vmatpush.bf16.msra.mxu0 %v2438
      %2452 = vmatpush.bf16.msra.mxu0 %v2437
      %2453 = vmatpush.bf16.msra.mxu0 %v2436
      %2454 = vmatpush.bf16.msra.mxu0 %v2435
      %2455 = vmatpush.bf16.msra.mxu0 %v2434
      %2456 = vmatpush.bf16.msra.mxu0 %v2433
      %2457 = vmatmul.bf16.gmra.mxu0 %v2369
      %v2458 = vpop.f32.mrf.mxu0
      %v2459 = vadd.f32 %v2331, %v2458
      %v2460 = vpop.f32.mrf.mxu0
      %v2461 = vadd.f32 %v2333, %v2460
      %2462 = vmatmul.bf16.gmra.mxu0 %v2378
      %v2463 = vpop.f32.mrf.mxu0
      %v2464 = vadd.f32 %v2336, %v2463
      %v2465 = vpop.f32.mrf.mxu0
      %v2466 = vadd.f32 %v2338, %v2465
      %2467 = vmatmul.bf16.gmra.mxu0 %v2387
      %v2468 = vpop.f32.mrf.mxu0
      %v2469 = vadd.f32 %v2341, %v2468
      %v2470 = vpop.f32.mrf.mxu0
      %v2471 = vadd.f32 %v2343, %v2470
      %2472 = vmatmul.bf16.gmra.mxu0 %v2396
      %v2473 = vpop.f32.mrf.mxu0
      %v2474 = vadd.f32 %v2346, %v2473
      %v2475 = vpop.f32.mrf.mxu0
      %v2476 = vadd.f32 %v2348, %v2475
      %2477 = vdwg.mxu0
      %v2478 = vld [vmem:[%s215 + $0x8] sm:$0xc]
      %v2479 = vld [vmem:[%s215 + $0xc] sm:$0xf]
      %v2480 = vld [vmem:[%s215 + $0x10] sm:$0xf]
      %v2481 = vld [vmem:[%s215 + $0x14] sm:$0xf]
      %v2482 = vld [vmem:[%s215 + $0x18] sm:$0xf]
      %v2483 = vld [vmem:[%s215 + $0x1c] sm:$0xf]
      %v2484 = vld [vmem:[%s215 + $0x20] sm:$0xf]
      %v2485 = vld [vmem:[%s215 + $0x24] sm:$0xf]
      %v2486 = vld [vmem:[%s215 + $0x28] sm:$0x7]
      %s2487 = scalar_lea.vmem %s1, 896
      %v2488 = vld [vmem:[%s2487] sm:$0xf]
      %v2489 = vld [vmem:[%s2487 + $0x4] sm:$0xf]
      %v2490 = vld [vmem:[%s2487 + $0x8] sm:$0xf]
      %v2491 = vld [vmem:[%s2487 + $0xc] sm:$0xf]
      %v2492 = vld [vmem:[%s2487 + $0x10] sm:$0xf]
      %v2493 = vld [vmem:[%s2487 + $0x14] sm:$0xf]
      %v2494 = vld [vmem:[%s2487 + $0x18] sm:$0xf]
      %v2495 = vld [vmem:[%s2487 + $0x1c] sm:$0xf]
      %v2496 = vld [vmem:[%s2487 + $0x20] sm:$0xf]
      %v2497 = vld [vmem:[%s2487 + $0x24] sm:$0xf]
      %v2498 = vld [vmem:[%s2487 + $0x28] sm:$0xf]
      %v2499 = vld [vmem:[%s2487 + $0x2c] sm:$0xf]
      %v2500 = vld [vmem:[%s2487 + $0x30] sm:$0xf]
      %v2501 = vld [vmem:[%s2487 + $0x34] sm:$0xf]
      %v2502 = vld [vmem:[%s2487 + $0x38] sm:$0xf]
      %v2503 = vld [vmem:[%s2487 + $0x3c] sm:$0xf]
      %v2513 = vunpack.c.l.b16 %v2478
      %v2514 = vunpack.c.l.b16 %v2479
      %v2515 = vunpack.c.l.b16 %v2480
      %v2516 = vunpack.c.l.b16 %v2481
      %v2517 = vunpack.c.l.b16 %v2482
      %v2518 = vunpack.c.l.b16 %v2483
      %v2519 = vunpack.c.l.b16 %v2484
      %v2520 = vunpack.c.l.b16 %v2485
      %v2521 = vunpack.c.l.b16 %v2486
      %v2522 = vpack.c.b16 %v2514, %v2513
      %v2523 = vpack.c.b16 %v2516, %v2515
      %v2524 = vpack.c.b16 %v2518, %v2517
      %v2525 = vpack.c.b16 %v2520, %v2519
      %v2526 = vpack.c.b16 %v2521, %v2521
      %v2528 = vshrl.u32 %v2522, 16
      %v2530 = vrot.slane %v2528, 2
      %v2531 = vshll.u32 %v2522, 16
      %v2533 = vrot.slane %v2531, 3
      %v2534 = vor.u32 %v2530, %v2533
      %v2536 = vshrl.u32 %v2523, 16
      %v2538 = vrot.slane %v2536, 2
      %v2539 = vshll.u32 %v2523, 16
      %v2541 = vrot.slane %v2539, 3
      %v2542 = vor.u32 %v2538, %v2541
      %v2543 = vsel %vm1999, %v2534, %v2542
      %v2545 = vshrl.u32 %v2524, 16
      %v2547 = vrot.slane %v2545, 2
      %v2548 = vshll.u32 %v2524, 16
      %v2550 = vrot.slane %v2548, 3
      %v2551 = vor.u32 %v2547, %v2550
      %v2552 = vsel %vm1999, %v2542, %v2551
      %v2554 = vshrl.u32 %v2525, 16
      %v2556 = vrot.slane %v2554, 2
      %v2557 = vshll.u32 %v2525, 16
      %v2559 = vrot.slane %v2557, 3
      %v2560 = vor.u32 %v2556, %v2559
      %v2561 = vsel %vm1999, %v2551, %v2560
      %v2563 = vshrl.u32 %v2526, 16
      %v2565 = vrot.slane %v2563, 2
      %v2566 = vshll.u32 %v2526, 16
      %v2568 = vrot.slane %v2566, 3
      %v2569 = vor.u32 %v2565, %v2568
      %v2570 = vsel %vm1999, %v2560, %v2569
      %v2591 = vunpack.c.l.b16 %v2488
      %v2592 = vunpack.c.l.b16 %v2489
      %v2593 = vunpack.c.l.b16 %v2490
      %v2594 = vunpack.c.l.b16 %v2491
      %v2595 = vunpack.c.l.b16 %v2492
      %v2596 = vunpack.c.l.b16 %v2493
      %v2597 = vunpack.c.l.b16 %v2494
      %v2598 = vunpack.c.l.b16 %v2495
      %v2599 = vunpack.c.l.b16 %v2496
      %v2600 = vunpack.c.l.b16 %v2497
      %v2601 = vunpack.c.l.b16 %v2498
      %v2602 = vunpack.c.l.b16 %v2499
      %v2603 = vunpack.c.l.b16 %v2500
      %v2604 = vunpack.c.l.b16 %v2501
      %v2605 = vunpack.c.l.b16 %v2502
      %v2606 = vunpack.c.l.b16 %v2503
      %v2607 = vpack.c.b16 %v2592, %v2591
      %v2608 = vpack.c.b16 %v2594, %v2593
      %v2609 = vpack.c.b16 %v2596, %v2595
      %v2610 = vpack.c.b16 %v2598, %v2597
      %v2611 = vpack.c.b16 %v2600, %v2599
      %v2612 = vpack.c.b16 %v2602, %v2601
      %v2613 = vpack.c.b16 %v2604, %v2603
      %v2614 = vpack.c.b16 %v2606, %v2605
      %2623 = vmatpush.bf16.msra.mxu0 %v2614
      %2624 = vmatpush.bf16.msra.mxu0 %v2613
      %2625 = vmatpush.bf16.msra.mxu0 %v2612
      %2626 = vmatpush.bf16.msra.mxu0 %v2611
      %2627 = vmatpush.bf16.msra.mxu0 %v2610
      %2628 = vmatpush.bf16.msra.mxu0 %v2609
      %2629 = vmatpush.bf16.msra.mxu0 %v2608
      %2630 = vmatpush.bf16.msra.mxu0 %v2607
      %2631 = vmatmul.bf16.gmra.mxu0 %v2543
      %v2632 = vpop.f32.mrf.mxu0
      %v2633 = vadd.f32 0.0, %v2632
      %v2634 = vpop.f32.mrf.mxu0
      %v2635 = vadd.f32 0.0, %v2634
      %2636 = vmatmul.bf16.gmra.mxu0 %v2552
      %v2637 = vpop.f32.mrf.mxu0
      %v2638 = vadd.f32 0.0, %v2637
      %v2639 = vpop.f32.mrf.mxu0
      %v2640 = vadd.f32 0.0, %v2639
      %2641 = vmatmul.bf16.gmra.mxu0 %v2561
      %v2642 = vpop.f32.mrf.mxu0
      %v2643 = vadd.f32 0.0, %v2642
      %v2644 = vpop.f32.mrf.mxu0
      %v2645 = vadd.f32 0.0, %v2644
      %2646 = vmatmul.bf16.gmra.mxu0 %v2570
      %v2647 = vpop.f32.mrf.mxu0
      %v2648 = vadd.f32 0.0, %v2647
      %v2649 = vpop.f32.mrf.mxu0
      %v2650 = vadd.f32 0.0, %v2649
      %2651 = vdwg.mxu0
      %v2652 = vadd.f32 %v2459, %v2633
      %v2653 = vadd.f32 %v2461, %v2635
      %v2654 = vadd.f32 %v2464, %v2638
      %v2655 = vadd.f32 %v2466, %v2640
      %v2656 = vadd.f32 %v2469, %v2643
      %v2657 = vadd.f32 %v2471, %v2645
      %v2658 = vadd.f32 %v2474, %v2648
      %v2659 = vadd.f32 %v2476, %v2650
      %v2660 = vld [vmem:[%s215 + $0x8] sm:$0x8]
      %s2661 = scalar_lea.vmem %s1, 960
      %v2662 = vld [vmem:[%s2661] sm:$0xf]
      %v2663 = vld [vmem:[%s2661 + $0x4] sm:$0xf]
      %v2664 = vld [vmem:[%s2661 + $0x8] sm:$0xf]
      %v2665 = vld [vmem:[%s2661 + $0xc] sm:$0xf]
      %v2666 = vld [vmem:[%s2661 + $0x10] sm:$0xf]
      %v2667 = vld [vmem:[%s2661 + $0x14] sm:$0xf]
      %v2668 = vld [vmem:[%s2661 + $0x18] sm:$0xf]
      %v2669 = vld [vmem:[%s2661 + $0x1c] sm:$0xf]
      %v2670 = vld [vmem:[%s2661 + $0x20] sm:$0xf]
      %v2671 = vld [vmem:[%s2661 + $0x24] sm:$0xf]
      %v2672 = vld [vmem:[%s2661 + $0x28] sm:$0xf]
      %v2673 = vld [vmem:[%s2661 + $0x2c] sm:$0xf]
      %v2674 = vld [vmem:[%s2661 + $0x30] sm:$0xf]
      %v2675 = vld [vmem:[%s2661 + $0x34] sm:$0xf]
      %v2676 = vld [vmem:[%s2661 + $0x38] sm:$0xf]
      %v2677 = vld [vmem:[%s2661 + $0x3c] sm:$0xf]
      %v2679 = vunpack.c.l.b16 %v2660
      %v2680 = vpack.c.b16 %v2514, %v2679
      %vm2681 = vcmask 1044480
      %v2682 = vrot.slane %v2680, 3
      %v2683 = vrot.slane %v2523, 3
      %v2684 = vsel %vm2681, %v2682, %v2683
      %v2685 = vrot.slane %v2524, 3
      %v2686 = vsel %vm2681, %v2683, %v2685
      %v2687 = vrot.slane %v2525, 3
      %v2688 = vsel %vm2681, %v2685, %v2687
      %v2689 = vrot.slane %v2526, 3
      %v2690 = vsel %vm2681, %v2687, %v2689
      %v2711 = vunpack.c.l.b16 %v2662
      %v2712 = vunpack.c.l.b16 %v2663
      %v2713 = vunpack.c.l.b16 %v2664
      %v2714 = vunpack.c.l.b16 %v2665
      %v2715 = vunpack.c.l.b16 %v2666
      %v2716 = vunpack.c.l.b16 %v2667
      %v2717 = vunpack.c.l.b16 %v2668
      %v2718 = vunpack.c.l.b16 %v2669
      %v2719 = vunpack.c.l.b16 %v2670
      %v2720 = vunpack.c.l.b16 %v2671
      %v2721 = vunpack.c.l.b16 %v2672
      %v2722 = vunpack.c.l.b16 %v2673
      %v2723 = vunpack.c.l.b16 %v2674
      %v2724 = vunpack.c.l.b16 %v2675
      %v2725 = vunpack.c.l.b16 %v2676
      %v2726 = vunpack.c.l.b16 %v2677
      %v2727 = vpack.c.b16 %v2712, %v2711
      %v2728 = vpack.c.b16 %v2714, %v2713
      %v2729 = vpack.c.b16 %v2716, %v2715
      %v2730 = vpack.c.b16 %v2718, %v2717
      %v2731 = vpack.c.b16 %v2720, %v2719
      %v2732 = vpack.c.b16 %v2722, %v2721
      %v2733 = vpack.c.b16 %v2724, %v2723
      %v2734 = vpack.c.b16 %v2726, %v2725
      %2743 = vmatpush.bf16.msra.mxu0 %v2734
      %2744 = vmatpush.bf16.msra.mxu0 %v2733
      %2745 = vmatpush.bf16.msra.mxu0 %v2732
      %2746 = vmatpush.bf16.msra.mxu0 %v2731
      %2747 = vmatpush.bf16.msra.mxu0 %v2730
      %2748 = vmatpush.bf16.msra.mxu0 %v2729
      %2749 = vmatpush.bf16.msra.mxu0 %v2728
      %2750 = vmatpush.bf16.msra.mxu0 %v2727
      %2751 = vmatmul.bf16.gmra.mxu0 %v2684
      %v2752 = vpop.f32.mrf.mxu0
      %v2753 = vadd.f32 0.0, %v2752
      %v2754 = vpop.f32.mrf.mxu0
      %v2755 = vadd.f32 0.0, %v2754
      %2756 = vmatmul.bf16.gmra.mxu0 %v2686
      %v2757 = vpop.f32.mrf.mxu0
      %v2758 = vadd.f32 0.0, %v2757
      %v2759 = vpop.f32.mrf.mxu0
      %v2760 = vadd.f32 0.0, %v2759
      %2761 = vmatmul.bf16.gmra.mxu0 %v2688
      %v2762 = vpop.f32.mrf.mxu0
      %v2763 = vadd.f32 0.0, %v2762
      %v2764 = vpop.f32.mrf.mxu0
      %v2765 = vadd.f32 0.0, %v2764
      %2766 = vmatmul.bf16.gmra.mxu0 %v2690
      %v2767 = vpop.f32.mrf.mxu0
      %v2768 = vadd.f32 0.0, %v2767
      %v2769 = vpop.f32.mrf.mxu0
      %v2770 = vadd.f32 0.0, %v2769
      %2771 = vdwg.mxu0
      %v2772 = vadd.f32 %v2652, %v2753
      %v2773 = vadd.f32 %v2653, %v2755
      %v2774 = vadd.f32 %v2654, %v2758
      %v2775 = vadd.f32 %v2655, %v2760
      %v2776 = vadd.f32 %v2656, %v2763
      %v2777 = vadd.f32 %v2657, %v2765
      %v2778 = vadd.f32 %v2658, %v2768
      %v2779 = vadd.f32 %v2659, %v2770
      %v2780 = vpack.c.bf16 %v2772, %v2772
      %v2781 = vpack.c.bf16 %v2773, %v2773
      %v2782 = vpack.c.bf16 %v2774, %v2774
      %v2783 = vpack.c.bf16 %v2775, %v2775
      %v2784 = vpack.c.bf16 %v2776, %v2776
      %v2785 = vpack.c.bf16 %v2777, %v2777
      %v2786 = vpack.c.bf16 %v2778, %v2778
      %v2787 = vpack.c.bf16 %v2779, %v2779
      %2788 = vst [vmem:[%s226 + $0xc] sm:$0xf] %v2780
      %2789 = vst [vmem:[%s226 + $0x1c] sm:$0xf] %v2781
      %2790 = vst [vmem:[%s226 + $0x2c] sm:$0xf] %v2782
      %2791 = vst [vmem:[%s226 + $0x3c] sm:$0xf] %v2783
      %2792 = vst [vmem:[%s226 + $0x4c] sm:$0xf] %v2784
      %2793 = vst [vmem:[%s226 + $0x5c] sm:$0xf] %v2785
      %2794 = vst [vmem:[%s226 + $0x6c] sm:$0xf] %v2786
      %2795 = vst [vmem:[%s226 + $0x7c] sm:$0xf] %v2787
      %v2796 = vmul.f32 %v2772, %v826
      %v2797 = vmul.f32 %v2773, %v831
      %v2798 = vmul.f32 %v2774, %v836
      %v2799 = vmul.f32 %v2775, %v841
      %v2800 = vmul.f32 %v2776, %v846
      %v2801 = vmul.f32 %v2777, %v851
      %v2802 = vmul.f32 %v2778, %v856
      %v2803 = vmul.f32 %v2779, %v861
      %v2804 = vadd.f32 %v2796, %v2797
      %v2805 = vadd.f32 %v2804, %v2798
      %v2806 = vadd.f32 %v2805, %v2799
      %v2807 = vadd.f32 %v2806, %v2800
      %v2808 = vadd.f32 %v2807, %v2801
      %v2809 = vadd.f32 %v2808, %v2802
      %v2810 = vadd.f32 %v2809, %v2803
      %v2811 = vrot.slane %v2810, 4
      %v2812 = vadd.f32 %v2810, %v2811
      %v2813 = vrot.slane %v2812, 2
      %v2814 = vadd.f32 %v2812, %v2813
      %v2815 = vrot.slane %v2814, 1
      %v2816 = vadd.f32 %v2814, %v2815
      %v2817 = vadd.f32 %v2170, %v2816
      %v2818 = vmul.f32 %v2772, %v2796
      %v2819 = vmul.f32 %v2773, %v2797
      %v2820 = vmul.f32 %v2774, %v2798
      %v2821 = vmul.f32 %v2775, %v2799
      %v2822 = vmul.f32 %v2776, %v2800
      %v2823 = vmul.f32 %v2777, %v2801
      %v2824 = vmul.f32 %v2778, %v2802
      %v2825 = vmul.f32 %v2779, %v2803
      %v2826 = vadd.f32 %v2818, %v2819
      %v2827 = vadd.f32 %v2826, %v2820
      %v2828 = vadd.f32 %v2827, %v2821
      %v2829 = vadd.f32 %v2828, %v2822
      %v2830 = vadd.f32 %v2829, %v2823
      %v2831 = vadd.f32 %v2830, %v2824
      %v2832 = vadd.f32 %v2831, %v2825
      %v2833 = vrot.slane %v2832, 4
      %v2834 = vadd.f32 %v2832, %v2833
      %v2835 = vrot.slane %v2834, 2
      %v2836 = vadd.f32 %v2834, %v2835
      %v2837 = vrot.slane %v2836, 1
      %v2838 = vadd.f32 %v2836, %v2837
      %v2839 = vadd.f32 %v2192, %v2838
      %vm2840 = vcmask 1040384
      %v2841 = vsel %vm2840, %v2817, %v2839
      %vm2842 = vcmask 1041408
      %v2843 = vsel %vm2842, %v2841, 0.0
      %2844 = vst [vmem:[%s231] sm:$0xff] %v2843
      %s2845 = smul.u32 8, %s16
      %p2846 = scmp.lt.s32.totalorder %s2845, 31
      %s2847 = scalar_select %p2846, %s2845, 31
      %s2848 = smul.addr %s2847, 4
      %s2849 = smul.addr %s2848, 4
      %s2850 = scalar_lea.vmem %s3, %s2849
      %p2851 = scmp.lt.s32.totalorder %s16, 3
      %s2852 = scalar_select %p2851, %s16, 3
      %s2853 = smul.addr %s2852, 8
      %s2854 = scalar_lea.vmem %s4, %s2853
      // Predicated region
      $region33: #{unet_innermost_forward.3} parent=31 // pred_check
        %p2855 = pneg %p107
      $region34: #{unet_innermost_forward.3} parent=31 // pred_check_branch
        %2857 = sbr.rel (%p2855) target = $region36
      $region35: #{unet_innermost_forward.3} parent=31 // pred_region
        %s2858 = smul.u32 8, %s16
      $region36: #{unet_innermost_forward.3} parent=31 // pred_fallthru
        _
      // Predicated region
      $region37: #{unet_innermost_forward.3} parent=31 // pred_check
        %p2859 = pneg %p133
      $region38: #{unet_innermost_forward.3} parent=31 // pred_check_branch
        %2861 = sbr.rel (%p2859) target = $region40
      $region39: #{unet_innermost_forward.3} parent=31 // pred_region
        _
      $region40: #{unet_innermost_forward.3} parent=31 // pred_fallthru
        _
    $region32: #{unet_innermost_forward.3} parent=5 // pred_fallthru
      _
    %p2862 = scmp.le.s32.totalorder 2, %s11
    // Predicated region
    $region41: #{unet_innermost_forward.3} parent=5 // pred_check
      %p2863 = pneg %p2862
    $region42: #{unet_innermost_forward.3} parent=5 // pred_check_branch
      %2865 = sbr.rel (%p2863) target = $region44
    $region43: #{unet_innermost_forward.3} parent=5 // pred_region
      %s2866 = ssub.s32 %s11, 2
      // Predicated region
      $region45: #{unet_innermost_forward.3} parent=43 // pred_check
        %p2867 = pneg %p113
      $region46: #{unet_innermost_forward.3} parent=43 // pred_check_branch
        %2869 = sbr.rel (%p2867) target = $region48
      $region47: #{unet_innermost_forward.3} parent=43 // pred_region
        %s2870 = smul.u32 8, %s17
        %p2871 = scmp.lt.s32.totalorder %s2870, 31
        %s2872 = scalar_select %p2871, %s2870, 31
        %s2873 = smul.addr %s2872, 4
        %s2874 = smul.addr %s2873, 4
        %s2875 = scalar_lea.vmem %s3, %s2874
      $region48: #{unet_innermost_forward.3} parent=43 // pred_fallthru
        _
      // Predicated region
      $region49: #{unet_innermost_forward.3} parent=43 // pred_check
        %p2876 = pneg %p139
      $region50: #{unet_innermost_forward.3} parent=43 // pred_check_branch
        %2878 = sbr.rel (%p2876) target = $region52
      $region51: #{unet_innermost_forward.3} parent=43 // pred_region
        %p2879 = scmp.lt.s32.totalorder %s17, 3
        %s2880 = scalar_select %p2879, %s17, 3
        %s2881 = smul.addr %s2880, 8
        %s2882 = scalar_lea.vmem %s4, %s2881
      $region52: #{unet_innermost_forward.3} parent=43 // pred_fallthru
        _
    $region44: #{unet_innermost_forward.3} parent=5 // pred_fallthru
      _
  $region6: #{unet_innermost_forward.3} parent=0 // loop_footer
    %s15 = sadd.s32 1, %s11
  $region7: #{unet_innermost_forward.3} parent=0 // loop_footer_branch
    %10 = sbr.rel target = $region3
  $region8: #{unet_innermost_forward.3} parent=0 // loop_exit
    _

</llo_original>
